<compile_context>
chip_gen: v7x
topology: tpu7x:2x2x1
jax: 0.10.0
libtpu: 0.0.40
codegen_flags: <defaults>
</compile_context>

<pallas_src>
import math

import numpy as np
import jax
import jax.numpy as jnp
from jax.experimental import pallas as pl
from jax.experimental.pallas import tpu as pltpu

# ----------------------------- config ---------------------------------------
PATCH = 14                      # patch size of vit_*_patch14_dinov2
IMG = 28                        # synthetic small image (2x2 grid of patches)
IN_CHANS = 3
EMBED_DIM = 128                 # lane-dense scaled-down stand-in for 1024
DEPTH = 2                       # scaled-down stand-in for 24 blocks
NUM_HEADS = 4
HEAD_DIM = EMBED_DIM // NUM_HEADS          # 32
MLP_HIDDEN = 4 * EMBED_DIM                 # 512
NUM_CLASSES = 26                # len(txt_animalclasses['fr'])
CLS_PAD = 128                   # lane-dense padded head width (slice to 26)
LS_INIT = 1e-5                  # LayerScale init_values used by DINOv2 ViTs
LN_EPS = 1e-6

N_PATCHES = (IMG // PATCH) ** 2            # 4
T = 1 + N_PATCHES                          # 5 tokens (cls + patches)
T_PAD = 8                                  # sublane-friendly padded token count
PATCH_DIM = IN_CHANS * PATCH * PATCH       # 588
PATCH_DIM_PAD = 640                        # padded to a multiple of 128

TILE_B = 2                                 # samples per grid step (raise to
TILE_ROWS = TILE_B * T_PAD                 # fill the MXU on real workloads)

VEC_PER_BLOCK = 11   # ln1_g, ln1_b, q_b, k_b, v_b, proj_b, ls1, ln2_g, ln2_b, fc2_b, ls2
VEC_ROWS = DEPTH * VEC_PER_BLOCK + 3       # + norm_g, norm_b, head_b
W_IN_COLS = 3 * EMBED_DIM + EMBED_DIM + MLP_HIDDEN   # [qkv | proj | fc1] = 1024


# --------------------------- fused Pallas kernel -----------------------------
def _vit_fused_kernel(xp_ref, addemb_ref, bias_ref, vec_ref, fc1b_ref,
                      patch_w_ref, w_in_ref, fc2_w_ref, head_w_ref,
                      out_ref, o_buf):
    f32 = jnp.float32
    bf16 = jnp.bfloat16

    def vrow(i):                           # (1, EMBED_DIM) parameter row (f32)
        return vec_ref[i:i + 1, :]

    def ln(z, g, b):
        mu = jnp.mean(z, axis=-1, keepdims=True)
        zc = z - mu
        var = jnp.mean(zc * zc, axis=-1, keepdims=True)
        return zc * jax.lax.rsqrt(var + LN_EPS) * g + b

    def gelu(z):                           # exact GELU (torch.nn.GELU default)
        return 0.5 * z * (1.0 + jax.lax.erf(z * (1.0 / math.sqrt(2.0))))

    # ---- patch embed (bf16 MXU, f32 acc) + fused cls/pos/patch-bias add -----
    x = jnp.dot(xp_ref[...], patch_w_ref[...], preferred_element_type=f32)
    x = x + addemb_ref[...]                # (TILE_ROWS, D) f32

    attn_bias = bias_ref[...]              # (TILE_ROWS, TILE_ROWS): 0 / -1e30
    scale = HEAD_DIM ** -0.5

    for d in range(DEPTH):                 # static unroll over blocks
        base = d * VEC_PER_BLOCK
        w_in = w_in_ref[d]                 # (D, 1024) bf16  [qkv | proj | fc1]
        qkv_w = w_in[:, :3 * EMBED_DIM]
        proj_w = w_in[:, 3 * EMBED_DIM:4 * EMBED_DIM]
        fc1_w = w_in[:, 4 * EMBED_DIM:]
        fc2_w = fc2_w_ref[d]               # (MLP_HIDDEN, D) bf16

        # ---- attention branch ----
        h = ln(x, vrow(base + 0), vrow(base + 1))
        qkv = jnp.dot(h.astype(bf16), qkv_w, preferred_element_type=f32)
        q = (qkv[:, :EMBED_DIM] + vrow(base + 2)) * scale
        k = qkv[:, EMBED_DIM:2 * EMBED_DIM] + vrow(base + 3)
        v = qkv[:, 2 * EMBED_DIM:] + vrow(base + 4)
        qb = q.astype(bf16)
        kTb = k.T.astype(bf16)             # one (rows,D) transpose per block
        vb = v.astype(bf16)

        for hd in range(NUM_HEADS):        # static unroll over heads
            c0 = hd * HEAD_DIM
            s = jnp.dot(qb[:, c0:c0 + HEAD_DIM], kTb[c0:c0 + HEAD_DIM, :],
                        preferred_element_type=f32) + attn_bias
            m = jnp.max(s, axis=-1, keepdims=True)
            p = jnp.exp(s - m)
            inv = pl.reciprocal(jnp.sum(p, axis=-1, keepdims=True), approx=True)
            o_h = jnp.dot((p * inv).astype(bf16), vb[:, c0:c0 + HEAD_DIM],
                          preferred_element_type=f32)        # (rows, dh)
            o_buf[:, c0:c0 + HEAD_DIM] = o_h                  # assemble heads

        a = jnp.dot(o_buf[...].astype(bf16), proj_w,          # single K=128
                    preferred_element_type=f32) + vrow(base + 5)
        x = x + a * vrow(base + 6)         # LayerScale + residual

        # ---- MLP branch ----
        h = ln(x, vrow(base + 7), vrow(base + 8))
        h = jnp.dot(h.astype(bf16), fc1_w, preferred_element_type=f32)
        h = gelu(h + fc1b_ref[d])
        h = jnp.dot(h.astype(bf16), fc2_w, preferred_element_type=f32)
        h = h + vrow(base + 9)
        x = x + h * vrow(base + 10)        # LayerScale + residual

    # ---- final norm + classifier head (lane-padded to 128 classes) ----------
    fb = DEPTH * VEC_PER_BLOCK
    xn = ln(x, vrow(fb + 0), vrow(fb + 1))
    logits = jnp.dot(xn.astype(bf16), head_w_ref[...],
                     preferred_element_type=f32) + vrow(fb + 2)
    out_ref[...] = logits.astype(out_ref.dtype)


# --------------------------- parameter init ----------------------------------
def init_params(key):
    def nrm(k, shape, std=0.02):
        return jax.random.normal(k, shape, jnp.float32) * std

    ks = jax.random.split(key, 8)
    return {
        "patch_w": nrm(ks[0], (PATCH_DIM, EMBED_DIM)),
        "patch_b": jnp.zeros((EMBED_DIM,), jnp.float32),
        "cls_token": nrm(ks[1], (1, 1, EMBED_DIM)),
        "pos_embed": nrm(ks[2], (1, T, EMBED_DIM)),
        "ln1_g": jnp.ones((DEPTH, 1, EMBED_DIM), jnp.float32),
        "ln1_b": jnp.zeros((DEPTH, 1, EMBED_DIM), jnp.float32),
        "qkv_w": nrm(ks[3], (DEPTH, EMBED_DIM, 3 * EMBED_DIM)),
        "qkv_b": jnp.zeros((DEPTH, 1, 3 * EMBED_DIM), jnp.float32),
        "proj_w": nrm(ks[4], (DEPTH, EMBED_DIM, EMBED_DIM)),
        "proj_b": jnp.zeros((DEPTH, 1, EMBED_DIM), jnp.float32),
        "ls1": jnp.full((DEPTH, 1, EMBED_DIM), LS_INIT, jnp.float32),
        "ln2_g": jnp.ones((DEPTH, 1, EMBED_DIM), jnp.float32),
        "ln2_b": jnp.zeros((DEPTH, 1, EMBED_DIM), jnp.float32),
        "fc1_w": nrm(ks[5], (DEPTH, EMBED_DIM, MLP_HIDDEN)),
        "fc1_b": jnp.zeros((DEPTH, 1, MLP_HIDDEN), jnp.float32),
        "fc2_w": nrm(ks[6], (DEPTH, MLP_HIDDEN, EMBED_DIM)),
        "fc2_b": jnp.zeros((DEPTH, 1, EMBED_DIM), jnp.float32),
        "ls2": jnp.full((DEPTH, 1, EMBED_DIM), LS_INIT, jnp.float32),
        "norm_g": jnp.ones((1, EMBED_DIM), jnp.float32),
        "norm_b": jnp.zeros((1, EMBED_DIM), jnp.float32),
        "head_w": nrm(ks[7], (EMBED_DIM, NUM_CLASSES)),
        "head_b": jnp.zeros((NUM_CLASSES,), jnp.float32),
    }


# --------------------- one-time kernel-constant packing ----------------------
def pack_params(params):
    """Builds all per-call-invariant kernel inputs ONCE (hoisted host prep)."""
    f32, bf16 = jnp.float32, jnp.bfloat16

    # Additive slab: cls_token+pos on the cls row, pos+patch_b on patch rows,
    # zeros on padded token rows.  Identical for every sample -> one tile.
    pos = params["pos_embed"][0]                                    # (T, D)
    add = np.zeros((TILE_B, T_PAD, EMBED_DIM), np.float32)
    add[:, 0, :] = np.asarray(params["cls_token"][0, 0] + pos[0])
    add[:, 1:T, :] = np.asarray(pos[1:T] + params["patch_b"][None, :])
    add_embed = jnp.asarray(add.reshape(TILE_ROWS, EMBED_DIM))

    # Additive attention bias: keys must belong to the same sample within the
    # tile and be a real (non-padded) token.  Constant size (no O(B^2)).
    r = np.arange(TILE_ROWS)
    valid = ((r[:, None] // T_PAD) == (r[None, :] // T_PAD)) & \
            ((r[None, :] % T_PAD) < T)
    attn_bias = jnp.asarray(np.where(valid, 0.0, -1e30).astype(np.float32))

    # All small per-block vectors packed into one f32 slab (single DMA).
    rows = []
    for d in range(DEPTH):
        qkv_b = params["qkv_b"][d, 0]
        rows += [params["ln1_g"][d, 0], params["ln1_b"][d, 0],
                 qkv_b[:EMBED_DIM], qkv_b[EMBED_DIM:2 * EMBED_DIM],
                 qkv_b[2 * EMBED_DIM:],
                 params["proj_b"][d, 0], params["ls1"][d, 0],
                 params["ln2_g"][d, 0], params["ln2_b"][d, 0],
                 params["fc2_b"][d, 0], params["ls2"][d, 0]]
    head_b_pad = jnp.zeros((CLS_PAD,), f32).at[:NUM_CLASSES].set(params["head_b"])
    rows += [params["norm_g"][0], params["norm_b"][0], head_b_pad]
    vec_slab = jnp.stack(rows, axis=0)                              # (25, D)

    # bf16 matmul weights: qkv|proj|fc1 packed per block, plus fc2 and the
    # lane-padded patch / head weights.
    patch_w = jnp.zeros((PATCH_DIM_PAD, EMBED_DIM), f32)
    patch_w = patch_w.at[:PATCH_DIM].set(params["patch_w"]).astype(bf16)
    w_in = jnp.concatenate([params["qkv_w"], params["proj_w"],
                            params["fc1_w"]], axis=-1).astype(bf16)
    fc2_w = params["fc2_w"].astype(bf16)
    head_w = jnp.zeros((EMBED_DIM, CLS_PAD), f32)
    head_w = head_w.at[:, :NUM_CLASSES].set(params["head_w"]).astype(bf16)

    return dict(add_embed=add_embed, attn_bias=attn_bias, vec_slab=vec_slab,
                fc1_b=params["fc1_b"], patch_w=patch_w, w_in=w_in,
                fc2_w=fc2_w, head_w=head_w)


# ------------------------------ forward --------------------------------------
def _vit_forward(consts, x_nchw):
    B, C, H, W = x_nchw.shape
    gh, gw = H // PATCH, W // PATCH
    assert gh * gw == N_PATCHES and C == IN_CHANS
    n_tiles = pl.cdiv(B, TILE_B)
    B_pad = n_tiles * TILE_B

    # Patchify (conv k=14,s=14 == per-patch matmul input); one jnp.pad places
    # the cls slot (leading token), padded tokens, padded pixels, padded batch.
    xp = (x_nchw.reshape(B, C, gh, PATCH, gw, PATCH)
                 .transpose(0, 2, 4, 1, 3, 5)
                 .reshape(B, N_PATCHES, PATCH_DIM).astype(jnp.float32))
    xp = jnp.pad(xp, ((0, B_pad - B), (1, T_PAD - T),
                      (0, PATCH_DIM_PAD - PATCH_DIM)))
    xp_flat = xp.reshape(B_pad * T_PAD, PATCH_DIM_PAD).astype(jnp.bfloat16)

    out = pl.pallas_call(
        _vit_fused_kernel,
        out_shape=jax.ShapeDtypeStruct((B_pad * T_PAD, CLS_PAD), jnp.float32),
        grid=(n_tiles,),
        in_specs=[
            pl.BlockSpec((TILE_ROWS, PATCH_DIM_PAD), lambda b: (b, 0)),   # xp
            pl.BlockSpec((TILE_ROWS, EMBED_DIM), lambda b: (0, 0)),       # add
            pl.BlockSpec((TILE_ROWS, TILE_ROWS), lambda b: (0, 0)),       # bias
            pl.BlockSpec((VEC_ROWS, EMBED_DIM), lambda b: (0, 0)),        # vecs
            pl.BlockSpec((DEPTH, 1, MLP_HIDDEN), lambda b: (0, 0, 0)),    # fc1_b
            pl.BlockSpec((PATCH_DIM_PAD, EMBED_DIM), lambda b: (0, 0)),   # patch_w
            pl.BlockSpec((DEPTH, EMBED_DIM, W_IN_COLS), lambda b: (0, 0, 0)),
            pl.BlockSpec((DEPTH, MLP_HIDDEN, EMBED_DIM), lambda b: (0, 0, 0)),
            pl.BlockSpec((EMBED_DIM, CLS_PAD), lambda b: (0, 0)),         # head_w
        ],
        out_specs=pl.BlockSpec((TILE_ROWS, CLS_PAD), lambda b: (b, 0)),
        scratch_shapes=[pltpu.VMEM((TILE_ROWS, EMBED_DIM), jnp.float32)],
        compiler_params=pltpu.CompilerParams(
            dimension_semantics=("parallel",)),
    )(xp_flat, consts["add_embed"], consts["attn_bias"], consts["vec_slab"],
      consts["fc1_b"], consts["patch_w"], consts["w_in"], consts["fc2_w"],
      consts["head_w"])

    # CLS-token rows (t == 0), real batch rows, real classes only.
    return out.reshape(B_pad, T_PAD, CLS_PAD)[:B, 0, :NUM_CLASSES]


vit_forward = jax.jit(_vit_forward)


# ------------------------ pure-JAX reference (checking) ----------------------
def _ln_ref(x, g, b):
    mu = jnp.mean(x, axis=-1, keepdims=True)
    xc = x - mu
    var = jnp.mean(xc * xc, axis=-1, keepdims=True)
    return xc * jax.lax.rsqrt(var + LN_EPS) * g + b


def vit_reference(params, x_nchw):
    hp = jax.lax.Precision.HIGHEST
    B, C, H, W = x_nchw.shape
    gh, gw = H // PATCH, W // PATCH
    xp = (x_nchw.reshape(B, C, gh, PATCH, gw, PATCH)
                 .transpose(0, 2, 4, 1, 3, 5)
                 .reshape(B, N_PATCHES, PATCH_DIM))
    tok = jnp.einsum("bpk,kd->bpd", xp, params["patch_w"], precision=hp)
    tok = tok + params["patch_b"]
    cls = jnp.broadcast_to(params["cls_token"], (B, 1, EMBED_DIM))
    x = jnp.concatenate([cls, tok], axis=1) + params["pos_embed"]
    scale = HEAD_DIM ** -0.5
    for d in range(DEPTH):
        h = _ln_ref(x, params["ln1_g"][d, 0], params["ln1_b"][d, 0])
        qkv = jnp.einsum("btk,kn->btn", h, params["qkv_w"][d], precision=hp)
        qkv = qkv + params["qkv_b"][d, 0]
        q, k, v = jnp.split(qkv, 3, axis=-1)
        q = q.reshape(B, T, NUM_HEADS, HEAD_DIM).transpose(0, 2, 1, 3) * scale
        k = k.reshape(B, T, NUM_HEADS, HEAD_DIM).transpose(0, 2, 1, 3)
        v = v.reshape(B, T, NUM_HEADS, HEAD_DIM).transpose(0, 2, 1, 3)
        s = jnp.einsum("bhqd,bhkd->bhqk", q, k, precision=hp)
        p = jax.nn.softmax(s, axis=-1)
        o = jnp.einsum("bhqk,bhkd->bhqd", p, v, precision=hp)
        o = o.transpose(0, 2, 1, 3).reshape(B, T, EMBED_DIM)
        o = jnp.einsum("btk,kd->btd", o, params["proj_w"][d], precision=hp)
        o = o + params["proj_b"][d, 0]
        x = x + o * params["ls1"][d, 0]
        h = _ln_ref(x, params["ln2_g"][d, 0], params["ln2_b"][d, 0])
        h = jnp.einsum("btk,kn->btn", h, params["fc1_w"][d], precision=hp)
        h = h + params["fc1_b"][d, 0]
        h = 0.5 * h * (1.0 + jax.lax.erf(h * (1.0 / math.sqrt(2.0))))
        h = jnp.einsum("btn,nd->btd", h, params["fc2_w"][d], precision=hp)
        h = h + params["fc2_b"][d, 0]
        x = x + h * params["ls2"][d, 0]
    xn = _ln_ref(x, params["norm_g"][0], params["norm_b"][0])
    return (jnp.einsum("bd,dc->bc", xn[:, 0], params["head_w"], precision=hp)
            + params["head_b"])


# -------------------------------- main ---------------------------------------
if __name__ == "__main__":
    key = jax.random.PRNGKey(0)
    k_param, k_data = jax.random.split(key)
    params = init_params(k_param)
    consts = pack_params(params)        # hoisted, built once

    B = 2
    x = jax.random.normal(k_data, (B, IN_CHANS, IMG, IMG), jnp.float32)  # NCHW

    logits = vit_forward(consts, x)
    jax.block_until_ready(logits)

    assert logits.shape == (B, NUM_CLASSES)
    assert logits.dtype == jnp.float32
    assert bool(jnp.all(jnp.isfinite(logits)))

    ref = vit_reference(params, x)
    max_err = float(jnp.max(jnp.abs(logits - ref)))
    assert bool(jnp.allclose(logits, ref, atol=2e-2, rtol=2e-2)), max_err

    print("KERNEL_OK")
</pallas_src>

<mosaic_0001>
module attributes {stable_mosaic.version = 11 : i64} {
  func.func @_vit_fused_kernel(%arg0: i32, %arg1: memref<16x640xbf16, #tpu.memory_space<vmem>>, %arg2: memref<16x128xf32, #tpu.memory_space<vmem>>, %arg3: memref<16x16xf32, #tpu.memory_space<vmem>>, %arg4: memref<25x128xf32, #tpu.memory_space<vmem>>, %arg5: memref<2x1x512xf32, #tpu.memory_space<vmem>>, %arg6: memref<640x128xbf16, #tpu.memory_space<vmem>>, %arg7: memref<2x128x1024xbf16, #tpu.memory_space<vmem>>, %arg8: memref<2x512x128xbf16, #tpu.memory_space<vmem>>, %arg9: memref<128x128xbf16, #tpu.memory_space<vmem>>, %arg10: memref<16x128xf32, #tpu.memory_space<vmem>>, %arg11: memref<16x128xf32, #tpu.memory_space<vmem>>) attributes {dimension_semantics = [#tpu.dimension_semantics<parallel>], iteration_bounds = array<i64: 1>, scalar_prefetch = 0 : i64, scratch_operands = 1 : i64, tpu.core_type = #tpu.core_type<tc>, window_params = [{transform_indices = @transform_0, window_bounds = array<i64: 16, 640>}, {pipeline_mode = #tpu.pipeline_mode<synchronous>, transform_indices = @transform_1, window_bounds = array<i64: 16, 128>}, {pipeline_mode = #tpu.pipeline_mode<synchronous>, transform_indices = @transform_2, window_bounds = array<i64: 16, 16>}, {pipeline_mode = #tpu.pipeline_mode<synchronous>, transform_indices = @transform_3, window_bounds = array<i64: 25, 128>}, {pipeline_mode = #tpu.pipeline_mode<synchronous>, transform_indices = @transform_4, window_bounds = array<i64: 2, 1, 512>}, {pipeline_mode = #tpu.pipeline_mode<synchronous>, transform_indices = @transform_5, window_bounds = array<i64: 640, 128>}, {pipeline_mode = #tpu.pipeline_mode<synchronous>, transform_indices = @transform_6, window_bounds = array<i64: 2, 128, 1024>}, {pipeline_mode = #tpu.pipeline_mode<synchronous>, transform_indices = @transform_7, window_bounds = array<i64: 2, 512, 128>}, {pipeline_mode = #tpu.pipeline_mode<synchronous>, transform_indices = @transform_8, window_bounds = array<i64: 128, 128>}, {transform_indices = @transform_9, window_bounds = array<i64: 16, 128>}]} {
    %c0 = arith.constant 0 : index
    %c0_0 = arith.constant 0 : index
    %0 = vector.load %arg1[%c0, %c0_0] : memref<16x640xbf16, #tpu.memory_space<vmem>>, vector<16x640xbf16>
    %c0_1 = arith.constant 0 : index
    %c0_2 = arith.constant 0 : index
    %1 = vector.load %arg6[%c0_1, %c0_2] : memref<640x128xbf16, #tpu.memory_space<vmem>>, vector<640x128xbf16>
    %cst = arith.constant dense<0.000000e+00> : vector<16x128xf32>
    %2 = tpu.matmul %0, %1, %cst {dimension_numbers = #tpu.dot_dimension_numbers<[1], [0], [0], [1], [0, 0, 1, 1], [], []>} : vector<16x640xbf16>, vector<640x128xbf16>, vector<16x128xf32> -> vector<16x128xf32>
    %c0_3 = arith.constant 0 : index
    %c0_4 = arith.constant 0 : index
    %3 = vector.load %arg2[%c0_3, %c0_4] : memref<16x128xf32, #tpu.memory_space<vmem>>, vector<16x128xf32>
    %4 = arith.addf %2, %3 : vector<16x128xf32>
    %c0_5 = arith.constant 0 : index
    %c0_6 = arith.constant 0 : index
    %5 = vector.load %arg3[%c0_5, %c0_6] : memref<16x16xf32, #tpu.memory_space<vmem>>, vector<16x16xf32>
    %c0_7 = arith.constant 0 : index
    %c0_8 = arith.constant 0 : index
    %c0_9 = arith.constant 0 : index
    %6 = vector.load %arg7[%c0_7, %c0_8, %c0_9] : memref<2x128x1024xbf16, #tpu.memory_space<vmem>>, vector<1x128x1024xbf16>
    %7 = vector.shape_cast %6 : vector<1x128x1024xbf16> to vector<128x1024xbf16>
    %8 = vector.extract_strided_slice %7 {offsets = [0, 0], sizes = [128, 384], strides = [1, 1]} : vector<128x1024xbf16> to vector<128x384xbf16>
    %9 = vector.extract_strided_slice %7 {offsets = [0, 384], sizes = [128, 128], strides = [1, 1]} : vector<128x1024xbf16> to vector<128x128xbf16>
    %10 = vector.extract_strided_slice %7 {offsets = [0, 512], sizes = [128, 512], strides = [1, 1]} : vector<128x1024xbf16> to vector<128x512xbf16>
    %c0_10 = arith.constant 0 : index
    %c0_11 = arith.constant 0 : index
    %c0_12 = arith.constant 0 : index
    %11 = vector.load %arg8[%c0_10, %c0_11, %c0_12] : memref<2x512x128xbf16, #tpu.memory_space<vmem>>, vector<1x512x128xbf16>
    %12 = vector.shape_cast %11 : vector<1x512x128xbf16> to vector<512x128xbf16>
    %c0_13 = arith.constant 0 : index
    %c0_14 = arith.constant 0 : index
    %13 = vector.load %arg4[%c0_13, %c0_14] : memref<25x128xf32, #tpu.memory_space<vmem>>, vector<1x128xf32>
    %c1 = arith.constant 1 : index
    %c0_15 = arith.constant 0 : index
    %14 = vector.load %arg4[%c1, %c0_15] : memref<25x128xf32, #tpu.memory_space<vmem>>, vector<1x128xf32>
    %cst_16 = arith.constant dense<0.000000e+00> : vector<16xf32>
    %15 = vector.multi_reduction <add>, %4, %cst_16 [1] : vector<16x128xf32> to vector<16xf32>
    %16 = vector.shape_cast %15 : vector<16xf32> to vector<16x1xf32>
    %cst_17 = arith.constant 1.280000e+02 : f32
    %17 = vector.broadcast %cst_17 : f32 to vector<16x1xf32>
    %18 = arith.divf %16, %17 : vector<16x1xf32>
    %19 = vector.broadcast %18 : vector<16x1xf32> to vector<16x128xf32>
    %20 = arith.subf %4, %19 : vector<16x128xf32>
    %21 = arith.mulf %20, %20 : vector<16x128xf32>
    %cst_18 = arith.constant dense<0.000000e+00> : vector<16xf32>
    %22 = vector.multi_reduction <add>, %21, %cst_18 [1] : vector<16x128xf32> to vector<16xf32>
    %23 = vector.shape_cast %22 : vector<16xf32> to vector<16x1xf32>
    %cst_19 = arith.constant 1.280000e+02 : f32
    %24 = vector.broadcast %cst_19 : f32 to vector<16x1xf32>
    %25 = arith.divf %23, %24 : vector<16x1xf32>
    %cst_20 = arith.constant 9.99999997E-7 : f32
    %26 = vector.broadcast %cst_20 : f32 to vector<16x1xf32>
    %27 = arith.addf %25, %26 : vector<16x1xf32>
    %28 = math.rsqrt %27 : vector<16x1xf32>
    %29 = vector.broadcast %28 : vector<16x1xf32> to vector<16x128xf32>
    %30 = arith.mulf %20, %29 : vector<16x128xf32>
    %31 = vector.broadcast %13 : vector<1x128xf32> to vector<16x128xf32>
    %32 = arith.mulf %30, %31 : vector<16x128xf32>
    %33 = vector.broadcast %14 : vector<1x128xf32> to vector<16x128xf32>
    %34 = arith.addf %32, %33 : vector<16x128xf32>
    %35 = arith.truncf %34 : vector<16x128xf32> to vector<16x128xbf16>
    %cst_21 = arith.constant dense<0.000000e+00> : vector<16x384xf32>
    %36 = tpu.matmul %35, %8, %cst_21 {dimension_numbers = #tpu.dot_dimension_numbers<[1], [0], [0], [1], [0, 0, 1, 1], [], []>} : vector<16x128xbf16>, vector<128x384xbf16>, vector<16x384xf32> -> vector<16x384xf32>
    %37 = vector.extract_strided_slice %36 {offsets = [0, 0], sizes = [16, 128], strides = [1, 1]} : vector<16x384xf32> to vector<16x128xf32>
    %c2 = arith.constant 2 : index
    %c0_22 = arith.constant 0 : index
    %38 = vector.load %arg4[%c2, %c0_22] : memref<25x128xf32, #tpu.memory_space<vmem>>, vector<1x128xf32>
    %39 = vector.broadcast %38 : vector<1x128xf32> to vector<16x128xf32>
    %40 = arith.addf %37, %39 : vector<16x128xf32>
    %cst_23 = arith.constant 0.176776692 : f32
    %41 = vector.broadcast %cst_23 : f32 to vector<16x128xf32>
    %42 = arith.mulf %40, %41 : vector<16x128xf32>
    %43 = vector.extract_strided_slice %36 {offsets = [0, 128], sizes = [16, 128], strides = [1, 1]} : vector<16x384xf32> to vector<16x128xf32>
    %c3 = arith.constant 3 : index
    %c0_24 = arith.constant 0 : index
    %44 = vector.load %arg4[%c3, %c0_24] : memref<25x128xf32, #tpu.memory_space<vmem>>, vector<1x128xf32>
    %45 = vector.broadcast %44 : vector<1x128xf32> to vector<16x128xf32>
    %46 = arith.addf %43, %45 : vector<16x128xf32>
    %47 = vector.extract_strided_slice %36 {offsets = [0, 256], sizes = [16, 128], strides = [1, 1]} : vector<16x384xf32> to vector<16x128xf32>
    %c4 = arith.constant 4 : index
    %c0_25 = arith.constant 0 : index
    %48 = vector.load %arg4[%c4, %c0_25] : memref<25x128xf32, #tpu.memory_space<vmem>>, vector<1x128xf32>
    %49 = vector.broadcast %48 : vector<1x128xf32> to vector<16x128xf32>
    %50 = arith.addf %47, %49 : vector<16x128xf32>
    %51 = arith.truncf %42 : vector<16x128xf32> to vector<16x128xbf16>
    %52 = tpu.transpose %46, [1, 0] : vector<16x128xf32> -> vector<128x16xf32>
    %53 = arith.truncf %52 : vector<128x16xf32> to vector<128x16xbf16>
    %54 = arith.truncf %50 : vector<16x128xf32> to vector<16x128xbf16>
    %55 = vector.extract_strided_slice %51 {offsets = [0, 0], sizes = [16, 32], strides = [1, 1]} : vector<16x128xbf16> to vector<16x32xbf16>
    %56 = vector.extract_strided_slice %53 {offsets = [0, 0], sizes = [32, 16], strides = [1, 1]} : vector<128x16xbf16> to vector<32x16xbf16>
    %cst_26 = arith.constant dense<0.000000e+00> : vector<16x16xf32>
    %57 = tpu.matmul %55, %56, %cst_26 {dimension_numbers = #tpu.dot_dimension_numbers<[1], [0], [0], [1], [0, 0, 1, 1], [], []>} : vector<16x32xbf16>, vector<32x16xbf16>, vector<16x16xf32> -> vector<16x16xf32>
    %58 = arith.addf %57, %5 : vector<16x16xf32>
    %cst_27 = arith.constant dense<0xFF800000> : vector<16xf32>
    %59 = vector.multi_reduction <maximumf>, %58, %cst_27 [1] : vector<16x16xf32> to vector<16xf32>
    %60 = vector.shape_cast %59 : vector<16xf32> to vector<16x1xf32>
    %61 = vector.broadcast %60 : vector<16x1xf32> to vector<16x16xf32>
    %62 = arith.subf %58, %61 : vector<16x16xf32>
    %63 = math.exp %62 : vector<16x16xf32>
    %cst_28 = arith.constant dense<0.000000e+00> : vector<16xf32>
    %64 = vector.multi_reduction <add>, %63, %cst_28 [1] : vector<16x16xf32> to vector<16xf32>
    %65 = vector.shape_cast %64 : vector<16xf32> to vector<16x1xf32>
    %66 = tpu.reciprocal %65 {approx = true} : vector<16x1xf32> -> vector<16x1xf32>
    %67 = vector.broadcast %66 : vector<16x1xf32> to vector<16x16xf32>
    %68 = arith.mulf %63, %67 : vector<16x16xf32>
    %69 = arith.truncf %68 : vector<16x16xf32> to vector<16x16xbf16>
    %70 = vector.extract_strided_slice %54 {offsets = [0, 0], sizes = [16, 32], strides = [1, 1]} : vector<16x128xbf16> to vector<16x32xbf16>
    %cst_29 = arith.constant dense<0.000000e+00> : vector<16x32xf32>
    %71 = tpu.matmul %69, %70, %cst_29 {dimension_numbers = #tpu.dot_dimension_numbers<[1], [0], [0], [1], [0, 0, 1, 1], [], []>} : vector<16x16xbf16>, vector<16x32xbf16>, vector<16x32xf32> -> vector<16x32xf32>
    %c0_30 = arith.constant 0 : index
    %c0_31 = arith.constant 0 : index
    %72 = vector.load %arg11[%c0_30, %c0_31] : memref<16x128xf32, #tpu.memory_space<vmem>>, vector<16x32xf32>
    tpu.vector_store %arg11[%c0_30, %c0_31], %71 {strides = array<i32>} : memref<16x128xf32, #tpu.memory_space<vmem>>, vector<16x32xf32>,
    %73 = vector.extract_strided_slice %51 {offsets = [0, 32], sizes = [16, 32], strides = [1, 1]} : vector<16x128xbf16> to vector<16x32xbf16>
    %74 = vector.extract_strided_slice %53 {offsets = [32, 0], sizes = [32, 16], strides = [1, 1]} : vector<128x16xbf16> to vector<32x16xbf16>
    %cst_32 = arith.constant dense<0.000000e+00> : vector<16x16xf32>
    %75 = tpu.matmul %73, %74, %cst_32 {dimension_numbers = #tpu.dot_dimension_numbers<[1], [0], [0], [1], [0, 0, 1, 1], [], []>} : vector<16x32xbf16>, vector<32x16xbf16>, vector<16x16xf32> -> vector<16x16xf32>
    %76 = arith.addf %75, %5 : vector<16x16xf32>
    %cst_33 = arith.constant dense<0xFF800000> : vector<16xf32>
    %77 = vector.multi_reduction <maximumf>, %76, %cst_33 [1] : vector<16x16xf32> to vector<16xf32>
    %78 = vector.shape_cast %77 : vector<16xf32> to vector<16x1xf32>
    %79 = vector.broadcast %78 : vector<16x1xf32> to vector<16x16xf32>
    %80 = arith.subf %76, %79 : vector<16x16xf32>
    %81 = math.exp %80 : vector<16x16xf32>
    %cst_34 = arith.constant dense<0.000000e+00> : vector<16xf32>
    %82 = vector.multi_reduction <add>, %81, %cst_34 [1] : vector<16x16xf32> to vector<16xf32>
    %83 = vector.shape_cast %82 : vector<16xf32> to vector<16x1xf32>
    %84 = tpu.reciprocal %83 {approx = true} : vector<16x1xf32> -> vector<16x1xf32>
    %85 = vector.broadcast %84 : vector<16x1xf32> to vector<16x16xf32>
    %86 = arith.mulf %81, %85 : vector<16x16xf32>
    %87 = arith.truncf %86 : vector<16x16xf32> to vector<16x16xbf16>
    %88 = vector.extract_strided_slice %54 {offsets = [0, 32], sizes = [16, 32], strides = [1, 1]} : vector<16x128xbf16> to vector<16x32xbf16>
    %cst_35 = arith.constant dense<0.000000e+00> : vector<16x32xf32>
    %89 = tpu.matmul %87, %88, %cst_35 {dimension_numbers = #tpu.dot_dimension_numbers<[1], [0], [0], [1], [0, 0, 1, 1], [], []>} : vector<16x16xbf16>, vector<16x32xbf16>, vector<16x32xf32> -> vector<16x32xf32>
    %c0_36 = arith.constant 0 : index
    %c32 = arith.constant 32 : index
    %90 = vector.load %arg11[%c0_36, %c32] : memref<16x128xf32, #tpu.memory_space<vmem>>, vector<16x32xf32>
    tpu.vector_store %arg11[%c0_36, %c32], %89 {strides = array<i32>} : memref<16x128xf32, #tpu.memory_space<vmem>>, vector<16x32xf32>,
    %91 = vector.extract_strided_slice %51 {offsets = [0, 64], sizes = [16, 32], strides = [1, 1]} : vector<16x128xbf16> to vector<16x32xbf16>
    %92 = vector.extract_strided_slice %53 {offsets = [64, 0], sizes = [32, 16], strides = [1, 1]} : vector<128x16xbf16> to vector<32x16xbf16>
    %cst_37 = arith.constant dense<0.000000e+00> : vector<16x16xf32>
    %93 = tpu.matmul %91, %92, %cst_37 {dimension_numbers = #tpu.dot_dimension_numbers<[1], [0], [0], [1], [0, 0, 1, 1], [], []>} : vector<16x32xbf16>, vector<32x16xbf16>, vector<16x16xf32> -> vector<16x16xf32>
    %94 = arith.addf %93, %5 : vector<16x16xf32>
    %cst_38 = arith.constant dense<0xFF800000> : vector<16xf32>
    %95 = vector.multi_reduction <maximumf>, %94, %cst_38 [1] : vector<16x16xf32> to vector<16xf32>
    %96 = vector.shape_cast %95 : vector<16xf32> to vector<16x1xf32>
    %97 = vector.broadcast %96 : vector<16x1xf32> to vector<16x16xf32>
    %98 = arith.subf %94, %97 : vector<16x16xf32>
    %99 = math.exp %98 : vector<16x16xf32>
    %cst_39 = arith.constant dense<0.000000e+00> : vector<16xf32>
    %100 = vector.multi_reduction <add>, %99, %cst_39 [1] : vector<16x16xf32> to vector<16xf32>
    %101 = vector.shape_cast %100 : vector<16xf32> to vector<16x1xf32>
    %102 = tpu.reciprocal %101 {approx = true} : vector<16x1xf32> -> vector<16x1xf32>
    %103 = vector.broadcast %102 : vector<16x1xf32> to vector<16x16xf32>
    %104 = arith.mulf %99, %103 : vector<16x16xf32>
    %105 = arith.truncf %104 : vector<16x16xf32> to vector<16x16xbf16>
    %106 = vector.extract_strided_slice %54 {offsets = [0, 64], sizes = [16, 32], strides = [1, 1]} : vector<16x128xbf16> to vector<16x32xbf16>
    %cst_40 = arith.constant dense<0.000000e+00> : vector<16x32xf32>
    %107 = tpu.matmul %105, %106, %cst_40 {dimension_numbers = #tpu.dot_dimension_numbers<[1], [0], [0], [1], [0, 0, 1, 1], [], []>} : vector<16x16xbf16>, vector<16x32xbf16>, vector<16x32xf32> -> vector<16x32xf32>
    %c0_41 = arith.constant 0 : index
    %c64 = arith.constant 64 : index
    %108 = vector.load %arg11[%c0_41, %c64] : memref<16x128xf32, #tpu.memory_space<vmem>>, vector<16x32xf32>
    tpu.vector_store %arg11[%c0_41, %c64], %107 {strides = array<i32>} : memref<16x128xf32, #tpu.memory_space<vmem>>, vector<16x32xf32>,
    %109 = vector.extract_strided_slice %51 {offsets = [0, 96], sizes = [16, 32], strides = [1, 1]} : vector<16x128xbf16> to vector<16x32xbf16>
    %110 = vector.extract_strided_slice %53 {offsets = [96, 0], sizes = [32, 16], strides = [1, 1]} : vector<128x16xbf16> to vector<32x16xbf16>
    %cst_42 = arith.constant dense<0.000000e+00> : vector<16x16xf32>
    %111 = tpu.matmul %109, %110, %cst_42 {dimension_numbers = #tpu.dot_dimension_numbers<[1], [0], [0], [1], [0, 0, 1, 1], [], []>} : vector<16x32xbf16>, vector<32x16xbf16>, vector<16x16xf32> -> vector<16x16xf32>
    %112 = arith.addf %111, %5 : vector<16x16xf32>
    %cst_43 = arith.constant dense<0xFF800000> : vector<16xf32>
    %113 = vector.multi_reduction <maximumf>, %112, %cst_43 [1] : vector<16x16xf32> to vector<16xf32>
    %114 = vector.shape_cast %113 : vector<16xf32> to vector<16x1xf32>
    %115 = vector.broadcast %114 : vector<16x1xf32> to vector<16x16xf32>
    %116 = arith.subf %112, %115 : vector<16x16xf32>
    %117 = math.exp %116 : vector<16x16xf32>
    %cst_44 = arith.constant dense<0.000000e+00> : vector<16xf32>
    %118 = vector.multi_reduction <add>, %117, %cst_44 [1] : vector<16x16xf32> to vector<16xf32>
    %119 = vector.shape_cast %118 : vector<16xf32> to vector<16x1xf32>
    %120 = tpu.reciprocal %119 {approx = true} : vector<16x1xf32> -> vector<16x1xf32>
    %121 = vector.broadcast %120 : vector<16x1xf32> to vector<16x16xf32>
    %122 = arith.mulf %117, %121 : vector<16x16xf32>
    %123 = arith.truncf %122 : vector<16x16xf32> to vector<16x16xbf16>
    %124 = vector.extract_strided_slice %54 {offsets = [0, 96], sizes = [16, 32], strides = [1, 1]} : vector<16x128xbf16> to vector<16x32xbf16>
    %cst_45 = arith.constant dense<0.000000e+00> : vector<16x32xf32>
    %125 = tpu.matmul %123, %124, %cst_45 {dimension_numbers = #tpu.dot_dimension_numbers<[1], [0], [0], [1], [0, 0, 1, 1], [], []>} : vector<16x16xbf16>, vector<16x32xbf16>, vector<16x32xf32> -> vector<16x32xf32>
    %c0_46 = arith.constant 0 : index
    %c96 = arith.constant 96 : index
    %126 = vector.load %arg11[%c0_46, %c96] : memref<16x128xf32, #tpu.memory_space<vmem>>, vector<16x32xf32>
    tpu.vector_store %arg11[%c0_46, %c96], %125 {strides = array<i32>} : memref<16x128xf32, #tpu.memory_space<vmem>>, vector<16x32xf32>,
    %c0_47 = arith.constant 0 : index
    %c0_48 = arith.constant 0 : index
    %127 = vector.load %arg11[%c0_47, %c0_48] : memref<16x128xf32, #tpu.memory_space<vmem>>, vector<16x128xf32>
    %128 = arith.truncf %127 : vector<16x128xf32> to vector<16x128xbf16>
    %cst_49 = arith.constant dense<0.000000e+00> : vector<16x128xf32>
    %129 = tpu.matmul %128, %9, %cst_49 {dimension_numbers = #tpu.dot_dimension_numbers<[1], [0], [0], [1], [0, 0, 1, 1], [], []>} : vector<16x128xbf16>, vector<128x128xbf16>, vector<16x128xf32> -> vector<16x128xf32>
    %c5 = arith.constant 5 : index
    %c0_50 = arith.constant 0 : index
    %130 = vector.load %arg4[%c5, %c0_50] : memref<25x128xf32, #tpu.memory_space<vmem>>, vector<1x128xf32>
    %131 = vector.broadcast %130 : vector<1x128xf32> to vector<16x128xf32>
    %132 = arith.addf %129, %131 : vector<16x128xf32>
    %c6 = arith.constant 6 : index
    %c0_51 = arith.constant 0 : index
    %133 = vector.load %arg4[%c6, %c0_51] : memref<25x128xf32, #tpu.memory_space<vmem>>, vector<1x128xf32>
    %134 = vector.broadcast %133 : vector<1x128xf32> to vector<16x128xf32>
    %135 = arith.mulf %132, %134 : vector<16x128xf32>
    %136 = arith.addf %4, %135 : vector<16x128xf32>
    %c7 = arith.constant 7 : index
    %c0_52 = arith.constant 0 : index
    %137 = vector.load %arg4[%c7, %c0_52] : memref<25x128xf32, #tpu.memory_space<vmem>>, vector<1x128xf32>
    %c8 = arith.constant 8 : index
    %c0_53 = arith.constant 0 : index
    %138 = vector.load %arg4[%c8, %c0_53] : memref<25x128xf32, #tpu.memory_space<vmem>>, vector<1x128xf32>
    %cst_54 = arith.constant dense<0.000000e+00> : vector<16xf32>
    %139 = vector.multi_reduction <add>, %136, %cst_54 [1] : vector<16x128xf32> to vector<16xf32>
    %140 = vector.shape_cast %139 : vector<16xf32> to vector<16x1xf32>
    %cst_55 = arith.constant 1.280000e+02 : f32
    %141 = vector.broadcast %cst_55 : f32 to vector<16x1xf32>
    %142 = arith.divf %140, %141 : vector<16x1xf32>
    %143 = vector.broadcast %142 : vector<16x1xf32> to vector<16x128xf32>
    %144 = arith.subf %136, %143 : vector<16x128xf32>
    %145 = arith.mulf %144, %144 : vector<16x128xf32>
    %cst_56 = arith.constant dense<0.000000e+00> : vector<16xf32>
    %146 = vector.multi_reduction <add>, %145, %cst_56 [1] : vector<16x128xf32> to vector<16xf32>
    %147 = vector.shape_cast %146 : vector<16xf32> to vector<16x1xf32>
    %cst_57 = arith.constant 1.280000e+02 : f32
    %148 = vector.broadcast %cst_57 : f32 to vector<16x1xf32>
    %149 = arith.divf %147, %148 : vector<16x1xf32>
    %cst_58 = arith.constant 9.99999997E-7 : f32
    %150 = vector.broadcast %cst_58 : f32 to vector<16x1xf32>
    %151 = arith.addf %149, %150 : vector<16x1xf32>
    %152 = math.rsqrt %151 : vector<16x1xf32>
    %153 = vector.broadcast %152 : vector<16x1xf32> to vector<16x128xf32>
    %154 = arith.mulf %144, %153 : vector<16x128xf32>
    %155 = vector.broadcast %137 : vector<1x128xf32> to vector<16x128xf32>
    %156 = arith.mulf %154, %155 : vector<16x128xf32>
    %157 = vector.broadcast %138 : vector<1x128xf32> to vector<16x128xf32>
    %158 = arith.addf %156, %157 : vector<16x128xf32>
    %159 = arith.truncf %158 : vector<16x128xf32> to vector<16x128xbf16>
    %cst_59 = arith.constant dense<0.000000e+00> : vector<16x512xf32>
    %160 = tpu.matmul %159, %10, %cst_59 {dimension_numbers = #tpu.dot_dimension_numbers<[1], [0], [0], [1], [0, 0, 1, 1], [], []>} : vector<16x128xbf16>, vector<128x512xbf16>, vector<16x512xf32> -> vector<16x512xf32>
    %c0_60 = arith.constant 0 : index
    %c0_61 = arith.constant 0 : index
    %c0_62 = arith.constant 0 : index
    %161 = vector.load %arg5[%c0_60, %c0_61, %c0_62] : memref<2x1x512xf32, #tpu.memory_space<vmem>>, vector<1x1x512xf32>
    %162 = vector.shape_cast %161 : vector<1x1x512xf32> to vector<1x512xf32>
    %163 = vector.broadcast %162 : vector<1x512xf32> to vector<16x512xf32>
    %164 = arith.addf %160, %163 : vector<16x512xf32>
    %cst_63 = arith.constant 5.000000e-01 : f32
    %165 = vector.broadcast %cst_63 : f32 to vector<16x512xf32>
    %166 = arith.mulf %165, %164 : vector<16x512xf32>
    %cst_64 = arith.constant 0.707106769 : f32
    %167 = vector.broadcast %cst_64 : f32 to vector<16x512xf32>
    %168 = arith.mulf %164, %167 : vector<16x512xf32>
    %169 = math.erf %168 : vector<16x512xf32>
    %cst_65 = arith.constant 1.000000e+00 : f32
    %170 = vector.broadcast %cst_65 : f32 to vector<16x512xf32>
    %171 = arith.addf %170, %169 : vector<16x512xf32>
    %172 = arith.mulf %166, %171 : vector<16x512xf32>
    %173 = arith.truncf %172 : vector<16x512xf32> to vector<16x512xbf16>
    %cst_66 = arith.constant dense<0.000000e+00> : vector<16x128xf32>
    %174 = tpu.matmul %173, %12, %cst_66 {dimension_numbers = #tpu.dot_dimension_numbers<[1], [0], [0], [1], [0, 0, 1, 1], [], []>} : vector<16x512xbf16>, vector<512x128xbf16>, vector<16x128xf32> -> vector<16x128xf32>
    %c9 = arith.constant 9 : index
    %c0_67 = arith.constant 0 : index
    %175 = vector.load %arg4[%c9, %c0_67] : memref<25x128xf32, #tpu.memory_space<vmem>>, vector<1x128xf32>
    %176 = vector.broadcast %175 : vector<1x128xf32> to vector<16x128xf32>
    %177 = arith.addf %174, %176 : vector<16x128xf32>
    %c10 = arith.constant 10 : index
    %c0_68 = arith.constant 0 : index
    %178 = vector.load %arg4[%c10, %c0_68] : memref<25x128xf32, #tpu.memory_space<vmem>>, vector<1x128xf32>
    %179 = vector.broadcast %178 : vector<1x128xf32> to vector<16x128xf32>
    %180 = arith.mulf %177, %179 : vector<16x128xf32>
    %181 = arith.addf %136, %180 : vector<16x128xf32>
    %c1_69 = arith.constant 1 : index
    %c0_70 = arith.constant 0 : index
    %c0_71 = arith.constant 0 : index
    %182 = vector.load %arg7[%c1_69, %c0_70, %c0_71] : memref<2x128x1024xbf16, #tpu.memory_space<vmem>>, vector<1x128x1024xbf16>
    %183 = vector.shape_cast %182 : vector<1x128x1024xbf16> to vector<128x1024xbf16>
    %184 = vector.extract_strided_slice %183 {offsets = [0, 0], sizes = [128, 384], strides = [1, 1]} : vector<128x1024xbf16> to vector<128x384xbf16>
    %185 = vector.extract_strided_slice %183 {offsets = [0, 384], sizes = [128, 128], strides = [1, 1]} : vector<128x1024xbf16> to vector<128x128xbf16>
    %186 = vector.extract_strided_slice %183 {offsets = [0, 512], sizes = [128, 512], strides = [1, 1]} : vector<128x1024xbf16> to vector<128x512xbf16>
    %c1_72 = arith.constant 1 : index
    %c0_73 = arith.constant 0 : index
    %c0_74 = arith.constant 0 : index
    %187 = vector.load %arg8[%c1_72, %c0_73, %c0_74] : memref<2x512x128xbf16, #tpu.memory_space<vmem>>, vector<1x512x128xbf16>
    %188 = vector.shape_cast %187 : vector<1x512x128xbf16> to vector<512x128xbf16>
    %c11 = arith.constant 11 : index
    %c0_75 = arith.constant 0 : index
    %189 = vector.load %arg4[%c11, %c0_75] : memref<25x128xf32, #tpu.memory_space<vmem>>, vector<1x128xf32>
    %c12 = arith.constant 12 : index
    %c0_76 = arith.constant 0 : index
    %190 = vector.load %arg4[%c12, %c0_76] : memref<25x128xf32, #tpu.memory_space<vmem>>, vector<1x128xf32>
    %cst_77 = arith.constant dense<0.000000e+00> : vector<16xf32>
    %191 = vector.multi_reduction <add>, %181, %cst_77 [1] : vector<16x128xf32> to vector<16xf32>
    %192 = vector.shape_cast %191 : vector<16xf32> to vector<16x1xf32>
    %cst_78 = arith.constant 1.280000e+02 : f32
    %193 = vector.broadcast %cst_78 : f32 to vector<16x1xf32>
    %194 = arith.divf %192, %193 : vector<16x1xf32>
    %195 = vector.broadcast %194 : vector<16x1xf32> to vector<16x128xf32>
    %196 = arith.subf %181, %195 : vector<16x128xf32>
    %197 = arith.mulf %196, %196 : vector<16x128xf32>
    %cst_79 = arith.constant dense<0.000000e+00> : vector<16xf32>
    %198 = vector.multi_reduction <add>, %197, %cst_79 [1] : vector<16x128xf32> to vector<16xf32>
    %199 = vector.shape_cast %198 : vector<16xf32> to vector<16x1xf32>
    %cst_80 = arith.constant 1.280000e+02 : f32
    %200 = vector.broadcast %cst_80 : f32 to vector<16x1xf32>
    %201 = arith.divf %199, %200 : vector<16x1xf32>
    %cst_81 = arith.constant 9.99999997E-7 : f32
    %202 = vector.broadcast %cst_81 : f32 to vector<16x1xf32>
    %203 = arith.addf %201, %202 : vector<16x1xf32>
    %204 = math.rsqrt %203 : vector<16x1xf32>
    %205 = vector.broadcast %204 : vector<16x1xf32> to vector<16x128xf32>
    %206 = arith.mulf %196, %205 : vector<16x128xf32>
    %207 = vector.broadcast %189 : vector<1x128xf32> to vector<16x128xf32>
    %208 = arith.mulf %206, %207 : vector<16x128xf32>
    %209 = vector.broadcast %190 : vector<1x128xf32> to vector<16x128xf32>
    %210 = arith.addf %208, %209 : vector<16x128xf32>
    %211 = arith.truncf %210 : vector<16x128xf32> to vector<16x128xbf16>
    %cst_82 = arith.constant dense<0.000000e+00> : vector<16x384xf32>
    %212 = tpu.matmul %211, %184, %cst_82 {dimension_numbers = #tpu.dot_dimension_numbers<[1], [0], [0], [1], [0, 0, 1, 1], [], []>} : vector<16x128xbf16>, vector<128x384xbf16>, vector<16x384xf32> -> vector<16x384xf32>
    %213 = vector.extract_strided_slice %212 {offsets = [0, 0], sizes = [16, 128], strides = [1, 1]} : vector<16x384xf32> to vector<16x128xf32>
    %c13 = arith.constant 13 : index
    %c0_83 = arith.constant 0 : index
    %214 = vector.load %arg4[%c13, %c0_83] : memref<25x128xf32, #tpu.memory_space<vmem>>, vector<1x128xf32>
    %215 = vector.broadcast %214 : vector<1x128xf32> to vector<16x128xf32>
    %216 = arith.addf %213, %215 : vector<16x128xf32>
    %cst_84 = arith.constant 0.176776692 : f32
    %217 = vector.broadcast %cst_84 : f32 to vector<16x128xf32>
    %218 = arith.mulf %216, %217 : vector<16x128xf32>
    %219 = vector.extract_strided_slice %212 {offsets = [0, 128], sizes = [16, 128], strides = [1, 1]} : vector<16x384xf32> to vector<16x128xf32>
    %c14 = arith.constant 14 : index
    %c0_85 = arith.constant 0 : index
    %220 = vector.load %arg4[%c14, %c0_85] : memref<25x128xf32, #tpu.memory_space<vmem>>, vector<1x128xf32>
    %221 = vector.broadcast %220 : vector<1x128xf32> to vector<16x128xf32>
    %222 = arith.addf %219, %221 : vector<16x128xf32>
    %223 = vector.extract_strided_slice %212 {offsets = [0, 256], sizes = [16, 128], strides = [1, 1]} : vector<16x384xf32> to vector<16x128xf32>
    %c15 = arith.constant 15 : index
    %c0_86 = arith.constant 0 : index
    %224 = vector.load %arg4[%c15, %c0_86] : memref<25x128xf32, #tpu.memory_space<vmem>>, vector<1x128xf32>
    %225 = vector.broadcast %224 : vector<1x128xf32> to vector<16x128xf32>
    %226 = arith.addf %223, %225 : vector<16x128xf32>
    %227 = arith.truncf %218 : vector<16x128xf32> to vector<16x128xbf16>
    %228 = tpu.transpose %222, [1, 0] : vector<16x128xf32> -> vector<128x16xf32>
    %229 = arith.truncf %228 : vector<128x16xf32> to vector<128x16xbf16>
    %230 = arith.truncf %226 : vector<16x128xf32> to vector<16x128xbf16>
    %231 = vector.extract_strided_slice %227 {offsets = [0, 0], sizes = [16, 32], strides = [1, 1]} : vector<16x128xbf16> to vector<16x32xbf16>
    %232 = vector.extract_strided_slice %229 {offsets = [0, 0], sizes = [32, 16], strides = [1, 1]} : vector<128x16xbf16> to vector<32x16xbf16>
    %cst_87 = arith.constant dense<0.000000e+00> : vector<16x16xf32>
    %233 = tpu.matmul %231, %232, %cst_87 {dimension_numbers = #tpu.dot_dimension_numbers<[1], [0], [0], [1], [0, 0, 1, 1], [], []>} : vector<16x32xbf16>, vector<32x16xbf16>, vector<16x16xf32> -> vector<16x16xf32>
    %234 = arith.addf %233, %5 : vector<16x16xf32>
    %cst_88 = arith.constant dense<0xFF800000> : vector<16xf32>
    %235 = vector.multi_reduction <maximumf>, %234, %cst_88 [1] : vector<16x16xf32> to vector<16xf32>
    %236 = vector.shape_cast %235 : vector<16xf32> to vector<16x1xf32>
    %237 = vector.broadcast %236 : vector<16x1xf32> to vector<16x16xf32>
    %238 = arith.subf %234, %237 : vector<16x16xf32>
    %239 = math.exp %238 : vector<16x16xf32>
    %cst_89 = arith.constant dense<0.000000e+00> : vector<16xf32>
    %240 = vector.multi_reduction <add>, %239, %cst_89 [1] : vector<16x16xf32> to vector<16xf32>
    %241 = vector.shape_cast %240 : vector<16xf32> to vector<16x1xf32>
    %242 = tpu.reciprocal %241 {approx = true} : vector<16x1xf32> -> vector<16x1xf32>
    %243 = vector.broadcast %242 : vector<16x1xf32> to vector<16x16xf32>
    %244 = arith.mulf %239, %243 : vector<16x16xf32>
    %245 = arith.truncf %244 : vector<16x16xf32> to vector<16x16xbf16>
    %246 = vector.extract_strided_slice %230 {offsets = [0, 0], sizes = [16, 32], strides = [1, 1]} : vector<16x128xbf16> to vector<16x32xbf16>
    %cst_90 = arith.constant dense<0.000000e+00> : vector<16x32xf32>
    %247 = tpu.matmul %245, %246, %cst_90 {dimension_numbers = #tpu.dot_dimension_numbers<[1], [0], [0], [1], [0, 0, 1, 1], [], []>} : vector<16x16xbf16>, vector<16x32xbf16>, vector<16x32xf32> -> vector<16x32xf32>
    %c0_91 = arith.constant 0 : index
    %c0_92 = arith.constant 0 : index
    %248 = vector.load %arg11[%c0_91, %c0_92] : memref<16x128xf32, #tpu.memory_space<vmem>>, vector<16x32xf32>
    tpu.vector_store %arg11[%c0_91, %c0_92], %247 {strides = array<i32>} : memref<16x128xf32, #tpu.memory_space<vmem>>, vector<16x32xf32>,
    %249 = vector.extract_strided_slice %227 {offsets = [0, 32], sizes = [16, 32], strides = [1, 1]} : vector<16x128xbf16> to vector<16x32xbf16>
    %250 = vector.extract_strided_slice %229 {offsets = [32, 0], sizes = [32, 16], strides = [1, 1]} : vector<128x16xbf16> to vector<32x16xbf16>
    %cst_93 = arith.constant dense<0.000000e+00> : vector<16x16xf32>
    %251 = tpu.matmul %249, %250, %cst_93 {dimension_numbers = #tpu.dot_dimension_numbers<[1], [0], [0], [1], [0, 0, 1, 1], [], []>} : vector<16x32xbf16>, vector<32x16xbf16>, vector<16x16xf32> -> vector<16x16xf32>
    %252 = arith.addf %251, %5 : vector<16x16xf32>
    %cst_94 = arith.constant dense<0xFF800000> : vector<16xf32>
    %253 = vector.multi_reduction <maximumf>, %252, %cst_94 [1] : vector<16x16xf32> to vector<16xf32>
    %254 = vector.shape_cast %253 : vector<16xf32> to vector<16x1xf32>
    %255 = vector.broadcast %254 : vector<16x1xf32> to vector<16x16xf32>
    %256 = arith.subf %252, %255 : vector<16x16xf32>
    %257 = math.exp %256 : vector<16x16xf32>
    %cst_95 = arith.constant dense<0.000000e+00> : vector<16xf32>
    %258 = vector.multi_reduction <add>, %257, %cst_95 [1] : vector<16x16xf32> to vector<16xf32>
    %259 = vector.shape_cast %258 : vector<16xf32> to vector<16x1xf32>
    %260 = tpu.reciprocal %259 {approx = true} : vector<16x1xf32> -> vector<16x1xf32>
    %261 = vector.broadcast %260 : vector<16x1xf32> to vector<16x16xf32>
    %262 = arith.mulf %257, %261 : vector<16x16xf32>
    %263 = arith.truncf %262 : vector<16x16xf32> to vector<16x16xbf16>
    %264 = vector.extract_strided_slice %230 {offsets = [0, 32], sizes = [16, 32], strides = [1, 1]} : vector<16x128xbf16> to vector<16x32xbf16>
    %cst_96 = arith.constant dense<0.000000e+00> : vector<16x32xf32>
    %265 = tpu.matmul %263, %264, %cst_96 {dimension_numbers = #tpu.dot_dimension_numbers<[1], [0], [0], [1], [0, 0, 1, 1], [], []>} : vector<16x16xbf16>, vector<16x32xbf16>, vector<16x32xf32> -> vector<16x32xf32>
    %c0_97 = arith.constant 0 : index
    %c32_98 = arith.constant 32 : index
    %266 = vector.load %arg11[%c0_97, %c32_98] : memref<16x128xf32, #tpu.memory_space<vmem>>, vector<16x32xf32>
    tpu.vector_store %arg11[%c0_97, %c32_98], %265 {strides = array<i32>} : memref<16x128xf32, #tpu.memory_space<vmem>>, vector<16x32xf32>,
    %267 = vector.extract_strided_slice %227 {offsets = [0, 64], sizes = [16, 32], strides = [1, 1]} : vector<16x128xbf16> to vector<16x32xbf16>
    %268 = vector.extract_strided_slice %229 {offsets = [64, 0], sizes = [32, 16], strides = [1, 1]} : vector<128x16xbf16> to vector<32x16xbf16>
    %cst_99 = arith.constant dense<0.000000e+00> : vector<16x16xf32>
    %269 = tpu.matmul %267, %268, %cst_99 {dimension_numbers = #tpu.dot_dimension_numbers<[1], [0], [0], [1], [0, 0, 1, 1], [], []>} : vector<16x32xbf16>, vector<32x16xbf16>, vector<16x16xf32> -> vector<16x16xf32>
    %270 = arith.addf %269, %5 : vector<16x16xf32>
    %cst_100 = arith.constant dense<0xFF800000> : vector<16xf32>
    %271 = vector.multi_reduction <maximumf>, %270, %cst_100 [1] : vector<16x16xf32> to vector<16xf32>
    %272 = vector.shape_cast %271 : vector<16xf32> to vector<16x1xf32>
    %273 = vector.broadcast %272 : vector<16x1xf32> to vector<16x16xf32>
    %274 = arith.subf %270, %273 : vector<16x16xf32>
    %275 = math.exp %274 : vector<16x16xf32>
    %cst_101 = arith.constant dense<0.000000e+00> : vector<16xf32>
    %276 = vector.multi_reduction <add>, %275, %cst_101 [1] : vector<16x16xf32> to vector<16xf32>
    %277 = vector.shape_cast %276 : vector<16xf32> to vector<16x1xf32>
    %278 = tpu.reciprocal %277 {approx = true} : vector<16x1xf32> -> vector<16x1xf32>
    %279 = vector.broadcast %278 : vector<16x1xf32> to vector<16x16xf32>
    %280 = arith.mulf %275, %279 : vector<16x16xf32>
    %281 = arith.truncf %280 : vector<16x16xf32> to vector<16x16xbf16>
    %282 = vector.extract_strided_slice %230 {offsets = [0, 64], sizes = [16, 32], strides = [1, 1]} : vector<16x128xbf16> to vector<16x32xbf16>
    %cst_102 = arith.constant dense<0.000000e+00> : vector<16x32xf32>
    %283 = tpu.matmul %281, %282, %cst_102 {dimension_numbers = #tpu.dot_dimension_numbers<[1], [0], [0], [1], [0, 0, 1, 1], [], []>} : vector<16x16xbf16>, vector<16x32xbf16>, vector<16x32xf32> -> vector<16x32xf32>
    %c0_103 = arith.constant 0 : index
    %c64_104 = arith.constant 64 : index
    %284 = vector.load %arg11[%c0_103, %c64_104] : memref<16x128xf32, #tpu.memory_space<vmem>>, vector<16x32xf32>
    tpu.vector_store %arg11[%c0_103, %c64_104], %283 {strides = array<i32>} : memref<16x128xf32, #tpu.memory_space<vmem>>, vector<16x32xf32>,
    %285 = vector.extract_strided_slice %227 {offsets = [0, 96], sizes = [16, 32], strides = [1, 1]} : vector<16x128xbf16> to vector<16x32xbf16>
    %286 = vector.extract_strided_slice %229 {offsets = [96, 0], sizes = [32, 16], strides = [1, 1]} : vector<128x16xbf16> to vector<32x16xbf16>
    %cst_105 = arith.constant dense<0.000000e+00> : vector<16x16xf32>
    %287 = tpu.matmul %285, %286, %cst_105 {dimension_numbers = #tpu.dot_dimension_numbers<[1], [0], [0], [1], [0, 0, 1, 1], [], []>} : vector<16x32xbf16>, vector<32x16xbf16>, vector<16x16xf32> -> vector<16x16xf32>
    %288 = arith.addf %287, %5 : vector<16x16xf32>
    %cst_106 = arith.constant dense<0xFF800000> : vector<16xf32>
    %289 = vector.multi_reduction <maximumf>, %288, %cst_106 [1] : vector<16x16xf32> to vector<16xf32>
    %290 = vector.shape_cast %289 : vector<16xf32> to vector<16x1xf32>
    %291 = vector.broadcast %290 : vector<16x1xf32> to vector<16x16xf32>
    %292 = arith.subf %288, %291 : vector<16x16xf32>
    %293 = math.exp %292 : vector<16x16xf32>
    %cst_107 = arith.constant dense<0.000000e+00> : vector<16xf32>
    %294 = vector.multi_reduction <add>, %293, %cst_107 [1] : vector<16x16xf32> to vector<16xf32>
    %295 = vector.shape_cast %294 : vector<16xf32> to vector<16x1xf32>
    %296 = tpu.reciprocal %295 {approx = true} : vector<16x1xf32> -> vector<16x1xf32>
    %297 = vector.broadcast %296 : vector<16x1xf32> to vector<16x16xf32>
    %298 = arith.mulf %293, %297 : vector<16x16xf32>
    %299 = arith.truncf %298 : vector<16x16xf32> to vector<16x16xbf16>
    %300 = vector.extract_strided_slice %230 {offsets = [0, 96], sizes = [16, 32], strides = [1, 1]} : vector<16x128xbf16> to vector<16x32xbf16>
    %cst_108 = arith.constant dense<0.000000e+00> : vector<16x32xf32>
    %301 = tpu.matmul %299, %300, %cst_108 {dimension_numbers = #tpu.dot_dimension_numbers<[1], [0], [0], [1], [0, 0, 1, 1], [], []>} : vector<16x16xbf16>, vector<16x32xbf16>, vector<16x32xf32> -> vector<16x32xf32>
    %c0_109 = arith.constant 0 : index
    %c96_110 = arith.constant 96 : index
    %302 = vector.load %arg11[%c0_109, %c96_110] : memref<16x128xf32, #tpu.memory_space<vmem>>, vector<16x32xf32>
    tpu.vector_store %arg11[%c0_109, %c96_110], %301 {strides = array<i32>} : memref<16x128xf32, #tpu.memory_space<vmem>>, vector<16x32xf32>,
    %c0_111 = arith.constant 0 : index
    %c0_112 = arith.constant 0 : index
    %303 = vector.load %arg11[%c0_111, %c0_112] : memref<16x128xf32, #tpu.memory_space<vmem>>, vector<16x128xf32>
    %304 = arith.truncf %303 : vector<16x128xf32> to vector<16x128xbf16>
    %cst_113 = arith.constant dense<0.000000e+00> : vector<16x128xf32>
    %305 = tpu.matmul %304, %185, %cst_113 {dimension_numbers = #tpu.dot_dimension_numbers<[1], [0], [0], [1], [0, 0, 1, 1], [], []>} : vector<16x128xbf16>, vector<128x128xbf16>, vector<16x128xf32> -> vector<16x128xf32>
    %c16 = arith.constant 16 : index
    %c0_114 = arith.constant 0 : index
    %306 = vector.load %arg4[%c16, %c0_114] : memref<25x128xf32, #tpu.memory_space<vmem>>, vector<1x128xf32>
    %307 = vector.broadcast %306 : vector<1x128xf32> to vector<16x128xf32>
    %308 = arith.addf %305, %307 : vector<16x128xf32>
    %c17 = arith.constant 17 : index
    %c0_115 = arith.constant 0 : index
    %309 = vector.load %arg4[%c17, %c0_115] : memref<25x128xf32, #tpu.memory_space<vmem>>, vector<1x128xf32>
    %310 = vector.broadcast %309 : vector<1x128xf32> to vector<16x128xf32>
    %311 = arith.mulf %308, %310 : vector<16x128xf32>
    %312 = arith.addf %181, %311 : vector<16x128xf32>
    %c18 = arith.constant 18 : index
    %c0_116 = arith.constant 0 : index
    %313 = vector.load %arg4[%c18, %c0_116] : memref<25x128xf32, #tpu.memory_space<vmem>>, vector<1x128xf32>
    %c19 = arith.constant 19 : index
    %c0_117 = arith.constant 0 : index
    %314 = vector.load %arg4[%c19, %c0_117] : memref<25x128xf32, #tpu.memory_space<vmem>>, vector<1x128xf32>
    %cst_118 = arith.constant dense<0.000000e+00> : vector<16xf32>
    %315 = vector.multi_reduction <add>, %312, %cst_118 [1] : vector<16x128xf32> to vector<16xf32>
    %316 = vector.shape_cast %315 : vector<16xf32> to vector<16x1xf32>
    %cst_119 = arith.constant 1.280000e+02 : f32
    %317 = vector.broadcast %cst_119 : f32 to vector<16x1xf32>
    %318 = arith.divf %316, %317 : vector<16x1xf32>
    %319 = vector.broadcast %318 : vector<16x1xf32> to vector<16x128xf32>
    %320 = arith.subf %312, %319 : vector<16x128xf32>
    %321 = arith.mulf %320, %320 : vector<16x128xf32>
    %cst_120 = arith.constant dense<0.000000e+00> : vector<16xf32>
    %322 = vector.multi_reduction <add>, %321, %cst_120 [1] : vector<16x128xf32> to vector<16xf32>
    %323 = vector.shape_cast %322 : vector<16xf32> to vector<16x1xf32>
    %cst_121 = arith.constant 1.280000e+02 : f32
    %324 = vector.broadcast %cst_121 : f32 to vector<16x1xf32>
    %325 = arith.divf %323, %324 : vector<16x1xf32>
    %cst_122 = arith.constant 9.99999997E-7 : f32
    %326 = vector.broadcast %cst_122 : f32 to vector<16x1xf32>
    %327 = arith.addf %325, %326 : vector<16x1xf32>
    %328 = math.rsqrt %327 : vector<16x1xf32>
    %329 = vector.broadcast %328 : vector<16x1xf32> to vector<16x128xf32>
    %330 = arith.mulf %320, %329 : vector<16x128xf32>
    %331 = vector.broadcast %313 : vector<1x128xf32> to vector<16x128xf32>
    %332 = arith.mulf %330, %331 : vector<16x128xf32>
    %333 = vector.broadcast %314 : vector<1x128xf32> to vector<16x128xf32>
    %334 = arith.addf %332, %333 : vector<16x128xf32>
    %335 = arith.truncf %334 : vector<16x128xf32> to vector<16x128xbf16>
    %cst_123 = arith.constant dense<0.000000e+00> : vector<16x512xf32>
    %336 = tpu.matmul %335, %186, %cst_123 {dimension_numbers = #tpu.dot_dimension_numbers<[1], [0], [0], [1], [0, 0, 1, 1], [], []>} : vector<16x128xbf16>, vector<128x512xbf16>, vector<16x512xf32> -> vector<16x512xf32>
    %c1_124 = arith.constant 1 : index
    %c0_125 = arith.constant 0 : index
    %c0_126 = arith.constant 0 : index
    %337 = vector.load %arg5[%c1_124, %c0_125, %c0_126] : memref<2x1x512xf32, #tpu.memory_space<vmem>>, vector<1x1x512xf32>
    %338 = vector.shape_cast %337 : vector<1x1x512xf32> to vector<1x512xf32>
    %339 = vector.broadcast %338 : vector<1x512xf32> to vector<16x512xf32>
    %340 = arith.addf %336, %339 : vector<16x512xf32>
    %cst_127 = arith.constant 5.000000e-01 : f32
    %341 = vector.broadcast %cst_127 : f32 to vector<16x512xf32>
    %342 = arith.mulf %341, %340 : vector<16x512xf32>
    %cst_128 = arith.constant 0.707106769 : f32
    %343 = vector.broadcast %cst_128 : f32 to vector<16x512xf32>
    %344 = arith.mulf %340, %343 : vector<16x512xf32>
    %345 = math.erf %344 : vector<16x512xf32>
    %cst_129 = arith.constant 1.000000e+00 : f32
    %346 = vector.broadcast %cst_129 : f32 to vector<16x512xf32>
    %347 = arith.addf %346, %345 : vector<16x512xf32>
    %348 = arith.mulf %342, %347 : vector<16x512xf32>
    %349 = arith.truncf %348 : vector<16x512xf32> to vector<16x512xbf16>
    %cst_130 = arith.constant dense<0.000000e+00> : vector<16x128xf32>
    %350 = tpu.matmul %349, %188, %cst_130 {dimension_numbers = #tpu.dot_dimension_numbers<[1], [0], [0], [1], [0, 0, 1, 1], [], []>} : vector<16x512xbf16>, vector<512x128xbf16>, vector<16x128xf32> -> vector<16x128xf32>
    %c20 = arith.constant 20 : index
    %c0_131 = arith.constant 0 : index
    %351 = vector.load %arg4[%c20, %c0_131] : memref<25x128xf32, #tpu.memory_space<vmem>>, vector<1x128xf32>
    %352 = vector.broadcast %351 : vector<1x128xf32> to vector<16x128xf32>
    %353 = arith.addf %350, %352 : vector<16x128xf32>
    %c21 = arith.constant 21 : index
    %c0_132 = arith.constant 0 : index
    %354 = vector.load %arg4[%c21, %c0_132] : memref<25x128xf32, #tpu.memory_space<vmem>>, vector<1x128xf32>
    %355 = vector.broadcast %354 : vector<1x128xf32> to vector<16x128xf32>
    %356 = arith.mulf %353, %355 : vector<16x128xf32>
    %357 = arith.addf %312, %356 : vector<16x128xf32>
    %c22 = arith.constant 22 : index
    %c0_133 = arith.constant 0 : index
    %358 = vector.load %arg4[%c22, %c0_133] : memref<25x128xf32, #tpu.memory_space<vmem>>, vector<1x128xf32>
    %c23 = arith.constant 23 : index
    %c0_134 = arith.constant 0 : index
    %359 = vector.load %arg4[%c23, %c0_134] : memref<25x128xf32, #tpu.memory_space<vmem>>, vector<1x128xf32>
    %cst_135 = arith.constant dense<0.000000e+00> : vector<16xf32>
    %360 = vector.multi_reduction <add>, %357, %cst_135 [1] : vector<16x128xf32> to vector<16xf32>
    %361 = vector.shape_cast %360 : vector<16xf32> to vector<16x1xf32>
    %cst_136 = arith.constant 1.280000e+02 : f32
    %362 = vector.broadcast %cst_136 : f32 to vector<16x1xf32>
    %363 = arith.divf %361, %362 : vector<16x1xf32>
    %364 = vector.broadcast %363 : vector<16x1xf32> to vector<16x128xf32>
    %365 = arith.subf %357, %364 : vector<16x128xf32>
    %366 = arith.mulf %365, %365 : vector<16x128xf32>
    %cst_137 = arith.constant dense<0.000000e+00> : vector<16xf32>
    %367 = vector.multi_reduction <add>, %366, %cst_137 [1] : vector<16x128xf32> to vector<16xf32>
    %368 = vector.shape_cast %367 : vector<16xf32> to vector<16x1xf32>
    %cst_138 = arith.constant 1.280000e+02 : f32
    %369 = vector.broadcast %cst_138 : f32 to vector<16x1xf32>
    %370 = arith.divf %368, %369 : vector<16x1xf32>
    %cst_139 = arith.constant 9.99999997E-7 : f32
    %371 = vector.broadcast %cst_139 : f32 to vector<16x1xf32>
    %372 = arith.addf %370, %371 : vector<16x1xf32>
    %373 = math.rsqrt %372 : vector<16x1xf32>
    %374 = vector.broadcast %373 : vector<16x1xf32> to vector<16x128xf32>
    %375 = arith.mulf %365, %374 : vector<16x128xf32>
    %376 = vector.broadcast %358 : vector<1x128xf32> to vector<16x128xf32>
    %377 = arith.mulf %375, %376 : vector<16x128xf32>
    %378 = vector.broadcast %359 : vector<1x128xf32> to vector<16x128xf32>
    %379 = arith.addf %377, %378 : vector<16x128xf32>
    %380 = arith.truncf %379 : vector<16x128xf32> to vector<16x128xbf16>
    %c0_140 = arith.constant 0 : index
    %c0_141 = arith.constant 0 : index
    %381 = vector.load %arg9[%c0_140, %c0_141] : memref<128x128xbf16, #tpu.memory_space<vmem>>, vector<128x128xbf16>
    %cst_142 = arith.constant dense<0.000000e+00> : vector<16x128xf32>
    %382 = tpu.matmul %380, %381, %cst_142 {dimension_numbers = #tpu.dot_dimension_numbers<[1], [0], [0], [1], [0, 0, 1, 1], [], []>} : vector<16x128xbf16>, vector<128x128xbf16>, vector<16x128xf32> -> vector<16x128xf32>
    %c24 = arith.constant 24 : index
    %c0_143 = arith.constant 0 : index
    %383 = vector.load %arg4[%c24, %c0_143] : memref<25x128xf32, #tpu.memory_space<vmem>>, vector<1x128xf32>
    %384 = vector.broadcast %383 : vector<1x128xf32> to vector<16x128xf32>
    %385 = arith.addf %382, %384 : vector<16x128xf32>
    %c0_144 = arith.constant 0 : index
    %c0_145 = arith.constant 0 : index
    %386 = vector.load %arg10[%c0_144, %c0_145] : memref<16x128xf32, #tpu.memory_space<vmem>>, vector<16x128xf32>
    tpu.vector_store %arg10[%c0_144, %c0_145], %385 {strides = array<i32>} : memref<16x128xf32, #tpu.memory_space<vmem>>, vector<16x128xf32>,
    return
  }
  func.func @transform_0(%arg0: i32) -> (i32, i32) {
    %c0_i32 = arith.constant 0 : i32
    %c0_i32_0 = arith.constant 0 : i32
    return %arg0, %c0_i32 : i32, i32
  }
  func.func @transform_1(%arg0: i32) -> (i32, i32) {
    %c0_i32 = arith.constant 0 : i32
    %c0_i32_0 = arith.constant 0 : i32
    %c0_i32_1 = arith.constant 0 : i32
    return %c0_i32, %c0_i32_0 : i32, i32
  }
  func.func @transform_2(%arg0: i32) -> (i32, i32) {
    %c0_i32 = arith.constant 0 : i32
    %c0_i32_0 = arith.constant 0 : i32
    %c0_i32_1 = arith.constant 0 : i32
    return %c0_i32, %c0_i32_0 : i32, i32
  }
  func.func @transform_3(%arg0: i32) -> (i32, i32) {
    %c0_i32 = arith.constant 0 : i32
    %c0_i32_0 = arith.constant 0 : i32
    %c0_i32_1 = arith.constant 0 : i32
    return %c0_i32, %c0_i32_0 : i32, i32
  }
  func.func @transform_4(%arg0: i32) -> (i32, i32, i32) {
    %c0_i32 = arith.constant 0 : i32
    %c0_i32_0 = arith.constant 0 : i32
    %c0_i32_1 = arith.constant 0 : i32
    %c0_i32_2 = arith.constant 0 : i32
    return %c0_i32, %c0_i32_0, %c0_i32_1 : i32, i32, i32
  }
  func.func @transform_5(%arg0: i32) -> (i32, i32) {
    %c0_i32 = arith.constant 0 : i32
    %c0_i32_0 = arith.constant 0 : i32
    %c0_i32_1 = arith.constant 0 : i32
    return %c0_i32, %c0_i32_0 : i32, i32
  }
  func.func @transform_6(%arg0: i32) -> (i32, i32, i32) {
    %c0_i32 = arith.constant 0 : i32
    %c0_i32_0 = arith.constant 0 : i32
    %c0_i32_1 = arith.constant 0 : i32
    %c0_i32_2 = arith.constant 0 : i32
    return %c0_i32, %c0_i32_0, %c0_i32_1 : i32, i32, i32
  }
  func.func @transform_7(%arg0: i32) -> (i32, i32, i32) {
    %c0_i32 = arith.constant 0 : i32
    %c0_i32_0 = arith.constant 0 : i32
    %c0_i32_1 = arith.constant 0 : i32
    %c0_i32_2 = arith.constant 0 : i32
    return %c0_i32, %c0_i32_0, %c0_i32_1 : i32, i32, i32
  }
  func.func @transform_8(%arg0: i32) -> (i32, i32) {
    %c0_i32 = arith.constant 0 : i32
    %c0_i32_0 = arith.constant 0 : i32
    %c0_i32_1 = arith.constant 0 : i32
    return %c0_i32, %c0_i32_0 : i32, i32
  }
  func.func @transform_9(%arg0: i32) -> (i32, i32) {
    %c0_i32 = arith.constant 0 : i32
    %c0_i32_0 = arith.constant 0 : i32
    return %arg0, %c0_i32 : i32, i32
  }
}

</mosaic_0001>

<llo_original>
// kernel: _vit_forward.1
$region0: #{_vit_forward.1}
  #allocation0 [shape = 'u32[]', space=smem, size = 0x4, offset = 0x4, fixed_abs, tag = 'smem constant byte address 0x4 - core index']
  #allocation1 [shape = 'u32[144,128]{1,0:T(1,128)}', space=vmem, size = 0x12000, scoped, tag = 'internal scratch']
  #allocation2 [shape = 'f32[16,128]{1,0:T(8,128)}', space=vmem, size = 0x2000, scoped, tag = 'scratch operand']
  %s0 = inlined_call_operand.vmem [shape: bf16[16,640], index: 0, kind: input, shape index: {}]
  %s1 = inlined_call_operand.vmem [shape: f32[16,128], index: 1, kind: input, shape index: {}]
  %s2 = inlined_call_operand.vmem [shape: f32[16,16], index: 2, kind: input, shape index: {}]
  %s3 = inlined_call_operand.vmem [shape: f32[25,128], index: 3, kind: input, shape index: {}]
  %s4 = inlined_call_operand.vmem [shape: f32[2,1,512], index: 4, kind: input, shape index: {}]
  %s5 = inlined_call_operand.hbm [shape: bf16[640,128], index: 5, kind: input, shape index: {}]
  %s6 = inlined_call_operand.vmem [shape: bf16[2,128,1024], index: 6, kind: input, shape index: {}]
  %s7 = inlined_call_operand.hbm [shape: bf16[2,512,128], index: 7, kind: input, shape index: {}]
  %s8 = inlined_call_operand.vmem [shape: bf16[128,128], index: 8, kind: input, shape index: {}]
  %s9 = inlined_call_operand.vmem [shape: f32[16,128], index: 9, kind: output, shape index: {}]
  %s10 = sld [smem:[#allocation0]]
  $region54: #{_vit_forward.1} parent=0
    _
  %s12 = ssub.s32 1, %s10
  %s13 = scalar_select 0, %s12, %s10
  $region1: #{_vit_forward.1} parent=0
    #allocation3 [shape = 'u8[163840]{0}', space=vmem, size = 0x28000, scoped, tag = 'input window, operand 5, single buffered']
    #allocation4 [shape = 's32[1]{0}', space=sflag, size = 0x4, scoped, tag = 'scoped memory for _vit_forward.1']
    #allocation5 [shape = 'u8[262144]{0}', space=vmem, size = 0x40000, scoped, tag = 'input window, operand 7, single buffered']
    #allocation6 [shape = 's32[1]{0}', space=sflag, size = 0x4, scoped, tag = 'scoped memory for _vit_forward.1']
    %14 = vsyncpa [#allocation4], 0
    %15 = vsyncpa [#allocation6], 0
    // Predicated region
    $region2: #{_vit_forward.1} parent=1 // pred_check
      _
    $region3: #{_vit_forward.1} parent=1 // pred_check_branch
      %17 = sbr.rel (0) target = $region5
    $region4: #{_vit_forward.1} parent=1 // pred_region
      _
    $region5: #{_vit_forward.1} parent=1 // pred_fallthru
      _
    // Predicated region
    $region6: #{_vit_forward.1} parent=1 // pred_check
      _
    $region7: #{_vit_forward.1} parent=1 // pred_check_branch
      %19 = sbr.rel (0) target = $region9
    $region8: #{_vit_forward.1} parent=1 // pred_region
      _
    $region9: #{_vit_forward.1} parent=1 // pred_fallthru
      _
    // Predicated region
    $region10: #{_vit_forward.1} parent=1 // pred_check
      _
    $region11: #{_vit_forward.1} parent=1 // pred_check_branch
      %21 = sbr.rel (0) target = $region13
    $region12: #{_vit_forward.1} parent=1 // pred_region
      _
    $region13: #{_vit_forward.1} parent=1 // pred_fallthru
      _
    // Predicated region
    $region14: #{_vit_forward.1} parent=1 // pred_check
      _
    $region15: #{_vit_forward.1} parent=1 // pred_check_branch
      %23 = sbr.rel (0) target = $region17
    $region16: #{_vit_forward.1} parent=1 // pred_region
      _
    $region17: #{_vit_forward.1} parent=1 // pred_fallthru
      _
    // Predicated region
    $region18: #{_vit_forward.1} parent=1 // pred_check
      _
    $region19: #{_vit_forward.1} parent=1 // pred_check_branch
      %25 = sbr.rel (0) target = $region21
    $region20: #{_vit_forward.1} parent=1 // pred_region
      _
    $region21: #{_vit_forward.1} parent=1 // pred_fallthru
      _
    // Predicated region
    $region22: #{_vit_forward.1} parent=1 // pred_check
      _
    $region23: #{_vit_forward.1} parent=1 // pred_check_branch
      %27 = sbr.rel (0) target = $region25
    $region24: #{_vit_forward.1} parent=1 // pred_region
      %s29 = ssub.s32 5120, 5120
      %30 = vsyncadd [#allocation4], %s29
      %s31 = sshll.u32 [#allocation3], 4
      %s32 = int_to_ptr.vmem [resolvable:$true] %s31
      %37 = dma.hbm_to_vmem [thread:$0]  %s5, 5120, %s32, [#allocation4], 64, 64, 4
    $region25: #{_vit_forward.1} parent=1 // pred_fallthru
      _
    // Predicated region
    $region26: #{_vit_forward.1} parent=1 // pred_check
      _
    $region27: #{_vit_forward.1} parent=1 // pred_check_branch
      %39 = sbr.rel (0) target = $region29
    $region28: #{_vit_forward.1} parent=1 // pred_region
      _
    $region29: #{_vit_forward.1} parent=1 // pred_fallthru
      _
    // Predicated region
    $region30: #{_vit_forward.1} parent=1 // pred_check
      _
    $region31: #{_vit_forward.1} parent=1 // pred_check_branch
      %41 = sbr.rel (0) target = $region33
    $region32: #{_vit_forward.1} parent=1 // pred_region
      %s43 = ssub.s32 8192, 8192
      %44 = vsyncadd [#allocation6], %s43
      %s45 = sshll.u32 [#allocation5], 4
      %s46 = int_to_ptr.vmem [resolvable:$true] %s45
      %51 = dma.hbm_to_vmem [thread:$0]  %s7, 8192, %s46, [#allocation6], 64, 64, 4
    $region33: #{_vit_forward.1} parent=1 // pred_fallthru
      _
    // Predicated region
    $region34: #{_vit_forward.1} parent=1 // pred_check
      _
    $region35: #{_vit_forward.1} parent=1 // pred_check_branch
      %53 = sbr.rel (0) target = $region37
    $region36: #{_vit_forward.1} parent=1 // pred_region
      _
    $region37: #{_vit_forward.1} parent=1 // pred_fallthru
      _
    // Predicated region
    $region38: #{_vit_forward.1} parent=1 // pred_check
      _
    $region39: #{_vit_forward.1} parent=1 // pred_check_branch
      %55 = sbr.rel (0) target = $region41
    $region40: #{_vit_forward.1} parent=1 // pred_region
      %56 = dma.done [#allocation4], 5120
    $region41: #{_vit_forward.1} parent=1 // pred_fallthru
      _
    // Predicated region
    $region42: #{_vit_forward.1} parent=1 // pred_check
      _
    $region43: #{_vit_forward.1} parent=1 // pred_check_branch
      %58 = sbr.rel (0) target = $region45
    $region44: #{_vit_forward.1} parent=1 // pred_region
      %59 = dma.done [#allocation6], 8192
    $region45: #{_vit_forward.1} parent=1 // pred_fallthru
      _
    %v61 = vld [vmem:[%s0] sm:$0xff]
    %v62 = vld [vmem:[%s0 + $0x8] sm:$0xff]
    %v63 = vld [vmem:[%s0 + $0x10] sm:$0xf]
    %v64 = vld [vmem:[%s0 + $0x14] sm:$0xff]
    %v65 = vld [vmem:[%s0 + $0x1c] sm:$0xff]
    %v66 = vld [vmem:[%s0 + $0x24] sm:$0xf]
    %v67 = vld [vmem:[#allocation3] sm:$0xf]
    %v68 = vld [vmem:[#allocation3 + $0x4] sm:$0xf]
    %v69 = vld [vmem:[#allocation3 + $0x8] sm:$0xf]
    %v70 = vld [vmem:[#allocation3 + $0xc] sm:$0xf]
    %v71 = vld [vmem:[#allocation3 + $0x10] sm:$0xf]
    %v72 = vld [vmem:[#allocation3 + $0x14] sm:$0xf]
    %v73 = vld [vmem:[#allocation3 + $0x18] sm:$0xf]
    %v74 = vld [vmem:[#allocation3 + $0x1c] sm:$0xf]
    %v75 = vld [vmem:[#allocation3 + $0x20] sm:$0xf]
    %v76 = vld [vmem:[#allocation3 + $0x24] sm:$0xf]
    %v77 = vld [vmem:[#allocation3 + $0x28] sm:$0xf]
    %v78 = vld [vmem:[#allocation3 + $0x2c] sm:$0xf]
    %v79 = vld [vmem:[#allocation3 + $0x30] sm:$0xf]
    %v80 = vld [vmem:[#allocation3 + $0x34] sm:$0xf]
    %v81 = vld [vmem:[#allocation3 + $0x38] sm:$0xf]
    %v82 = vld [vmem:[#allocation3 + $0x3c] sm:$0xf]
    %v83 = vld [vmem:[#allocation3 + $0x40] sm:$0xf]
    %v84 = vld [vmem:[#allocation3 + $0x44] sm:$0xf]
    %v85 = vld [vmem:[#allocation3 + $0x48] sm:$0xf]
    %v86 = vld [vmem:[#allocation3 + $0x4c] sm:$0xf]
    %v87 = vld [vmem:[#allocation3 + $0x50] sm:$0xf]
    %v88 = vld [vmem:[#allocation3 + $0x54] sm:$0xf]
    %v89 = vld [vmem:[#allocation3 + $0x58] sm:$0xf]
    %v90 = vld [vmem:[#allocation3 + $0x5c] sm:$0xf]
    %v91 = vld [vmem:[#allocation3 + $0x60] sm:$0xf]
    %v92 = vld [vmem:[#allocation3 + $0x64] sm:$0xf]
    %v93 = vld [vmem:[#allocation3 + $0x68] sm:$0xf]
    %v94 = vld [vmem:[#allocation3 + $0x6c] sm:$0xf]
    %v95 = vld [vmem:[#allocation3 + $0x70] sm:$0xf]
    %v96 = vld [vmem:[#allocation3 + $0x74] sm:$0xf]
    %v97 = vld [vmem:[#allocation3 + $0x78] sm:$0xf]
    %v98 = vld [vmem:[#allocation3 + $0x7c] sm:$0xf]
    %v99 = vld [vmem:[#allocation3 + $0x80] sm:$0xf]
    %v100 = vld [vmem:[#allocation3 + $0x84] sm:$0xf]
    %v101 = vld [vmem:[#allocation3 + $0x88] sm:$0xf]
    %v102 = vld [vmem:[#allocation3 + $0x8c] sm:$0xf]
    %v103 = vld [vmem:[#allocation3 + $0x90] sm:$0xf]
    %v104 = vld [vmem:[#allocation3 + $0x94] sm:$0xf]
    %v105 = vld [vmem:[#allocation3 + $0x98] sm:$0xf]
    %v106 = vld [vmem:[#allocation3 + $0x9c] sm:$0xf]
    %v107 = vld [vmem:[#allocation3 + $0xa0] sm:$0xf]
    %v108 = vld [vmem:[#allocation3 + $0xa4] sm:$0xf]
    %v109 = vld [vmem:[#allocation3 + $0xa8] sm:$0xf]
    %v110 = vld [vmem:[#allocation3 + $0xac] sm:$0xf]
    %v111 = vld [vmem:[#allocation3 + $0xb0] sm:$0xf]
    %v112 = vld [vmem:[#allocation3 + $0xb4] sm:$0xf]
    %v113 = vld [vmem:[#allocation3 + $0xb8] sm:$0xf]
    %v114 = vld [vmem:[#allocation3 + $0xbc] sm:$0xf]
    %v115 = vld [vmem:[#allocation3 + $0xc0] sm:$0xf]
    %v116 = vld [vmem:[#allocation3 + $0xc4] sm:$0xf]
    %v117 = vld [vmem:[#allocation3 + $0xc8] sm:$0xf]
    %v118 = vld [vmem:[#allocation3 + $0xcc] sm:$0xf]
    %v119 = vld [vmem:[#allocation3 + $0xd0] sm:$0xf]
    %v120 = vld [vmem:[#allocation3 + $0xd4] sm:$0xf]
    %v121 = vld [vmem:[#allocation3 + $0xd8] sm:$0xf]
    %v122 = vld [vmem:[#allocation3 + $0xdc] sm:$0xf]
    %v123 = vld [vmem:[#allocation3 + $0xe0] sm:$0xf]
    %v124 = vld [vmem:[#allocation3 + $0xe4] sm:$0xf]
    %v125 = vld [vmem:[#allocation3 + $0xe8] sm:$0xf]
    %v126 = vld [vmem:[#allocation3 + $0xec] sm:$0xf]
    %v127 = vld [vmem:[#allocation3 + $0xf0] sm:$0xf]
    %v128 = vld [vmem:[#allocation3 + $0xf4] sm:$0xf]
    %v129 = vld [vmem:[#allocation3 + $0xf8] sm:$0xf]
    %v130 = vld [vmem:[#allocation3 + $0xfc] sm:$0xf]
    %v131 = vld [vmem:[#allocation3 + $0x100] sm:$0xf]
    %v132 = vld [vmem:[#allocation3 + $0x104] sm:$0xf]
    %v133 = vld [vmem:[#allocation3 + $0x108] sm:$0xf]
    %v134 = vld [vmem:[#allocation3 + $0x10c] sm:$0xf]
    %v135 = vld [vmem:[#allocation3 + $0x110] sm:$0xf]
    %v136 = vld [vmem:[#allocation3 + $0x114] sm:$0xf]
    %v137 = vld [vmem:[#allocation3 + $0x118] sm:$0xf]
    %v138 = vld [vmem:[#allocation3 + $0x11c] sm:$0xf]
    %v139 = vld [vmem:[#allocation3 + $0x120] sm:$0xf]
    %v140 = vld [vmem:[#allocation3 + $0x124] sm:$0xf]
    %v141 = vld [vmem:[#allocation3 + $0x128] sm:$0xf]
    %v142 = vld [vmem:[#allocation3 + $0x12c] sm:$0xf]
    %v143 = vld [vmem:[#allocation3 + $0x130] sm:$0xf]
    %v144 = vld [vmem:[#allocation3 + $0x134] sm:$0xf]
    %v145 = vld [vmem:[#allocation3 + $0x138] sm:$0xf]
    %v146 = vld [vmem:[#allocation3 + $0x13c] sm:$0xf]
    %v147 = vld [vmem:[%s1] sm:$0xff]
    %v148 = vld [vmem:[%s1 + $0x8] sm:$0xff]
    %v155 = vunpack.c.l.b16 %v61
    %v156 = vunpack.c.h.b16 %v61
    %v157 = vunpack.c.l.b16 %v62
    %v158 = vunpack.c.h.b16 %v62
    %v159 = vunpack.c.l.b16 %v63
    %v160 = vunpack.c.l.b16 %v64
    %v161 = vunpack.c.h.b16 %v64
    %v162 = vunpack.c.l.b16 %v65
    %v163 = vunpack.c.h.b16 %v65
    %v164 = vunpack.c.l.b16 %v66
    %v165 = vpack.c.b16 %v160, %v155
    %v166 = vpack.c.b16 %v161, %v156
    %v167 = vpack.c.b16 %v162, %v157
    %v168 = vpack.c.b16 %v163, %v158
    %v169 = vpack.c.b16 %v164, %v159
    %v255 = vunpack.c.l.b16 %v67
    %v256 = vunpack.c.l.b16 %v68
    %v257 = vunpack.c.l.b16 %v69
    %v258 = vunpack.c.l.b16 %v70
    %v259 = vunpack.c.l.b16 %v71
    %v260 = vunpack.c.l.b16 %v72
    %v261 = vunpack.c.l.b16 %v73
    %v262 = vunpack.c.l.b16 %v74
    %v263 = vunpack.c.l.b16 %v75
    %v264 = vunpack.c.l.b16 %v76
    %v265 = vunpack.c.l.b16 %v77
    %v266 = vunpack.c.l.b16 %v78
    %v267 = vunpack.c.l.b16 %v79
    %v268 = vunpack.c.l.b16 %v80
    %v269 = vunpack.c.l.b16 %v81
    %v270 = vunpack.c.l.b16 %v82
    %v271 = vunpack.c.l.b16 %v83
    %v272 = vunpack.c.l.b16 %v84
    %v273 = vunpack.c.l.b16 %v85
    %v274 = vunpack.c.l.b16 %v86
    %v275 = vunpack.c.l.b16 %v87
    %v276 = vunpack.c.l.b16 %v88
    %v277 = vunpack.c.l.b16 %v89
    %v278 = vunpack.c.l.b16 %v90
    %v279 = vunpack.c.l.b16 %v91
    %v280 = vunpack.c.l.b16 %v92
    %v281 = vunpack.c.l.b16 %v93
    %v282 = vunpack.c.l.b16 %v94
    %v283 = vunpack.c.l.b16 %v95
    %v284 = vunpack.c.l.b16 %v96
    %v285 = vunpack.c.l.b16 %v97
    %v286 = vunpack.c.l.b16 %v98
    %v287 = vunpack.c.l.b16 %v99
    %v288 = vunpack.c.l.b16 %v100
    %v289 = vunpack.c.l.b16 %v101
    %v290 = vunpack.c.l.b16 %v102
    %v291 = vunpack.c.l.b16 %v103
    %v292 = vunpack.c.l.b16 %v104
    %v293 = vunpack.c.l.b16 %v105
    %v294 = vunpack.c.l.b16 %v106
    %v295 = vunpack.c.l.b16 %v107
    %v296 = vunpack.c.l.b16 %v108
    %v297 = vunpack.c.l.b16 %v109
    %v298 = vunpack.c.l.b16 %v110
    %v299 = vunpack.c.l.b16 %v111
    %v300 = vunpack.c.l.b16 %v112
    %v301 = vunpack.c.l.b16 %v113
    %v302 = vunpack.c.l.b16 %v114
    %v303 = vunpack.c.l.b16 %v115
    %v304 = vunpack.c.l.b16 %v116
    %v305 = vunpack.c.l.b16 %v117
    %v306 = vunpack.c.l.b16 %v118
    %v307 = vunpack.c.l.b16 %v119
    %v308 = vunpack.c.l.b16 %v120
    %v309 = vunpack.c.l.b16 %v121
    %v310 = vunpack.c.l.b16 %v122
    %v311 = vunpack.c.l.b16 %v123
    %v312 = vunpack.c.l.b16 %v124
    %v313 = vunpack.c.l.b16 %v125
    %v314 = vunpack.c.l.b16 %v126
    %v315 = vunpack.c.l.b16 %v127
    %v316 = vunpack.c.l.b16 %v128
    %v317 = vunpack.c.l.b16 %v129
    %v318 = vunpack.c.l.b16 %v130
    %v319 = vunpack.c.l.b16 %v131
    %v320 = vunpack.c.l.b16 %v132
    %v321 = vunpack.c.l.b16 %v133
    %v322 = vunpack.c.l.b16 %v134
    %v323 = vunpack.c.l.b16 %v135
    %v324 = vunpack.c.l.b16 %v136
    %v325 = vunpack.c.l.b16 %v137
    %v326 = vunpack.c.l.b16 %v138
    %v327 = vunpack.c.l.b16 %v139
    %v328 = vunpack.c.l.b16 %v140
    %v329 = vunpack.c.l.b16 %v141
    %v330 = vunpack.c.l.b16 %v142
    %v331 = vunpack.c.l.b16 %v143
    %v332 = vunpack.c.l.b16 %v144
    %v333 = vunpack.c.l.b16 %v145
    %v334 = vunpack.c.l.b16 %v146
    %v335 = vpack.c.b16 %v256, %v255
    %v336 = vpack.c.b16 %v258, %v257
    %v337 = vpack.c.b16 %v260, %v259
    %v338 = vpack.c.b16 %v262, %v261
    %v339 = vpack.c.b16 %v264, %v263
    %v340 = vpack.c.b16 %v266, %v265
    %v341 = vpack.c.b16 %v268, %v267
    %v342 = vpack.c.b16 %v270, %v269
    %v343 = vpack.c.b16 %v272, %v271
    %v344 = vpack.c.b16 %v274, %v273
    %v345 = vpack.c.b16 %v276, %v275
    %v346 = vpack.c.b16 %v278, %v277
    %v347 = vpack.c.b16 %v280, %v279
    %v348 = vpack.c.b16 %v282, %v281
    %v349 = vpack.c.b16 %v284, %v283
    %v350 = vpack.c.b16 %v286, %v285
    %v351 = vpack.c.b16 %v288, %v287
    %v352 = vpack.c.b16 %v290, %v289
    %v353 = vpack.c.b16 %v292, %v291
    %v354 = vpack.c.b16 %v294, %v293
    %v355 = vpack.c.b16 %v296, %v295
    %v356 = vpack.c.b16 %v298, %v297
    %v357 = vpack.c.b16 %v300, %v299
    %v358 = vpack.c.b16 %v302, %v301
    %v359 = vpack.c.b16 %v304, %v303
    %v360 = vpack.c.b16 %v306, %v305
    %v361 = vpack.c.b16 %v308, %v307
    %v362 = vpack.c.b16 %v310, %v309
    %v363 = vpack.c.b16 %v312, %v311
    %v364 = vpack.c.b16 %v314, %v313
    %v365 = vpack.c.b16 %v316, %v315
    %v366 = vpack.c.b16 %v318, %v317
    %v367 = vpack.c.b16 %v320, %v319
    %v368 = vpack.c.b16 %v322, %v321
    %v369 = vpack.c.b16 %v324, %v323
    %v370 = vpack.c.b16 %v326, %v325
    %v371 = vpack.c.b16 %v328, %v327
    %v372 = vpack.c.b16 %v330, %v329
    %v373 = vpack.c.b16 %v332, %v331
    %v374 = vpack.c.b16 %v334, %v333
    %415 = vmatprep.subr.bf16.mxu0 0
    %416 = vmatpush1.bf16.msra.mxu0 %v335
    %417 = vmatprep.subr.bf16.mxu0 0
    %418 = vmatpush1.bf16.msra.mxu0 %v336
    %419 = vmatprep.subr.bf16.mxu0 0
    %420 = vmatpush1.bf16.msra.mxu0 %v337
    %421 = vmatprep.subr.bf16.mxu0 0
    %422 = vmatpush1.bf16.msra.mxu0 %v338
    %423 = vmatprep.subr.bf16.mxu0 0
    %424 = vmatpush1.bf16.msra.mxu0 %v339
    %425 = vmatprep.subr.bf16.mxu0 0
    %426 = vmatpush1.bf16.msra.mxu0 %v340
    %427 = vmatprep.subr.bf16.mxu0 0
    %428 = vmatpush1.bf16.msra.mxu0 %v341
    %429 = vmatprep.subr.bf16.mxu0 0
    %430 = vmatpush1.bf16.msra.mxu0 %v342
    %431 = vmatprep.subr.bf16.mxu0 0
    %432 = vmatpush1.bf16.msra.mxu0 %v343
    %433 = vmatprep.subr.bf16.mxu0 0
    %434 = vmatpush1.bf16.msra.mxu0 %v344
    %435 = vmatprep.subr.bf16.mxu0 0
    %436 = vmatpush1.bf16.msra.mxu0 %v345
    %437 = vmatprep.subr.bf16.mxu0 0
    %438 = vmatpush1.bf16.msra.mxu0 %v346
    %439 = vmatprep.subr.bf16.mxu0 0
    %440 = vmatpush1.bf16.msra.mxu0 %v347
    %441 = vmatprep.subr.bf16.mxu0 0
    %442 = vmatpush1.bf16.msra.mxu0 %v348
    %443 = vmatprep.subr.bf16.mxu0 0
    %444 = vmatpush1.bf16.msra.mxu0 %v349
    %445 = vmatprep.subr.bf16.mxu0 0
    %446 = vmatpush1.bf16.msra.mxu0 %v350
    %447 = vmatprep.mubr.bf16.mxu0 %v166
    %448 = vmatmul.mubr.bf16.gmra.mrb[0].mxu0 %v165
    %v449 = vpop.f32.mrb[0].mxu0
    %v450 = vadd.f32 %v147, %v449
    %v451 = vpop.f32.mrb[0].mxu0
    %v452 = vpop.f32.mrb[0].mxu0
    %v453 = vadd.f32 %v148, %v452
    %v454 = vpop.f32.mrb[0].mxu0
    %455 = vdwg.mxu0
    %456 = vmatprep.subr.bf16.mxu0 0
    %457 = vmatpush1.bf16.msra.mxu0 %v351
    %458 = vmatprep.subr.bf16.mxu0 0
    %459 = vmatpush1.bf16.msra.mxu0 %v352
    %460 = vmatprep.subr.bf16.mxu0 0
    %461 = vmatpush1.bf16.msra.mxu0 %v353
    %462 = vmatprep.subr.bf16.mxu0 0
    %463 = vmatpush1.bf16.msra.mxu0 %v354
    %464 = vmatprep.subr.bf16.mxu0 0
    %465 = vmatpush1.bf16.msra.mxu0 %v355
    %466 = vmatprep.subr.bf16.mxu0 0
    %467 = vmatpush1.bf16.msra.mxu0 %v356
    %468 = vmatprep.subr.bf16.mxu0 0
    %469 = vmatpush1.bf16.msra.mxu0 %v357
    %470 = vmatprep.subr.bf16.mxu0 0
    %471 = vmatpush1.bf16.msra.mxu0 %v358
    %472 = vmatprep.subr.bf16.mxu0 0
    %473 = vmatpush1.bf16.msra.mxu0 %v359
    %474 = vmatprep.subr.bf16.mxu0 0
    %475 = vmatpush1.bf16.msra.mxu0 %v360
    %476 = vmatprep.subr.bf16.mxu0 0
    %477 = vmatpush1.bf16.msra.mxu0 %v361
    %478 = vmatprep.subr.bf16.mxu0 0
    %479 = vmatpush1.bf16.msra.mxu0 %v362
    %480 = vmatprep.subr.bf16.mxu0 0
    %481 = vmatpush1.bf16.msra.mxu0 %v363
    %482 = vmatprep.subr.bf16.mxu0 0
    %483 = vmatpush1.bf16.msra.mxu0 %v364
    %484 = vmatprep.subr.bf16.mxu0 0
    %485 = vmatpush1.bf16.msra.mxu0 %v365
    %486 = vmatprep.subr.bf16.mxu0 0
    %487 = vmatpush1.bf16.msra.mxu0 %v366
    %488 = vmatprep.mubr.bf16.mxu0 %v168
    %489 = vmatmul.mubr.bf16.gmra.mrb[0].mxu0 %v167
    %v490 = vpop.f32.mrb[0].mxu0
    %v491 = vadd.f32 %v450, %v490
    %v492 = vpop.f32.mrb[0].mxu0
    %v493 = vpop.f32.mrb[0].mxu0
    %v494 = vadd.f32 %v453, %v493
    %v495 = vpop.f32.mrb[0].mxu0
    %496 = vdwg.mxu0
    %497 = vmatprep.subr.bf16.mxu0 0
    %498 = vmatpush1.bf16.msra.mxu0 %v367
    %499 = vmatprep.subr.bf16.mxu0 0
    %500 = vmatpush1.bf16.msra.mxu0 %v368
    %501 = vmatprep.subr.bf16.mxu0 0
    %502 = vmatpush1.bf16.msra.mxu0 %v369
    %503 = vmatprep.subr.bf16.mxu0 0
    %504 = vmatpush1.bf16.msra.mxu0 %v370
    %505 = vmatprep.subr.bf16.mxu0 0
    %506 = vmatpush1.bf16.msra.mxu0 %v371
    %507 = vmatprep.subr.bf16.mxu0 0
    %508 = vmatpush1.bf16.msra.mxu0 %v372
    %509 = vmatprep.subr.bf16.mxu0 0
    %510 = vmatpush1.bf16.msra.mxu0 %v373
    %511 = vmatprep.subr.bf16.mxu0 0
    %512 = vmatpush1.bf16.msra.mxu0 %v374
    %513 = vmatprep.subr.bf16.mxu0 0
    %514 = vmatpush1.bf16.msra.mxu0 0
    %515 = vmatprep.subr.bf16.mxu0 0
    %516 = vmatpush1.bf16.msra.mxu0 0
    %517 = vmatprep.subr.bf16.mxu0 0
    %518 = vmatpush1.bf16.msra.mxu0 0
    %519 = vmatprep.subr.bf16.mxu0 0
    %520 = vmatpush1.bf16.msra.mxu0 0
    %521 = vmatprep.subr.bf16.mxu0 0
    %522 = vmatpush1.bf16.msra.mxu0 0
    %523 = vmatprep.subr.bf16.mxu0 0
    %524 = vmatpush1.bf16.msra.mxu0 0
    %525 = vmatprep.subr.bf16.mxu0 0
    %526 = vmatpush1.bf16.msra.mxu0 0
    %527 = vmatprep.subr.bf16.mxu0 0
    %528 = vmatpush1.bf16.msra.mxu0 0
    %529 = vmatprep.mubr.bf16.mxu0 0
    %530 = vmatmul.mubr.bf16.gmra.mrb[0].mxu0 %v169
    %v531 = vpop.f32.mrb[0].mxu0
    %v532 = vadd.f32 %v491, %v531
    %v533 = vpop.f32.mrb[0].mxu0
    %v534 = vpop.f32.mrb[0].mxu0
    %v535 = vadd.f32 %v494, %v534
    %v536 = vpop.f32.mrb[0].mxu0
    %537 = vdwg.mxu0
    %v538 = vld [vmem:[%s2] sm:$0xff]
    %v539 = vld [vmem:[%s2 + $0x8] sm:$0xff]
    %v540 = vld [vmem:[%s6] sm:$0xff]
    %v541 = vld [vmem:[%s6 + $0x8] sm:$0xff]
    %v542 = vld [vmem:[%s6 + $0x10] sm:$0xff]
    %v543 = vld [vmem:[%s6 + $0x18] sm:$0xff]
    %v544 = vld [vmem:[%s6 + $0x20] sm:$0xff]
    %v545 = vld [vmem:[%s6 + $0x28] sm:$0xff]
    %v546 = vld [vmem:[%s6 + $0x30] sm:$0xff]
    %v547 = vld [vmem:[%s6 + $0x38] sm:$0xff]
    %v548 = vld [vmem:[%s6 + $0x40] sm:$0xff]
    %v549 = vld [vmem:[%s6 + $0x48] sm:$0xff]
    %v550 = vld [vmem:[%s6 + $0x50] sm:$0xff]
    %v551 = vld [vmem:[%s6 + $0x58] sm:$0xff]
    %v552 = vld [vmem:[%s6 + $0x60] sm:$0xff]
    %v553 = vld [vmem:[%s6 + $0x68] sm:$0xff]
    %v554 = vld [vmem:[%s6 + $0x70] sm:$0xff]
    %v555 = vld [vmem:[%s6 + $0x78] sm:$0xff]
    %v556 = vld [vmem:[%s6 + $0x80] sm:$0xff]
    %v557 = vld [vmem:[%s6 + $0x88] sm:$0xff]
    %v558 = vld [vmem:[%s6 + $0x90] sm:$0xff]
    %v559 = vld [vmem:[%s6 + $0x98] sm:$0xff]
    %v560 = vld [vmem:[%s6 + $0xa0] sm:$0xff]
    %v561 = vld [vmem:[%s6 + $0xa8] sm:$0xff]
    %v562 = vld [vmem:[%s6 + $0xb0] sm:$0xff]
    %v563 = vld [vmem:[%s6 + $0xb8] sm:$0xff]
    %v564 = vld [vmem:[%s6 + $0xc0] sm:$0xff]
    %v565 = vld [vmem:[%s6 + $0xc8] sm:$0xff]
    %v566 = vld [vmem:[%s6 + $0xd0] sm:$0xff]
    %v567 = vld [vmem:[%s6 + $0xd8] sm:$0xff]
    %v568 = vld [vmem:[%s6 + $0xe0] sm:$0xff]
    %v569 = vld [vmem:[%s6 + $0xe8] sm:$0xff]
    %v570 = vld [vmem:[%s6 + $0xf0] sm:$0xff]
    %v571 = vld [vmem:[%s6 + $0xf8] sm:$0xff]
    %v572 = vld [vmem:[%s6 + $0x100] sm:$0xff]
    %v573 = vld [vmem:[%s6 + $0x108] sm:$0xff]
    %v574 = vld [vmem:[%s6 + $0x110] sm:$0xff]
    %v575 = vld [vmem:[%s6 + $0x118] sm:$0xff]
    %v576 = vld [vmem:[%s6 + $0x120] sm:$0xff]
    %v577 = vld [vmem:[%s6 + $0x128] sm:$0xff]
    %v578 = vld [vmem:[%s6 + $0x130] sm:$0xff]
    %v579 = vld [vmem:[%s6 + $0x138] sm:$0xff]
    %v580 = vld [vmem:[%s6 + $0x140] sm:$0xff]
    %v581 = vld [vmem:[%s6 + $0x148] sm:$0xff]
    %v582 = vld [vmem:[%s6 + $0x150] sm:$0xff]
    %v583 = vld [vmem:[%s6 + $0x158] sm:$0xff]
    %v584 = vld [vmem:[%s6 + $0x160] sm:$0xff]
    %v585 = vld [vmem:[%s6 + $0x168] sm:$0xff]
    %v586 = vld [vmem:[%s6 + $0x170] sm:$0xff]
    %v587 = vld [vmem:[%s6 + $0x178] sm:$0xff]
    %v588 = vld [vmem:[%s6 + $0x180] sm:$0xff]
    %v589 = vld [vmem:[%s6 + $0x188] sm:$0xff]
    %v590 = vld [vmem:[%s6 + $0x190] sm:$0xff]
    %v591 = vld [vmem:[%s6 + $0x198] sm:$0xff]
    %v592 = vld [vmem:[%s6 + $0x1a0] sm:$0xff]
    %v593 = vld [vmem:[%s6 + $0x1a8] sm:$0xff]
    %v594 = vld [vmem:[%s6 + $0x1b0] sm:$0xff]
    %v595 = vld [vmem:[%s6 + $0x1b8] sm:$0xff]
    %v596 = vld [vmem:[%s6 + $0x1c0] sm:$0xff]
    %v597 = vld [vmem:[%s6 + $0x1c8] sm:$0xff]
    %v598 = vld [vmem:[%s6 + $0x1d0] sm:$0xff]
    %v599 = vld [vmem:[%s6 + $0x1d8] sm:$0xff]
    %v600 = vld [vmem:[%s6 + $0x1e0] sm:$0xff]
    %v601 = vld [vmem:[%s6 + $0x1e8] sm:$0xff]
    %v602 = vld [vmem:[%s6 + $0x1f0] sm:$0xff]
    %v603 = vld [vmem:[%s6 + $0x1f8] sm:$0xff]
    %v604 = vld [vmem:[#allocation5] sm:$0xf]
    %v605 = vld [vmem:[#allocation5 + $0x4] sm:$0xf]
    %v606 = vld [vmem:[#allocation5 + $0x8] sm:$0xf]
    %v607 = vld [vmem:[#allocation5 + $0xc] sm:$0xf]
    %v608 = vld [vmem:[#allocation5 + $0x10] sm:$0xf]
    %v609 = vld [vmem:[#allocation5 + $0x14] sm:$0xf]
    %v610 = vld [vmem:[#allocation5 + $0x18] sm:$0xf]
    %v611 = vld [vmem:[#allocation5 + $0x1c] sm:$0xf]
    %v612 = vld [vmem:[#allocation5 + $0x20] sm:$0xf]
    %v613 = vld [vmem:[#allocation5 + $0x24] sm:$0xf]
    %v614 = vld [vmem:[#allocation5 + $0x28] sm:$0xf]
    %v615 = vld [vmem:[#allocation5 + $0x2c] sm:$0xf]
    %v616 = vld [vmem:[#allocation5 + $0x30] sm:$0xf]
    %v617 = vld [vmem:[#allocation5 + $0x34] sm:$0xf]
    %v618 = vld [vmem:[#allocation5 + $0x38] sm:$0xf]
    %v619 = vld [vmem:[#allocation5 + $0x3c] sm:$0xf]
    %v620 = vld [vmem:[#allocation5 + $0x40] sm:$0xf]
    %v621 = vld [vmem:[#allocation5 + $0x44] sm:$0xf]
    %v622 = vld [vmem:[#allocation5 + $0x48] sm:$0xf]
    %v623 = vld [vmem:[#allocation5 + $0x4c] sm:$0xf]
    %v624 = vld [vmem:[#allocation5 + $0x50] sm:$0xf]
    %v625 = vld [vmem:[#allocation5 + $0x54] sm:$0xf]
    %v626 = vld [vmem:[#allocation5 + $0x58] sm:$0xf]
    %v627 = vld [vmem:[#allocation5 + $0x5c] sm:$0xf]
    %v628 = vld [vmem:[#allocation5 + $0x60] sm:$0xf]
    %v629 = vld [vmem:[#allocation5 + $0x64] sm:$0xf]
    %v630 = vld [vmem:[#allocation5 + $0x68] sm:$0xf]
    %v631 = vld [vmem:[#allocation5 + $0x6c] sm:$0xf]
    %v632 = vld [vmem:[#allocation5 + $0x70] sm:$0xf]
    %v633 = vld [vmem:[#allocation5 + $0x74] sm:$0xf]
    %v634 = vld [vmem:[#allocation5 + $0x78] sm:$0xf]
    %v635 = vld [vmem:[#allocation5 + $0x7c] sm:$0xf]
    %v636 = vld [vmem:[#allocation5 + $0x80] sm:$0xf]
    %v637 = vld [vmem:[#allocation5 + $0x84] sm:$0xf]
    %v638 = vld [vmem:[#allocation5 + $0x88] sm:$0xf]
    %v639 = vld [vmem:[#allocation5 + $0x8c] sm:$0xf]
    %v640 = vld [vmem:[#allocation5 + $0x90] sm:$0xf]
    %v641 = vld [vmem:[#allocation5 + $0x94] sm:$0xf]
    %v642 = vld [vmem:[#allocation5 + $0x98] sm:$0xf]
    %v643 = vld [vmem:[#allocation5 + $0x9c] sm:$0xf]
    %v644 = vld [vmem:[#allocation5 + $0xa0] sm:$0xf]
    %v645 = vld [vmem:[#allocation5 + $0xa4] sm:$0xf]
    %v646 = vld [vmem:[#allocation5 + $0xa8] sm:$0xf]
    %v647 = vld [vmem:[#allocation5 + $0xac] sm:$0xf]
    %v648 = vld [vmem:[#allocation5 + $0xb0] sm:$0xf]
    %v649 = vld [vmem:[#allocation5 + $0xb4] sm:$0xf]
    %v650 = vld [vmem:[#allocation5 + $0xb8] sm:$0xf]
    %v651 = vld [vmem:[#allocation5 + $0xbc] sm:$0xf]
    %v652 = vld [vmem:[#allocation5 + $0xc0] sm:$0xf]
    %v653 = vld [vmem:[#allocation5 + $0xc4] sm:$0xf]
    %v654 = vld [vmem:[#allocation5 + $0xc8] sm:$0xf]
    %v655 = vld [vmem:[#allocation5 + $0xcc] sm:$0xf]
    %v656 = vld [vmem:[#allocation5 + $0xd0] sm:$0xf]
    %v657 = vld [vmem:[#allocation5 + $0xd4] sm:$0xf]
    %v658 = vld [vmem:[#allocation5 + $0xd8] sm:$0xf]
    %v659 = vld [vmem:[#allocation5 + $0xdc] sm:$0xf]
    %v660 = vld [vmem:[#allocation5 + $0xe0] sm:$0xf]
    %v661 = vld [vmem:[#allocation5 + $0xe4] sm:$0xf]
    %v662 = vld [vmem:[#allocation5 + $0xe8] sm:$0xf]
    %v663 = vld [vmem:[#allocation5 + $0xec] sm:$0xf]
    %v664 = vld [vmem:[#allocation5 + $0xf0] sm:$0xf]
    %v665 = vld [vmem:[#allocation5 + $0xf4] sm:$0xf]
    %v666 = vld [vmem:[#allocation5 + $0xf8] sm:$0xf]
    %v667 = vld [vmem:[#allocation5 + $0xfc] sm:$0xf]
    %v668 = vld [vmem:[%s3] sm:$0x1]
    %v669 = vld [vmem:[%s3 + $0x1] sm:$0x1]
    %670 = vadd.xlane.f32.xlu0 %v532
    %v671 = vpop.xlane.xlu0 %670
    %672 = vadd.xlane.f32.xlu0 %v535
    %v673 = vpop.xlane.xlu0 %672
    %v674 = vrcp.pop 128.0
    %v675 = vmul.f32 %v671, %v674
    %v676 = vmul.f32 %v673, %v674
    %v677 = vsub.f32 %v532, %v675
    %v678 = vsub.f32 %v535, %v676
    %v679 = vmul.f32 %v677, %v677
    %v680 = vmul.f32 %v678, %v678
    %681 = vadd.xlane.f32.xlu0 %v679
    %v682 = vpop.xlane.xlu0 %681
    %683 = vadd.xlane.f32.xlu0 %v680
    %v684 = vpop.xlane.xlu0 %683
    %v685 = vmul.f32 %v682, %v674
    %v686 = vmul.f32 %v684, %v674
    %v687 = vadd.f32 %v685, 1e-06
    %v688 = vadd.f32 %v686, 1e-06
    %v689 = vrsqrt.pop %v687
    %v690 = vrsqrt.pop %v688
    %v691 = vmul.f32 %v677, %v689
    %v692 = vmul.f32 %v678, %v690
    %v693 = vlaneseq
    %v694 = vshrl.u32 %v693, 7
    %v695 = vsub.s32 0, %v694
    %v696 = vrot.slane %v668, %v695
    %v697 = vmul.f32 %v691, %v696
    %v698 = vmul.f32 %v692, %v696
    %v699 = vlaneseq
    %v700 = vshrl.u32 %v699, 7
    %v701 = vsub.s32 0, %v700
    %v702 = vrot.slane %v669, %v701
    %v703 = vadd.f32 %v697, %v702
    %v704 = vadd.f32 %v698, %v702
    %v705 = vpack.c.bf16 %v704, %v703
    %v738 = vunpack.c.l.b16 %v540
    %v739 = vunpack.c.h.b16 %v540
    %v740 = vunpack.c.l.b16 %v541
    %v741 = vunpack.c.l.b16 %v544
    %v742 = vunpack.c.h.b16 %v544
    %v743 = vunpack.c.l.b16 %v545
    %v744 = vunpack.c.l.b16 %v548
    %v745 = vunpack.c.h.b16 %v548
    %v746 = vunpack.c.l.b16 %v549
    %v747 = vunpack.c.l.b16 %v552
    %v748 = vunpack.c.h.b16 %v552
    %v749 = vunpack.c.l.b16 %v553
    %v750 = vunpack.c.l.b16 %v556
    %v751 = vunpack.c.h.b16 %v556
    %v752 = vunpack.c.l.b16 %v557
    %v753 = vunpack.c.l.b16 %v560
    %v754 = vunpack.c.h.b16 %v560
    %v755 = vunpack.c.l.b16 %v561
    %v756 = vunpack.c.l.b16 %v564
    %v757 = vunpack.c.h.b16 %v564
    %v758 = vunpack.c.l.b16 %v565
    %v759 = vunpack.c.l.b16 %v568
    %v760 = vunpack.c.h.b16 %v568
    %v761 = vunpack.c.l.b16 %v569
    %v762 = vunpack.c.l.b16 %v572
    %v763 = vunpack.c.h.b16 %v572
    %v764 = vunpack.c.l.b16 %v573
    %v765 = vunpack.c.l.b16 %v576
    %v766 = vunpack.c.h.b16 %v576
    %v767 = vunpack.c.l.b16 %v577
    %v768 = vunpack.c.l.b16 %v580
    %v769 = vunpack.c.h.b16 %v580
    %v770 = vunpack.c.l.b16 %v581
    %v771 = vunpack.c.l.b16 %v584
    %v772 = vunpack.c.h.b16 %v584
    %v773 = vunpack.c.l.b16 %v585
    %v774 = vunpack.c.l.b16 %v588
    %v775 = vunpack.c.h.b16 %v588
    %v776 = vunpack.c.l.b16 %v589
    %v777 = vunpack.c.l.b16 %v592
    %v778 = vunpack.c.h.b16 %v592
    %v779 = vunpack.c.l.b16 %v593
    %v780 = vunpack.c.l.b16 %v596
    %v781 = vunpack.c.h.b16 %v596
    %v782 = vunpack.c.l.b16 %v597
    %v783 = vunpack.c.l.b16 %v600
    %v784 = vunpack.c.h.b16 %v600
    %v785 = vunpack.c.l.b16 %v601
    %v786 = vpack.c.b16 %v741, %v738
    %v787 = vpack.c.b16 %v742, %v739
    %v788 = vpack.c.b16 %v743, %v740
    %v789 = vpack.c.b16 %v747, %v744
    %v790 = vpack.c.b16 %v748, %v745
    %v791 = vpack.c.b16 %v749, %v746
    %v792 = vpack.c.b16 %v753, %v750
    %v793 = vpack.c.b16 %v754, %v751
    %v794 = vpack.c.b16 %v755, %v752
    %v795 = vpack.c.b16 %v759, %v756
    %v796 = vpack.c.b16 %v760, %v757
    %v797 = vpack.c.b16 %v761, %v758
    %v798 = vpack.c.b16 %v765, %v762
    %v799 = vpack.c.b16 %v766, %v763
    %v800 = vpack.c.b16 %v767, %v764
    %v801 = vpack.c.b16 %v771, %v768
    %v802 = vpack.c.b16 %v772, %v769
    %v803 = vpack.c.b16 %v773, %v770
    %v804 = vpack.c.b16 %v777, %v774
    %v805 = vpack.c.b16 %v778, %v775
    %v806 = vpack.c.b16 %v779, %v776
    %v807 = vpack.c.b16 %v783, %v780
    %v808 = vpack.c.b16 %v784, %v781
    %v809 = vpack.c.b16 %v785, %v782
    %834 = vmatprep.subr.bf16.mxu0 %v787
    %835 = vmatpush1.bf16.msra.mxu0 %v786
    %836 = vmatprep.subr.bf16.mxu0 %v790
    %837 = vmatpush1.bf16.msra.mxu0 %v789
    %838 = vmatprep.subr.bf16.mxu0 %v793
    %839 = vmatpush1.bf16.msra.mxu0 %v792
    %840 = vmatprep.subr.bf16.mxu0 %v796
    %841 = vmatpush1.bf16.msra.mxu0 %v795
    %842 = vmatprep.subr.bf16.mxu0 %v799
    %843 = vmatpush1.bf16.msra.mxu0 %v798
    %844 = vmatprep.subr.bf16.mxu0 %v802
    %845 = vmatpush1.bf16.msra.mxu0 %v801
    %846 = vmatprep.subr.bf16.mxu0 %v805
    %847 = vmatpush1.bf16.msra.mxu0 %v804
    %848 = vmatprep.subr.bf16.mxu0 %v808
    %849 = vmatpush1.bf16.msra.mxu0 %v807
    %850 = vmatprep.subr.bf16.mxu0 0
    %851 = vmatpush1.bf16.msra.mxu0 0
    %852 = vmatprep.subr.bf16.mxu0 0
    %853 = vmatpush1.bf16.msra.mxu0 0
    %854 = vmatprep.subr.bf16.mxu0 0
    %855 = vmatpush1.bf16.msra.mxu0 0
    %856 = vmatprep.subr.bf16.mxu0 0
    %857 = vmatpush1.bf16.msra.mxu0 0
    %858 = vmatprep.subr.bf16.mxu0 0
    %859 = vmatpush1.bf16.msra.mxu0 0
    %860 = vmatprep.subr.bf16.mxu0 0
    %861 = vmatpush1.bf16.msra.mxu0 0
    %862 = vmatprep.subr.bf16.mxu0 0
    %863 = vmatpush1.bf16.msra.mxu0 0
    %864 = vmatprep.subr.bf16.mxu0 0
    %865 = vmatpush1.bf16.msra.mxu0 0
    %866 = vmatprep.mubr.bf16.mxu0 0
    %867 = vmatmul.mubr.bf16.gmra.mrb[0].mxu0 %v705
    %v868 = vpop.f32.mrb[0].mxu0
    %v869 = vadd.f32 0.0, %v868
    %v870 = vpop.f32.mrb[0].mxu0
    %v871 = vadd.f32 0.0, %v870
    %v872 = vpop.f32.mrb[0].mxu0
    %v873 = vadd.f32 0.0, %v872
    %v874 = vpop.f32.mrb[0].mxu0
    %v875 = vadd.f32 0.0, %v874
    %876 = vdwg.mxu0
    %877 = vmatprep.subr.bf16.mxu0 0
    %878 = vmatpush1.bf16.msra.mxu0 %v788
    %879 = vmatprep.subr.bf16.mxu0 0
    %880 = vmatpush1.bf16.msra.mxu0 %v791
    %881 = vmatprep.subr.bf16.mxu0 0
    %882 = vmatpush1.bf16.msra.mxu0 %v794
    %883 = vmatprep.subr.bf16.mxu0 0
    %884 = vmatpush1.bf16.msra.mxu0 %v797
    %885 = vmatprep.subr.bf16.mxu0 0
    %886 = vmatpush1.bf16.msra.mxu0 %v800
    %887 = vmatprep.subr.bf16.mxu0 0
    %888 = vmatpush1.bf16.msra.mxu0 %v803
    %889 = vmatprep.subr.bf16.mxu0 0
    %890 = vmatpush1.bf16.msra.mxu0 %v806
    %891 = vmatprep.subr.bf16.mxu0 0
    %892 = vmatpush1.bf16.msra.mxu0 %v809
    %893 = vmatprep.subr.bf16.mxu0 0
    %894 = vmatpush1.bf16.msra.mxu0 0
    %895 = vmatprep.subr.bf16.mxu0 0
    %896 = vmatpush1.bf16.msra.mxu0 0
    %897 = vmatprep.subr.bf16.mxu0 0
    %898 = vmatpush1.bf16.msra.mxu0 0
    %899 = vmatprep.subr.bf16.mxu0 0
    %900 = vmatpush1.bf16.msra.mxu0 0
    %901 = vmatprep.subr.bf16.mxu0 0
    %902 = vmatpush1.bf16.msra.mxu0 0
    %903 = vmatprep.subr.bf16.mxu0 0
    %904 = vmatpush1.bf16.msra.mxu0 0
    %905 = vmatprep.subr.bf16.mxu0 0
    %906 = vmatpush1.bf16.msra.mxu0 0
    %907 = vmatprep.subr.bf16.mxu0 0
    %908 = vmatpush1.bf16.msra.mxu0 0
    %909 = vmatprep.mubr.bf16.mxu0 0
    %910 = vmatmul.mubr.bf16.gmra.mrb[0].mxu0 %v705
    %v911 = vpop.f32.mrb[0].mxu0
    %v912 = vadd.f32 0.0, %v911
    %v913 = vpop.f32.mrb[0].mxu0
    %v914 = vpop.f32.mrb[0].mxu0
    %v915 = vadd.f32 0.0, %v914
    %v916 = vpop.f32.mrb[0].mxu0
    %917 = vdwg.mxu0
    %v918 = vld [vmem:[%s3 + $0x2] sm:$0x1]
    %v919 = vlaneseq
    %v920 = vshrl.u32 %v919, 7
    %v921 = vsub.s32 0, %v920
    %v922 = vrot.slane %v918, %v921
    %v923 = vadd.f32 %v869, %v922
    %v924 = vadd.f32 %v873, %v922
    %v925 = vmul.f32 %v923, 0.17677669
    %v926 = vmul.f32 %v924, 0.17677669
    %v927 = vld [vmem:[%s3 + $0x3] sm:$0x1]
    %v928 = vlaneseq
    %v929 = vshrl.u32 %v928, 7
    %v930 = vsub.s32 0, %v929
    %v931 = vrot.slane %v927, %v930
    %v932 = vadd.f32 %v871, %v931
    %v933 = vadd.f32 %v875, %v931
    %v934 = vld [vmem:[%s3 + $0x4] sm:$0x1]
    %v935 = vlaneseq
    %v936 = vshrl.u32 %v935, 7
    %v937 = vsub.s32 0, %v936
    %v938 = vrot.slane %v934, %v937
    %v939 = vadd.f32 %v912, %v938
    %v940 = vadd.f32 %v915, %v938
    %v941 = vpack.c.bf16 %v926, %v925
    %942 = vxpose.xlu0.b32.start [1/16] %v932, 128
    %943 = vxpose.xlu0.b32.cont [2/16] %v933, 128
    %944 = vxpose.xlu0.b32.cont [3/16] 0.0, 128
    %945 = vxpose.xlu0.b32.cont [4/16] 0.0, 128
    %946 = vxpose.xlu0.b32.cont [5/16] 0.0, 128
    %947 = vxpose.xlu0.b32.cont [6/16] 0.0, 128
    %948 = vxpose.xlu0.b32.cont [7/16] 0.0, 128
    %949 = vxpose.xlu0.b32.cont [8/16] 0.0, 128
    %950 = vxpose.xlu0.b32.cont [9/16] 0.0, 128
    %951 = vxpose.xlu0.b32.cont [10/16] 0.0, 128
    %952 = vxpose.xlu0.b32.cont [11/16] 0.0, 128
    %953 = vxpose.xlu0.b32.cont [12/16] 0.0, 128
    %954 = vxpose.xlu0.b32.cont [13/16] 0.0, 128
    %955 = vxpose.xlu0.b32.cont [14/16] 0.0, 128
    %956 = vxpose.xlu0.b32.cont [15/16] 0.0, 128
    %957 = vxpose.xlu0.b32.end [16/16] 0.0, 128
    %v958 = vpop.trf.xlu0
    %v959 = vpop.trf.xlu0
    %v960 = vpop.trf.xlu0
    %v961 = vpop.trf.xlu0
    %v962 = vpop.trf.xlu0
    %v963 = vpop.trf.xlu0
    %v964 = vpop.trf.xlu0
    %v965 = vpop.trf.xlu0
    %v966 = vpop.trf.xlu0
    %v967 = vpop.trf.xlu0
    %v968 = vpop.trf.xlu0
    %v969 = vpop.trf.xlu0
    %v970 = vpop.trf.xlu0
    %v971 = vpop.trf.xlu0
    %v972 = vpop.trf.xlu0
    %v973 = vpop.trf.xlu0
    %v974 = vpack.c.bf16 %v959, %v958
    %v975 = vpack.c.bf16 %v961, %v960
    %v976 = vpack.c.bf16 %v963, %v962
    %v977 = vpack.c.bf16 %v965, %v964
    %v978 = vpack.c.bf16 %v967, %v966
    %v979 = vpack.c.bf16 %v969, %v968
    %v980 = vpack.c.bf16 %v971, %v970
    %v981 = vpack.c.bf16 %v973, %v972
    %v982 = vpack.c.bf16 %v940, %v939
    %vm983 = vcmask 261120
    %v985 = vsel %vm983, %v941, 0
    %987 = vmatprep.subr.bf16.mxu0 0
    %988 = vmatpush1.bf16.msra.mxu0 %v974
    %989 = vmatprep.subr.bf16.mxu0 0
    %990 = vmatpush1.bf16.msra.mxu0 %v975
    %991 = vmatprep.subr.bf16.mxu0 0
    %992 = vmatpush1.bf16.msra.mxu0 0
    %993 = vmatprep.subr.bf16.mxu0 0
    %994 = vmatpush1.bf16.msra.mxu0 0
    %995 = vmatprep.subr.bf16.mxu0 0
    %996 = vmatpush1.bf16.msra.mxu0 0
    %997 = vmatprep.subr.bf16.mxu0 0
    %998 = vmatpush1.bf16.msra.mxu0 0
    %999 = vmatprep.subr.bf16.mxu0 0
    %1000 = vmatpush1.bf16.msra.mxu0 0
    %1001 = vmatprep.subr.bf16.mxu0 0
    %1002 = vmatpush1.bf16.msra.mxu0 0
    %1003 = vmatprep.subr.bf16.mxu0 0
    %1004 = vmatpush1.bf16.msra.mxu0 0
    %1005 = vmatprep.subr.bf16.mxu0 0
    %1006 = vmatpush1.bf16.msra.mxu0 0
    %1007 = vmatprep.subr.bf16.mxu0 0
    %1008 = vmatpush1.bf16.msra.mxu0 0
    %1009 = vmatprep.subr.bf16.mxu0 0
    %1010 = vmatpush1.bf16.msra.mxu0 0
    %1011 = vmatprep.subr.bf16.mxu0 0
    %1012 = vmatpush1.bf16.msra.mxu0 0
    %1013 = vmatprep.subr.bf16.mxu0 0
    %1014 = vmatpush1.bf16.msra.mxu0 0
    %1015 = vmatprep.subr.bf16.mxu0 0
    %1016 = vmatpush1.bf16.msra.mxu0 0
    %1017 = vmatprep.subr.bf16.mxu0 0
    %1018 = vmatpush1.bf16.msra.mxu0 0
    %1019 = vmatprep.mubr.bf16.mxu0 0
    %1020 = vmatmul.mubr.bf16.gmra.mrb[0].mxu0 %v985
    %v1021 = vpop.f32.mrb[0].mxu0
    %v1022 = vadd.f32 %v538, %v1021
    %v1023 = vpop.f32.mrb[0].mxu0
    %v1024 = vpop.f32.mrb[0].mxu0
    %v1025 = vadd.f32 %v539, %v1024
    %v1026 = vpop.f32.mrb[0].mxu0
    %1027 = vdwg.mxu0
    %vm1028 = vcmask 130048
    %v1029 = vsel %vm1028, %v1022, -inf
    %1030 = vmax.xlane.f32.xlu0 %v1029
    %v1031 = vpop.xlane.xlu0 %1030
    %v1032 = vsel %vm1028, %v1025, -inf
    %1033 = vmax.xlane.f32.xlu0 %v1032
    %v1034 = vpop.xlane.xlu0 %1033
    %v1035 = vsub.f32 %v1022, %v1031
    %v1036 = vsub.f32 %v1025, %v1034
    %v1037 = vmul.f32 %v1035, 1.442695
    %v1038 = vpow.pop %v1037
    %v1039 = vmul.f32 %v1036, 1.442695
    %v1040 = vpow.pop %v1039
    %v1041 = vsel %vm1028, %v1038, 0.0
    %1042 = vadd.xlane.f32.xlu0 %v1041
    %v1043 = vpop.xlane.xlu0 %1042
    %v1044 = vsel %vm1028, %v1040, 0.0
    %1045 = vadd.xlane.f32.xlu0 %v1044
    %v1046 = vpop.xlane.xlu0 %1045
    %v1047 = vrcp.pop %v1043
    %v1048 = vrcp.pop %v1046
    %v1049 = vmul.f32 %v1038, %v1047
    %v1050 = vmul.f32 %v1040, %v1048
    %v1051 = vpack.c.bf16 %v1050, %v1049
    %v1053 = vsel %vm1028, %v1051, 0
    %1055 = vmatprep.subr.bf16.mxu0 0
    %1056 = vmatpush1.bf16.msra.mxu0 %v982
    %1057 = vmatprep.subr.bf16.mxu0 0
    %1058 = vmatpush1.bf16.msra.mxu0 0
    %1059 = vmatprep.subr.bf16.mxu0 0
    %1060 = vmatpush1.bf16.msra.mxu0 0
    %1061 = vmatprep.subr.bf16.mxu0 0
    %1062 = vmatpush1.bf16.msra.mxu0 0
    %1063 = vmatprep.subr.bf16.mxu0 0
    %1064 = vmatpush1.bf16.msra.mxu0 0
    %1065 = vmatprep.subr.bf16.mxu0 0
    %1066 = vmatpush1.bf16.msra.mxu0 0
    %1067 = vmatprep.subr.bf16.mxu0 0
    %1068 = vmatpush1.bf16.msra.mxu0 0
    %1069 = vmatprep.subr.bf16.mxu0 0
    %1070 = vmatpush1.bf16.msra.mxu0 0
    %1071 = vmatprep.subr.bf16.mxu0 0
    %1072 = vmatpush1.bf16.msra.mxu0 0
    %1073 = vmatprep.subr.bf16.mxu0 0
    %1074 = vmatpush1.bf16.msra.mxu0 0
    %1075 = vmatprep.subr.bf16.mxu0 0
    %1076 = vmatpush1.bf16.msra.mxu0 0
    %1077 = vmatprep.subr.bf16.mxu0 0
    %1078 = vmatpush1.bf16.msra.mxu0 0
    %1079 = vmatprep.subr.bf16.mxu0 0
    %1080 = vmatpush1.bf16.msra.mxu0 0
    %1081 = vmatprep.subr.bf16.mxu0 0
    %1082 = vmatpush1.bf16.msra.mxu0 0
    %1083 = vmatprep.subr.bf16.mxu0 0
    %1084 = vmatpush1.bf16.msra.mxu0 0
    %1085 = vmatprep.subr.bf16.mxu0 0
    %1086 = vmatpush1.bf16.msra.mxu0 0
    %1087 = vmatprep.mubr.bf16.mxu0 0
    %1088 = vmatmul.mubr.bf16.gmra.mrb[0].mxu0 %v1053
    %v1089 = vpop.f32.mrb[0].mxu0
    %v1090 = vadd.f32 0.0, %v1089
    %v1091 = vpop.f32.mrb[0].mxu0
    %v1092 = vpop.f32.mrb[0].mxu0
    %v1093 = vadd.f32 0.0, %v1092
    %v1094 = vpop.f32.mrb[0].mxu0
    %1095 = vdwg.mxu0
    %1096 = vst.msk [vmem:[#allocation2] sm:$0xff] %vm983, %v1090
    %1097 = vst.msk [vmem:[#allocation2 + $0x8] sm:$0xff] %vm983, %v1093
    %1099 = vrot.lane.b32.xlu0 %v941, 96
    %v1100 = vpop.permute.xlu0 %1099
    %v1102 = vsel %vm983, %v1100, 0
    %1104 = vmatprep.subr.bf16.mxu0 0
    %1105 = vmatpush1.bf16.msra.mxu0 %v976
    %1106 = vmatprep.subr.bf16.mxu0 0
    %1107 = vmatpush1.bf16.msra.mxu0 %v977
    %1108 = vmatprep.subr.bf16.mxu0 0
    %1109 = vmatpush1.bf16.msra.mxu0 0
    %1110 = vmatprep.subr.bf16.mxu0 0
    %1111 = vmatpush1.bf16.msra.mxu0 0
    %1112 = vmatprep.subr.bf16.mxu0 0
    %1113 = vmatpush1.bf16.msra.mxu0 0
    %1114 = vmatprep.subr.bf16.mxu0 0
    %1115 = vmatpush1.bf16.msra.mxu0 0
    %1116 = vmatprep.subr.bf16.mxu0 0
    %1117 = vmatpush1.bf16.msra.mxu0 0
    %1118 = vmatprep.subr.bf16.mxu0 0
    %1119 = vmatpush1.bf16.msra.mxu0 0
    %1120 = vmatprep.subr.bf16.mxu0 0
    %1121 = vmatpush1.bf16.msra.mxu0 0
    %1122 = vmatprep.subr.bf16.mxu0 0
    %1123 = vmatpush1.bf16.msra.mxu0 0
    %1124 = vmatprep.subr.bf16.mxu0 0
    %1125 = vmatpush1.bf16.msra.mxu0 0
    %1126 = vmatprep.subr.bf16.mxu0 0
    %1127 = vmatpush1.bf16.msra.mxu0 0
    %1128 = vmatprep.subr.bf16.mxu0 0
    %1129 = vmatpush1.bf16.msra.mxu0 0
    %1130 = vmatprep.subr.bf16.mxu0 0
    %1131 = vmatpush1.bf16.msra.mxu0 0
    %1132 = vmatprep.subr.bf16.mxu0 0
    %1133 = vmatpush1.bf16.msra.mxu0 0
    %1134 = vmatprep.subr.bf16.mxu0 0
    %1135 = vmatpush1.bf16.msra.mxu0 0
    %1136 = vmatprep.mubr.bf16.mxu0 0
    %1137 = vmatmul.mubr.bf16.gmra.mrb[0].mxu0 %v1102
    %v1138 = vpop.f32.mrb[0].mxu0
    %v1139 = vadd.f32 %v538, %v1138
    %v1140 = vpop.f32.mrb[0].mxu0
    %v1141 = vpop.f32.mrb[0].mxu0
    %v1142 = vadd.f32 %v539, %v1141
    %v1143 = vpop.f32.mrb[0].mxu0
    %1144 = vdwg.mxu0
    %v1145 = vsel %vm1028, %v1139, -inf
    %1146 = vmax.xlane.f32.xlu0 %v1145
    %v1147 = vpop.xlane.xlu0 %1146
    %v1148 = vsel %vm1028, %v1142, -inf
    %1149 = vmax.xlane.f32.xlu0 %v1148
    %v1150 = vpop.xlane.xlu0 %1149
    %v1151 = vsub.f32 %v1139, %v1147
    %v1152 = vsub.f32 %v1142, %v1150
    %v1153 = vmul.f32 %v1151, 1.442695
    %v1154 = vpow.pop %v1153
    %v1155 = vmul.f32 %v1152, 1.442695
    %v1156 = vpow.pop %v1155
    %v1157 = vsel %vm1028, %v1154, 0.0
    %1158 = vadd.xlane.f32.xlu0 %v1157
    %v1159 = vpop.xlane.xlu0 %1158
    %v1160 = vsel %vm1028, %v1156, 0.0
    %1161 = vadd.xlane.f32.xlu0 %v1160
    %v1162 = vpop.xlane.xlu0 %1161
    %v1163 = vrcp.pop %v1159
    %v1164 = vrcp.pop %v1162
    %v1165 = vmul.f32 %v1154, %v1163
    %v1166 = vmul.f32 %v1156, %v1164
    %v1167 = vpack.c.bf16 %v1166, %v1165
    %1169 = vrot.lane.b32.xlu0 %v982, 96
    %v1170 = vpop.permute.xlu0 %1169
    %v1173 = vsel %vm1028, %v1167, 0
    %1175 = vmatprep.subr.bf16.mxu0 0
    %1176 = vmatpush1.bf16.msra.mxu0 %v1170
    %1177 = vmatprep.subr.bf16.mxu0 0
    %1178 = vmatpush1.bf16.msra.mxu0 0
    %1179 = vmatprep.subr.bf16.mxu0 0
    %1180 = vmatpush1.bf16.msra.mxu0 0
    %1181 = vmatprep.subr.bf16.mxu0 0
    %1182 = vmatpush1.bf16.msra.mxu0 0
    %1183 = vmatprep.subr.bf16.mxu0 0
    %1184 = vmatpush1.bf16.msra.mxu0 0
    %1185 = vmatprep.subr.bf16.mxu0 0
    %1186 = vmatpush1.bf16.msra.mxu0 0
    %1187 = vmatprep.subr.bf16.mxu0 0
    %1188 = vmatpush1.bf16.msra.mxu0 0
    %1189 = vmatprep.subr.bf16.mxu0 0
    %1190 = vmatpush1.bf16.msra.mxu0 0
    %1191 = vmatprep.subr.bf16.mxu0 0
    %1192 = vmatpush1.bf16.msra.mxu0 0
    %1193 = vmatprep.subr.bf16.mxu0 0
    %1194 = vmatpush1.bf16.msra.mxu0 0
    %1195 = vmatprep.subr.bf16.mxu0 0
    %1196 = vmatpush1.bf16.msra.mxu0 0
    %1197 = vmatprep.subr.bf16.mxu0 0
    %1198 = vmatpush1.bf16.msra.mxu0 0
    %1199 = vmatprep.subr.bf16.mxu0 0
    %1200 = vmatpush1.bf16.msra.mxu0 0
    %1201 = vmatprep.subr.bf16.mxu0 0
    %1202 = vmatpush1.bf16.msra.mxu0 0
    %1203 = vmatprep.subr.bf16.mxu0 0
    %1204 = vmatpush1.bf16.msra.mxu0 0
    %1205 = vmatprep.subr.bf16.mxu0 0
    %1206 = vmatpush1.bf16.msra.mxu0 0
    %1207 = vmatprep.mubr.bf16.mxu0 0
    %1208 = vmatmul.mubr.bf16.gmra.mrb[0].mxu0 %v1173
    %v1209 = vpop.f32.mrb[0].mxu0
    %v1210 = vadd.f32 0.0, %v1209
    %v1211 = vpop.f32.mrb[0].mxu0
    %v1212 = vpop.f32.mrb[0].mxu0
    %v1213 = vadd.f32 0.0, %v1212
    %v1214 = vpop.f32.mrb[0].mxu0
    %1215 = vdwg.mxu0
    %1218 = vrot.lane.b32.xlu0 %v1210, 32
    %v1219 = vpop.permute.xlu0 %1218
    %1220 = vrot.lane.b32.xlu0 %v1213, 32
    %v1221 = vpop.permute.xlu0 %1220
    %vm1224 = vcmask 523520
    %1225 = vst.msk [vmem:[#allocation2] sm:$0xff] %vm1224, %v1219
    %1226 = vst.msk [vmem:[#allocation2 + $0x8] sm:$0xff] %vm1224, %v1221
    %1227 = vrot.lane.b32.xlu0 %v941, 64
    %v1228 = vpop.permute.xlu0 %1227
    %v1230 = vsel %vm983, %v1228, 0
    %1232 = vmatprep.subr.bf16.mxu0 0
    %1233 = vmatpush1.bf16.msra.mxu0 %v978
    %1234 = vmatprep.subr.bf16.mxu0 0
    %1235 = vmatpush1.bf16.msra.mxu0 %v979
    %1236 = vmatprep.subr.bf16.mxu0 0
    %1237 = vmatpush1.bf16.msra.mxu0 0
    %1238 = vmatprep.subr.bf16.mxu0 0
    %1239 = vmatpush1.bf16.msra.mxu0 0
    %1240 = vmatprep.subr.bf16.mxu0 0
    %1241 = vmatpush1.bf16.msra.mxu0 0
    %1242 = vmatprep.subr.bf16.mxu0 0
    %1243 = vmatpush1.bf16.msra.mxu0 0
    %1244 = vmatprep.subr.bf16.mxu0 0
    %1245 = vmatpush1.bf16.msra.mxu0 0
    %1246 = vmatprep.subr.bf16.mxu0 0
    %1247 = vmatpush1.bf16.msra.mxu0 0
    %1248 = vmatprep.subr.bf16.mxu0 0
    %1249 = vmatpush1.bf16.msra.mxu0 0
    %1250 = vmatprep.subr.bf16.mxu0 0
    %1251 = vmatpush1.bf16.msra.mxu0 0
    %1252 = vmatprep.subr.bf16.mxu0 0
    %1253 = vmatpush1.bf16.msra.mxu0 0
    %1254 = vmatprep.subr.bf16.mxu0 0
    %1255 = vmatpush1.bf16.msra.mxu0 0
    %1256 = vmatprep.subr.bf16.mxu0 0
    %1257 = vmatpush1.bf16.msra.mxu0 0
    %1258 = vmatprep.subr.bf16.mxu0 0
    %1259 = vmatpush1.bf16.msra.mxu0 0
    %1260 = vmatprep.subr.bf16.mxu0 0
    %1261 = vmatpush1.bf16.msra.mxu0 0
    %1262 = vmatprep.subr.bf16.mxu0 0
    %1263 = vmatpush1.bf16.msra.mxu0 0
    %1264 = vmatprep.mubr.bf16.mxu0 0
    %1265 = vmatmul.mubr.bf16.gmra.mrb[0].mxu0 %v1230
    %v1266 = vpop.f32.mrb[0].mxu0
    %v1267 = vadd.f32 %v538, %v1266
    %v1268 = vpop.f32.mrb[0].mxu0
    %v1269 = vpop.f32.mrb[0].mxu0
    %v1270 = vadd.f32 %v539, %v1269
    %v1271 = vpop.f32.mrb[0].mxu0
    %1272 = vdwg.mxu0
    %v1273 = vsel %vm1028, %v1267, -inf
    %1274 = vmax.xlane.f32.xlu0 %v1273
    %v1275 = vpop.xlane.xlu0 %1274
    %v1276 = vsel %vm1028, %v1270, -inf
    %1277 = vmax.xlane.f32.xlu0 %v1276
    %v1278 = vpop.xlane.xlu0 %1277
    %v1279 = vsub.f32 %v1267, %v1275
    %v1280 = vsub.f32 %v1270, %v1278
    %v1281 = vmul.f32 %v1279, 1.442695
    %v1282 = vpow.pop %v1281
    %v1283 = vmul.f32 %v1280, 1.442695
    %v1284 = vpow.pop %v1283
    %v1285 = vsel %vm1028, %v1282, 0.0
    %1286 = vadd.xlane.f32.xlu0 %v1285
    %v1287 = vpop.xlane.xlu0 %1286
    %v1288 = vsel %vm1028, %v1284, 0.0
    %1289 = vadd.xlane.f32.xlu0 %v1288
    %v1290 = vpop.xlane.xlu0 %1289
    %v1291 = vrcp.pop %v1287
    %v1292 = vrcp.pop %v1290
    %v1293 = vmul.f32 %v1282, %v1291
    %v1294 = vmul.f32 %v1284, %v1292
    %v1295 = vpack.c.bf16 %v1294, %v1293
    %1296 = vrot.lane.b32.xlu0 %v982, 64
    %v1297 = vpop.permute.xlu0 %1296
    %v1300 = vsel %vm1028, %v1295, 0
    %1302 = vmatprep.subr.bf16.mxu0 0
    %1303 = vmatpush1.bf16.msra.mxu0 %v1297
    %1304 = vmatprep.subr.bf16.mxu0 0
    %1305 = vmatpush1.bf16.msra.mxu0 0
    %1306 = vmatprep.subr.bf16.mxu0 0
    %1307 = vmatpush1.bf16.msra.mxu0 0
    %1308 = vmatprep.subr.bf16.mxu0 0
    %1309 = vmatpush1.bf16.msra.mxu0 0
    %1310 = vmatprep.subr.bf16.mxu0 0
    %1311 = vmatpush1.bf16.msra.mxu0 0
    %1312 = vmatprep.subr.bf16.mxu0 0
    %1313 = vmatpush1.bf16.msra.mxu0 0
    %1314 = vmatprep.subr.bf16.mxu0 0
    %1315 = vmatpush1.bf16.msra.mxu0 0
    %1316 = vmatprep.subr.bf16.mxu0 0
    %1317 = vmatpush1.bf16.msra.mxu0 0
    %1318 = vmatprep.subr.bf16.mxu0 0
    %1319 = vmatpush1.bf16.msra.mxu0 0
    %1320 = vmatprep.subr.bf16.mxu0 0
    %1321 = vmatpush1.bf16.msra.mxu0 0
    %1322 = vmatprep.subr.bf16.mxu0 0
    %1323 = vmatpush1.bf16.msra.mxu0 0
    %1324 = vmatprep.subr.bf16.mxu0 0
    %1325 = vmatpush1.bf16.msra.mxu0 0
    %1326 = vmatprep.subr.bf16.mxu0 0
    %1327 = vmatpush1.bf16.msra.mxu0 0
    %1328 = vmatprep.subr.bf16.mxu0 0
    %1329 = vmatpush1.bf16.msra.mxu0 0
    %1330 = vmatprep.subr.bf16.mxu0 0
    %1331 = vmatpush1.bf16.msra.mxu0 0
    %1332 = vmatprep.subr.bf16.mxu0 0
    %1333 = vmatpush1.bf16.msra.mxu0 0
    %1334 = vmatprep.mubr.bf16.mxu0 0
    %1335 = vmatmul.mubr.bf16.gmra.mrb[0].mxu0 %v1300
    %v1336 = vpop.f32.mrb[0].mxu0
    %v1337 = vadd.f32 0.0, %v1336
    %v1338 = vpop.f32.mrb[0].mxu0
    %v1339 = vpop.f32.mrb[0].mxu0
    %v1340 = vadd.f32 0.0, %v1339
    %v1341 = vpop.f32.mrb[0].mxu0
    %1342 = vdwg.mxu0
    %1345 = vrot.lane.b32.xlu0 %v1337, 64
    %v1346 = vpop.permute.xlu0 %1345
    %1347 = vrot.lane.b32.xlu0 %v1340, 64
    %v1348 = vpop.permute.xlu0 %1347
    %vm1351 = vcmask 785920
    %1352 = vst.msk [vmem:[#allocation2] sm:$0xff] %vm1351, %v1346
    %1353 = vst.msk [vmem:[#allocation2 + $0x8] sm:$0xff] %vm1351, %v1348
    %1354 = vrot.lane.b32.xlu0 %v941, 32
    %v1355 = vpop.permute.xlu0 %1354
    %v1357 = vsel %vm983, %v1355, 0
    %1359 = vmatprep.subr.bf16.mxu0 0
    %1360 = vmatpush1.bf16.msra.mxu0 %v980
    %1361 = vmatprep.subr.bf16.mxu0 0
    %1362 = vmatpush1.bf16.msra.mxu0 %v981
    %1363 = vmatprep.subr.bf16.mxu0 0
    %1364 = vmatpush1.bf16.msra.mxu0 0
    %1365 = vmatprep.subr.bf16.mxu0 0
    %1366 = vmatpush1.bf16.msra.mxu0 0
    %1367 = vmatprep.subr.bf16.mxu0 0
    %1368 = vmatpush1.bf16.msra.mxu0 0
    %1369 = vmatprep.subr.bf16.mxu0 0
    %1370 = vmatpush1.bf16.msra.mxu0 0
    %1371 = vmatprep.subr.bf16.mxu0 0
    %1372 = vmatpush1.bf16.msra.mxu0 0
    %1373 = vmatprep.subr.bf16.mxu0 0
    %1374 = vmatpush1.bf16.msra.mxu0 0
    %1375 = vmatprep.subr.bf16.mxu0 0
    %1376 = vmatpush1.bf16.msra.mxu0 0
    %1377 = vmatprep.subr.bf16.mxu0 0
    %1378 = vmatpush1.bf16.msra.mxu0 0
    %1379 = vmatprep.subr.bf16.mxu0 0
    %1380 = vmatpush1.bf16.msra.mxu0 0
    %1381 = vmatprep.subr.bf16.mxu0 0
    %1382 = vmatpush1.bf16.msra.mxu0 0
    %1383 = vmatprep.subr.bf16.mxu0 0
    %1384 = vmatpush1.bf16.msra.mxu0 0
    %1385 = vmatprep.subr.bf16.mxu0 0
    %1386 = vmatpush1.bf16.msra.mxu0 0
    %1387 = vmatprep.subr.bf16.mxu0 0
    %1388 = vmatpush1.bf16.msra.mxu0 0
    %1389 = vmatprep.subr.bf16.mxu0 0
    %1390 = vmatpush1.bf16.msra.mxu0 0
    %1391 = vmatprep.mubr.bf16.mxu0 0
    %1392 = vmatmul.mubr.bf16.gmra.mrb[0].mxu0 %v1357
    %v1393 = vpop.f32.mrb[0].mxu0
    %v1394 = vadd.f32 %v538, %v1393
    %v1395 = vpop.f32.mrb[0].mxu0
    %v1396 = vpop.f32.mrb[0].mxu0
    %v1397 = vadd.f32 %v539, %v1396
    %v1398 = vpop.f32.mrb[0].mxu0
    %1399 = vdwg.mxu0
    %v1400 = vsel %vm1028, %v1394, -inf
    %1401 = vmax.xlane.f32.xlu0 %v1400
    %v1402 = vpop.xlane.xlu0 %1401
    %v1403 = vsel %vm1028, %v1397, -inf
    %1404 = vmax.xlane.f32.xlu0 %v1403
    %v1405 = vpop.xlane.xlu0 %1404
    %v1406 = vsub.f32 %v1394, %v1402
    %v1407 = vsub.f32 %v1397, %v1405
    %v1408 = vmul.f32 %v1406, 1.442695
    %v1409 = vpow.pop %v1408
    %v1410 = vmul.f32 %v1407, 1.442695
    %v1411 = vpow.pop %v1410
    %v1412 = vsel %vm1028, %v1409, 0.0
    %1413 = vadd.xlane.f32.xlu0 %v1412
    %v1414 = vpop.xlane.xlu0 %1413
    %v1415 = vsel %vm1028, %v1411, 0.0
    %1416 = vadd.xlane.f32.xlu0 %v1415
    %v1417 = vpop.xlane.xlu0 %1416
    %v1418 = vrcp.pop %v1414
    %v1419 = vrcp.pop %v1417
    %v1420 = vmul.f32 %v1409, %v1418
    %v1421 = vmul.f32 %v1411, %v1419
    %v1422 = vpack.c.bf16 %v1421, %v1420
    %1423 = vrot.lane.b32.xlu0 %v982, 32
    %v1424 = vpop.permute.xlu0 %1423
    %v1427 = vsel %vm1028, %v1422, 0
    %1429 = vmatprep.subr.bf16.mxu0 0
    %1430 = vmatpush1.bf16.msra.mxu0 %v1424
    %1431 = vmatprep.subr.bf16.mxu0 0
    %1432 = vmatpush1.bf16.msra.mxu0 0
    %1433 = vmatprep.subr.bf16.mxu0 0
    %1434 = vmatpush1.bf16.msra.mxu0 0
    %1435 = vmatprep.subr.bf16.mxu0 0
    %1436 = vmatpush1.bf16.msra.mxu0 0
    %1437 = vmatprep.subr.bf16.mxu0 0
    %1438 = vmatpush1.bf16.msra.mxu0 0
    %1439 = vmatprep.subr.bf16.mxu0 0
    %1440 = vmatpush1.bf16.msra.mxu0 0
    %1441 = vmatprep.subr.bf16.mxu0 0
    %1442 = vmatpush1.bf16.msra.mxu0 0
    %1443 = vmatprep.subr.bf16.mxu0 0
    %1444 = vmatpush1.bf16.msra.mxu0 0
    %1445 = vmatprep.subr.bf16.mxu0 0
    %1446 = vmatpush1.bf16.msra.mxu0 0
    %1447 = vmatprep.subr.bf16.mxu0 0
    %1448 = vmatpush1.bf16.msra.mxu0 0
    %1449 = vmatprep.subr.bf16.mxu0 0
    %1450 = vmatpush1.bf16.msra.mxu0 0
    %1451 = vmatprep.subr.bf16.mxu0 0
    %1452 = vmatpush1.bf16.msra.mxu0 0
    %1453 = vmatprep.subr.bf16.mxu0 0
    %1454 = vmatpush1.bf16.msra.mxu0 0
    %1455 = vmatprep.subr.bf16.mxu0 0
    %1456 = vmatpush1.bf16.msra.mxu0 0
    %1457 = vmatprep.subr.bf16.mxu0 0
    %1458 = vmatpush1.bf16.msra.mxu0 0
    %1459 = vmatprep.subr.bf16.mxu0 0
    %1460 = vmatpush1.bf16.msra.mxu0 0
    %1461 = vmatprep.mubr.bf16.mxu0 0
    %1462 = vmatmul.mubr.bf16.gmra.mrb[0].mxu0 %v1427
    %v1463 = vpop.f32.mrb[0].mxu0
    %v1464 = vadd.f32 0.0, %v1463
    %v1465 = vpop.f32.mrb[0].mxu0
    %v1466 = vpop.f32.mrb[0].mxu0
    %v1467 = vadd.f32 0.0, %v1466
    %v1468 = vpop.f32.mrb[0].mxu0
    %1469 = vdwg.mxu0
    %1472 = vrot.lane.b32.xlu0 %v1464, 96
    %v1473 = vpop.permute.xlu0 %1472
    %1474 = vrot.lane.b32.xlu0 %v1467, 96
    %v1475 = vpop.permute.xlu0 %1474
    %vm1478 = vcmask 1048320
    %1479 = vst.msk [vmem:[#allocation2] sm:$0xff] %vm1478, %v1473
    %1480 = vst.msk [vmem:[#allocation2 + $0x8] sm:$0xff] %vm1478, %v1475
    %v1481 = vld [vmem:[#allocation2] sm:$0xff]
    %v1482 = vld [vmem:[#allocation2 + $0x8] sm:$0xff]
    %v1483 = vpack.c.bf16 %v1482, %v1481
    %v1484 = vld [vmem:[%s3 + $0x5] sm:$0x1]
    %v1485 = vlaneseq
    %v1486 = vshrl.u32 %v1485, 7
    %v1487 = vsub.s32 0, %v1486
    %v1488 = vrot.slane %v1484, %v1487
    %v1489 = vunpack.c.h.b16 %v541
    %v1490 = vunpack.c.h.b16 %v545
    %v1491 = vunpack.c.h.b16 %v549
    %v1492 = vunpack.c.h.b16 %v553
    %v1493 = vunpack.c.h.b16 %v557
    %v1494 = vunpack.c.h.b16 %v561
    %v1495 = vunpack.c.h.b16 %v565
    %v1496 = vunpack.c.h.b16 %v569
    %v1497 = vunpack.c.h.b16 %v573
    %v1498 = vunpack.c.h.b16 %v577
    %v1499 = vunpack.c.h.b16 %v581
    %v1500 = vunpack.c.h.b16 %v585
    %v1501 = vunpack.c.h.b16 %v589
    %v1502 = vunpack.c.h.b16 %v593
    %v1503 = vunpack.c.h.b16 %v597
    %v1504 = vunpack.c.h.b16 %v601
    %v1505 = vpack.c.b16 %v1490, %v1489
    %v1506 = vpack.c.b16 %v1492, %v1491
    %v1507 = vpack.c.b16 %v1494, %v1493
    %v1508 = vpack.c.b16 %v1496, %v1495
    %v1509 = vpack.c.b16 %v1498, %v1497
    %v1510 = vpack.c.b16 %v1500, %v1499
    %v1511 = vpack.c.b16 %v1502, %v1501
    %v1512 = vpack.c.b16 %v1504, %v1503
    %1521 = vmatprep.subr.bf16.mxu0 0
    %1522 = vmatpush1.bf16.msra.mxu0 %v1505
    %1523 = vmatprep.subr.bf16.mxu0 0
    %1524 = vmatpush1.bf16.msra.mxu0 %v1506
    %1525 = vmatprep.subr.bf16.mxu0 0
    %1526 = vmatpush1.bf16.msra.mxu0 %v1507
    %1527 = vmatprep.subr.bf16.mxu0 0
    %1528 = vmatpush1.bf16.msra.mxu0 %v1508
    %1529 = vmatprep.subr.bf16.mxu0 0
    %1530 = vmatpush1.bf16.msra.mxu0 %v1509
    %1531 = vmatprep.subr.bf16.mxu0 0
    %1532 = vmatpush1.bf16.msra.mxu0 %v1510
    %1533 = vmatprep.subr.bf16.mxu0 0
    %1534 = vmatpush1.bf16.msra.mxu0 %v1511
    %1535 = vmatprep.subr.bf16.mxu0 0
    %1536 = vmatpush1.bf16.msra.mxu0 %v1512
    %1537 = vmatprep.subr.bf16.mxu0 0
    %1538 = vmatpush1.bf16.msra.mxu0 0
    %1539 = vmatprep.subr.bf16.mxu0 0
    %1540 = vmatpush1.bf16.msra.mxu0 0
    %1541 = vmatprep.subr.bf16.mxu0 0
    %1542 = vmatpush1.bf16.msra.mxu0 0
    %1543 = vmatprep.subr.bf16.mxu0 0
    %1544 = vmatpush1.bf16.msra.mxu0 0
    %1545 = vmatprep.subr.bf16.mxu0 0
    %1546 = vmatpush1.bf16.msra.mxu0 0
    %1547 = vmatprep.subr.bf16.mxu0 0
    %1548 = vmatpush1.bf16.msra.mxu0 0
    %1549 = vmatprep.subr.bf16.mxu0 0
    %1550 = vmatpush1.bf16.msra.mxu0 0
    %1551 = vmatprep.subr.bf16.mxu0 0
    %1552 = vmatpush1.bf16.msra.mxu0 0
    %1553 = vmatprep.mubr.bf16.mxu0 0
    %1554 = vmatmul.mubr.bf16.gmra.mrb[0].mxu0 %v1483
    %v1555 = vpop.f32.mrb[0].mxu0
    %v1556 = vadd.f32 %v1488, %v1555
    %v1557 = vpop.f32.mrb[0].mxu0
    %v1558 = vpop.f32.mrb[0].mxu0
    %v1559 = vadd.f32 %v1488, %v1558
    %v1560 = vpop.f32.mrb[0].mxu0
    %1561 = vdwg.mxu0
    %v1562 = vld [vmem:[%s3 + $0x6] sm:$0x1]
    %v1563 = vlaneseq
    %v1564 = vshrl.u32 %v1563, 7
    %v1565 = vsub.s32 0, %v1564
    %v1566 = vrot.slane %v1562, %v1565
    %v1567 = vmul.f32 %v1556, %v1566
    %v1568 = vmul.f32 %v1559, %v1566
    %v1569 = vadd.f32 %v532, %v1567
    %v1570 = vadd.f32 %v535, %v1568
    %v1571 = vld [vmem:[%s3 + $0x7] sm:$0x1]
    %v1572 = vld [vmem:[%s3 + $0x8] sm:$0x1]
    %1573 = vadd.xlane.f32.xlu0 %v1569
    %v1574 = vpop.xlane.xlu0 %1573
    %1575 = vadd.xlane.f32.xlu0 %v1570
    %v1576 = vpop.xlane.xlu0 %1575
    %v1577 = vmul.f32 %v1574, %v674
    %v1578 = vmul.f32 %v1576, %v674
    %v1579 = vsub.f32 %v1569, %v1577
    %v1580 = vsub.f32 %v1570, %v1578
    %v1581 = vmul.f32 %v1579, %v1579
    %v1582 = vmul.f32 %v1580, %v1580
    %1583 = vadd.xlane.f32.xlu0 %v1581
    %v1584 = vpop.xlane.xlu0 %1583
    %1585 = vadd.xlane.f32.xlu0 %v1582
    %v1586 = vpop.xlane.xlu0 %1585
    %v1587 = vmul.f32 %v1584, %v674
    %v1588 = vmul.f32 %v1586, %v674
    %v1589 = vadd.f32 %v1587, 1e-06
    %v1590 = vadd.f32 %v1588, 1e-06
    %v1591 = vrsqrt.pop %v1589
    %v1592 = vrsqrt.pop %v1590
    %v1593 = vmul.f32 %v1579, %v1591
    %v1594 = vmul.f32 %v1580, %v1592
    %v1595 = vlaneseq
    %v1596 = vshrl.u32 %v1595, 7
    %v1597 = vsub.s32 0, %v1596
    %v1598 = vrot.slane %v1571, %v1597
    %v1599 = vmul.f32 %v1593, %v1598
    %v1600 = vmul.f32 %v1594, %v1598
    %v1601 = vlaneseq
    %v1602 = vshrl.u32 %v1601, 7
    %v1603 = vsub.s32 0, %v1602
    %v1604 = vrot.slane %v1572, %v1603
    %v1605 = vadd.f32 %v1599, %v1604
    %v1606 = vadd.f32 %v1600, %v1604
    %v1607 = vpack.c.bf16 %v1606, %v1605
    %v1608 = vld [vmem:[%s4] sm:$0xf]
    %v1610 = vlaneseq
    %v1611 = vshrl.u32 %v1610, 7
    %v1612 = vsub.s32 0, %v1611
    %v1613 = vrot.slane %v1608, %v1612
    %v1614 = vlaneseq
    %v1615 = vshrl.u32 %v1614, 7
    %v1616 = vsub.s32 1, %v1615
    %v1617 = vrot.slane %v1608, %v1616
    %v1618 = vlaneseq
    %v1619 = vshrl.u32 %v1618, 7
    %v1620 = vsub.s32 2, %v1619
    %v1621 = vrot.slane %v1608, %v1620
    %v1622 = vlaneseq
    %v1623 = vshrl.u32 %v1622, 7
    %v1624 = vsub.s32 3, %v1623
    %v1625 = vrot.slane %v1608, %v1624
    %v1662 = vunpack.c.l.b16 %v542
    %v1663 = vunpack.c.h.b16 %v542
    %v1664 = vunpack.c.l.b16 %v543
    %v1665 = vunpack.c.h.b16 %v543
    %v1666 = vunpack.c.l.b16 %v546
    %v1667 = vunpack.c.h.b16 %v546
    %v1668 = vunpack.c.l.b16 %v547
    %v1669 = vunpack.c.h.b16 %v547
    %v1670 = vunpack.c.l.b16 %v550
    %v1671 = vunpack.c.h.b16 %v550
    %v1672 = vunpack.c.l.b16 %v551
    %v1673 = vunpack.c.h.b16 %v551
    %v1674 = vunpack.c.l.b16 %v554
    %v1675 = vunpack.c.h.b16 %v554
    %v1676 = vunpack.c.l.b16 %v555
    %v1677 = vunpack.c.h.b16 %v555
    %v1678 = vunpack.c.l.b16 %v558
    %v1679 = vunpack.c.h.b16 %v558
    %v1680 = vunpack.c.l.b16 %v559
    %v1681 = vunpack.c.h.b16 %v559
    %v1682 = vunpack.c.l.b16 %v562
    %v1683 = vunpack.c.h.b16 %v562
    %v1684 = vunpack.c.l.b16 %v563
    %v1685 = vunpack.c.h.b16 %v563
    %v1686 = vunpack.c.l.b16 %v566
    %v1687 = vunpack.c.h.b16 %v566
    %v1688 = vunpack.c.l.b16 %v567
    %v1689 = vunpack.c.h.b16 %v567
    %v1690 = vunpack.c.l.b16 %v570
    %v1691 = vunpack.c.h.b16 %v570
    %v1692 = vunpack.c.l.b16 %v571
    %v1693 = vunpack.c.h.b16 %v571
    %v1694 = vunpack.c.l.b16 %v574
    %v1695 = vunpack.c.h.b16 %v574
    %v1696 = vunpack.c.l.b16 %v575
    %v1697 = vunpack.c.h.b16 %v575
    %v1698 = vunpack.c.l.b16 %v578
    %v1699 = vunpack.c.h.b16 %v578
    %v1700 = vunpack.c.l.b16 %v579
    %v1701 = vunpack.c.h.b16 %v579
    %v1702 = vunpack.c.l.b16 %v582
    %v1703 = vunpack.c.h.b16 %v582
    %v1704 = vunpack.c.l.b16 %v583
    %v1705 = vunpack.c.h.b16 %v583
    %v1706 = vunpack.c.l.b16 %v586
    %v1707 = vunpack.c.h.b16 %v586
    %v1708 = vunpack.c.l.b16 %v587
    %v1709 = vunpack.c.h.b16 %v587
    %v1710 = vunpack.c.l.b16 %v590
    %v1711 = vunpack.c.h.b16 %v590
    %v1712 = vunpack.c.l.b16 %v591
    %v1713 = vunpack.c.h.b16 %v591
    %v1714 = vunpack.c.l.b16 %v594
    %v1715 = vunpack.c.h.b16 %v594
    %v1716 = vunpack.c.l.b16 %v595
    %v1717 = vunpack.c.h.b16 %v595
    %v1718 = vunpack.c.l.b16 %v598
    %v1719 = vunpack.c.h.b16 %v598
    %v1720 = vunpack.c.l.b16 %v599
    %v1721 = vunpack.c.h.b16 %v599
    %v1722 = vunpack.c.l.b16 %v602
    %v1723 = vunpack.c.h.b16 %v602
    %v1724 = vunpack.c.l.b16 %v603
    %v1725 = vunpack.c.h.b16 %v603
    %v1726 = vpack.c.b16 %v1666, %v1662
    %v1727 = vpack.c.b16 %v1667, %v1663
    %v1728 = vpack.c.b16 %v1668, %v1664
    %v1729 = vpack.c.b16 %v1669, %v1665
    %v1730 = vpack.c.b16 %v1674, %v1670
    %v1731 = vpack.c.b16 %v1675, %v1671
    %v1732 = vpack.c.b16 %v1676, %v1672
    %v1733 = vpack.c.b16 %v1677, %v1673
    %v1734 = vpack.c.b16 %v1682, %v1678
    %v1735 = vpack.c.b16 %v1683, %v1679
    %v1736 = vpack.c.b16 %v1684, %v1680
    %v1737 = vpack.c.b16 %v1685, %v1681
    %v1738 = vpack.c.b16 %v1690, %v1686
    %v1739 = vpack.c.b16 %v1691, %v1687
    %v1740 = vpack.c.b16 %v1692, %v1688
    %v1741 = vpack.c.b16 %v1693, %v1689
    %v1742 = vpack.c.b16 %v1698, %v1694
    %v1743 = vpack.c.b16 %v1699, %v1695
    %v1744 = vpack.c.b16 %v1700, %v1696
    %v1745 = vpack.c.b16 %v1701, %v1697
    %v1746 = vpack.c.b16 %v1706, %v1702
    %v1747 = vpack.c.b16 %v1707, %v1703
    %v1748 = vpack.c.b16 %v1708, %v1704
    %v1749 = vpack.c.b16 %v1709, %v1705
    %v1750 = vpack.c.b16 %v1714, %v1710
    %v1751 = vpack.c.b16 %v1715, %v1711
    %v1752 = vpack.c.b16 %v1716, %v1712
    %v1753 = vpack.c.b16 %v1717, %v1713
    %v1754 = vpack.c.b16 %v1722, %v1718
    %v1755 = vpack.c.b16 %v1723, %v1719
    %v1756 = vpack.c.b16 %v1724, %v1720
    %v1757 = vpack.c.b16 %v1725, %v1721
    %1790 = vmatprep.subr.bf16.mxu0 %v1727
    %1791 = vmatpush1.bf16.msra.mxu0 %v1726
    %1792 = vmatprep.subr.bf16.mxu0 %v1731
    %1793 = vmatpush1.bf16.msra.mxu0 %v1730
    %1794 = vmatprep.subr.bf16.mxu0 %v1735
    %1795 = vmatpush1.bf16.msra.mxu0 %v1734
    %1796 = vmatprep.subr.bf16.mxu0 %v1739
    %1797 = vmatpush1.bf16.msra.mxu0 %v1738
    %1798 = vmatprep.subr.bf16.mxu0 %v1743
    %1799 = vmatpush1.bf16.msra.mxu0 %v1742
    %1800 = vmatprep.subr.bf16.mxu0 %v1747
    %1801 = vmatpush1.bf16.msra.mxu0 %v1746
    %1802 = vmatprep.subr.bf16.mxu0 %v1751
    %1803 = vmatpush1.bf16.msra.mxu0 %v1750
    %1804 = vmatprep.subr.bf16.mxu0 %v1755
    %1805 = vmatpush1.bf16.msra.mxu0 %v1754
    %1806 = vmatprep.subr.bf16.mxu0 0
    %1807 = vmatpush1.bf16.msra.mxu0 0
    %1808 = vmatprep.subr.bf16.mxu0 0
    %1809 = vmatpush1.bf16.msra.mxu0 0
    %1810 = vmatprep.subr.bf16.mxu0 0
    %1811 = vmatpush1.bf16.msra.mxu0 0
    %1812 = vmatprep.subr.bf16.mxu0 0
    %1813 = vmatpush1.bf16.msra.mxu0 0
    %1814 = vmatprep.subr.bf16.mxu0 0
    %1815 = vmatpush1.bf16.msra.mxu0 0
    %1816 = vmatprep.subr.bf16.mxu0 0
    %1817 = vmatpush1.bf16.msra.mxu0 0
    %1818 = vmatprep.subr.bf16.mxu0 0
    %1819 = vmatpush1.bf16.msra.mxu0 0
    %1820 = vmatprep.subr.bf16.mxu0 0
    %1821 = vmatpush1.bf16.msra.mxu0 0
    %1822 = vmatprep.mubr.bf16.mxu0 0
    %1823 = vmatmul.mubr.bf16.gmra.mrb[0].mxu0 %v1607
    %v1824 = vpop.f32.mrb[0].mxu0
    %v1825 = vadd.f32 %v1613, %v1824
    %v1826 = vpop.f32.mrb[0].mxu0
    %v1827 = vadd.f32 %v1617, %v1826
    %v1828 = vpop.f32.mrb[0].mxu0
    %v1829 = vadd.f32 %v1613, %v1828
    %v1830 = vpop.f32.mrb[0].mxu0
    %v1831 = vadd.f32 %v1617, %v1830
    %1832 = vdwg.mxu0
    %1833 = vmatprep.subr.bf16.mxu0 %v1729
    %1834 = vmatpush1.bf16.msra.mxu0 %v1728
    %1835 = vmatprep.subr.bf16.mxu0 %v1733
    %1836 = vmatpush1.bf16.msra.mxu0 %v1732
    %1837 = vmatprep.subr.bf16.mxu0 %v1737
    %1838 = vmatpush1.bf16.msra.mxu0 %v1736
    %1839 = vmatprep.subr.bf16.mxu0 %v1741
    %1840 = vmatpush1.bf16.msra.mxu0 %v1740
    %1841 = vmatprep.subr.bf16.mxu0 %v1745
    %1842 = vmatpush1.bf16.msra.mxu0 %v1744
    %1843 = vmatprep.subr.bf16.mxu0 %v1749
    %1844 = vmatpush1.bf16.msra.mxu0 %v1748
    %1845 = vmatprep.subr.bf16.mxu0 %v1753
    %1846 = vmatpush1.bf16.msra.mxu0 %v1752
    %1847 = vmatprep.subr.bf16.mxu0 %v1757
    %1848 = vmatpush1.bf16.msra.mxu0 %v1756
    %1849 = vmatprep.subr.bf16.mxu0 0
    %1850 = vmatpush1.bf16.msra.mxu0 0
    %1851 = vmatprep.subr.bf16.mxu0 0
    %1852 = vmatpush1.bf16.msra.mxu0 0
    %1853 = vmatprep.subr.bf16.mxu0 0
    %1854 = vmatpush1.bf16.msra.mxu0 0
    %1855 = vmatprep.subr.bf16.mxu0 0
    %1856 = vmatpush1.bf16.msra.mxu0 0
    %1857 = vmatprep.subr.bf16.mxu0 0
    %1858 = vmatpush1.bf16.msra.mxu0 0
    %1859 = vmatprep.subr.bf16.mxu0 0
    %1860 = vmatpush1.bf16.msra.mxu0 0
    %1861 = vmatprep.subr.bf16.mxu0 0
    %1862 = vmatpush1.bf16.msra.mxu0 0
    %1863 = vmatprep.subr.bf16.mxu0 0
    %1864 = vmatpush1.bf16.msra.mxu0 0
    %1865 = vmatprep.mubr.bf16.mxu0 0
    %1866 = vmatmul.mubr.bf16.gmra.mrb[0].mxu0 %v1607
    %v1867 = vpop.f32.mrb[0].mxu0
    %v1868 = vadd.f32 %v1621, %v1867
    %v1869 = vpop.f32.mrb[0].mxu0
    %v1870 = vadd.f32 %v1625, %v1869
    %v1871 = vpop.f32.mrb[0].mxu0
    %v1872 = vadd.f32 %v1621, %v1871
    %v1873 = vpop.f32.mrb[0].mxu0
    %v1874 = vadd.f32 %v1625, %v1873
    %1875 = vdwg.mxu0
    %v1876 = vmul.f32 %v1825, 0.5
    %v1877 = vmul.f32 %v1827, 0.5
    %v1878 = vmul.f32 %v1868, 0.5
    %v1879 = vmul.f32 %v1870, 0.5
    %v1880 = vmul.f32 %v1829, 0.5
    %v1881 = vmul.f32 %v1831, 0.5
    %v1882 = vmul.f32 %v1872, 0.5
    %v1883 = vmul.f32 %v1874, 0.5
    %v1884 = vmul.f32 %v1825, 0.70710677
    %v1885 = vmul.f32 %v1827, 0.70710677
    %v1886 = vmul.f32 %v1868, 0.70710677
    %v1887 = vmul.f32 %v1870, 0.70710677
    %v1888 = vmul.f32 %v1829, 0.70710677
    %v1889 = vmul.f32 %v1831, 0.70710677
    %v1890 = vmul.f32 %v1872, 0.70710677
    %v1891 = vmul.f32 %v1874, 0.70710677
    %v1892 = verf.f32.pop %v1884
    %v1893 = verf.f32.pop %v1885
    %v1894 = verf.f32.pop %v1886
    %v1895 = verf.f32.pop %v1887
    %v1896 = verf.f32.pop %v1888
    %v1897 = verf.f32.pop %v1889
    %v1898 = verf.f32.pop %v1890
    %v1899 = verf.f32.pop %v1891
    %v1900 = vadd.f32 %v1892, 1.0
    %v1901 = vadd.f32 %v1893, 1.0
    %v1902 = vadd.f32 %v1894, 1.0
    %v1903 = vadd.f32 %v1895, 1.0
    %v1904 = vadd.f32 %v1896, 1.0
    %v1905 = vadd.f32 %v1897, 1.0
    %v1906 = vadd.f32 %v1898, 1.0
    %v1907 = vadd.f32 %v1899, 1.0
    %v1908 = vmul.f32 %v1876, %v1900
    %v1909 = vmul.f32 %v1877, %v1901
    %v1910 = vmul.f32 %v1878, %v1902
    %v1911 = vmul.f32 %v1879, %v1903
    %v1912 = vmul.f32 %v1880, %v1904
    %v1913 = vmul.f32 %v1881, %v1905
    %v1914 = vmul.f32 %v1882, %v1906
    %v1915 = vmul.f32 %v1883, %v1907
    %v1916 = vpack.c.bf16 %v1912, %v1908
    %v1917 = vpack.c.bf16 %v1913, %v1909
    %v1918 = vpack.c.bf16 %v1914, %v1910
    %v1919 = vpack.c.bf16 %v1915, %v1911
    %v1920 = vld [vmem:[%s3 + $0x9] sm:$0x1]
    %v1921 = vlaneseq
    %v1922 = vshrl.u32 %v1921, 7
    %v1923 = vsub.s32 0, %v1922
    %v1924 = vrot.slane %v1920, %v1923
    %v1989 = vunpack.c.l.b16 %v604
    %v1990 = vunpack.c.l.b16 %v605
    %v1991 = vunpack.c.l.b16 %v606
    %v1992 = vunpack.c.l.b16 %v607
    %v1993 = vunpack.c.l.b16 %v608
    %v1994 = vunpack.c.l.b16 %v609
    %v1995 = vunpack.c.l.b16 %v610
    %v1996 = vunpack.c.l.b16 %v611
    %v1997 = vunpack.c.l.b16 %v612
    %v1998 = vunpack.c.l.b16 %v613
    %v1999 = vunpack.c.l.b16 %v614
    %v2000 = vunpack.c.l.b16 %v615
    %v2001 = vunpack.c.l.b16 %v616
    %v2002 = vunpack.c.l.b16 %v617
    %v2003 = vunpack.c.l.b16 %v618
    %v2004 = vunpack.c.l.b16 %v619
    %v2005 = vunpack.c.l.b16 %v620
    %v2006 = vunpack.c.l.b16 %v621
    %v2007 = vunpack.c.l.b16 %v622
    %v2008 = vunpack.c.l.b16 %v623
    %v2009 = vunpack.c.l.b16 %v624
    %v2010 = vunpack.c.l.b16 %v625
    %v2011 = vunpack.c.l.b16 %v626
    %v2012 = vunpack.c.l.b16 %v627
    %v2013 = vunpack.c.l.b16 %v628
    %v2014 = vunpack.c.l.b16 %v629
    %v2015 = vunpack.c.l.b16 %v630
    %v2016 = vunpack.c.l.b16 %v631
    %v2017 = vunpack.c.l.b16 %v632
    %v2018 = vunpack.c.l.b16 %v633
    %v2019 = vunpack.c.l.b16 %v634
    %v2020 = vunpack.c.l.b16 %v635
    %v2021 = vunpack.c.l.b16 %v636
    %v2022 = vunpack.c.l.b16 %v637
    %v2023 = vunpack.c.l.b16 %v638
    %v2024 = vunpack.c.l.b16 %v639
    %v2025 = vunpack.c.l.b16 %v640
    %v2026 = vunpack.c.l.b16 %v641
    %v2027 = vunpack.c.l.b16 %v642
    %v2028 = vunpack.c.l.b16 %v643
    %v2029 = vunpack.c.l.b16 %v644
    %v2030 = vunpack.c.l.b16 %v645
    %v2031 = vunpack.c.l.b16 %v646
    %v2032 = vunpack.c.l.b16 %v647
    %v2033 = vunpack.c.l.b16 %v648
    %v2034 = vunpack.c.l.b16 %v649
    %v2035 = vunpack.c.l.b16 %v650
    %v2036 = vunpack.c.l.b16 %v651
    %v2037 = vunpack.c.l.b16 %v652
    %v2038 = vunpack.c.l.b16 %v653
    %v2039 = vunpack.c.l.b16 %v654
    %v2040 = vunpack.c.l.b16 %v655
    %v2041 = vunpack.c.l.b16 %v656
    %v2042 = vunpack.c.l.b16 %v657
    %v2043 = vunpack.c.l.b16 %v658
    %v2044 = vunpack.c.l.b16 %v659
    %v2045 = vunpack.c.l.b16 %v660
    %v2046 = vunpack.c.l.b16 %v661
    %v2047 = vunpack.c.l.b16 %v662
    %v2048 = vunpack.c.l.b16 %v663
    %v2049 = vunpack.c.l.b16 %v664
    %v2050 = vunpack.c.l.b16 %v665
    %v2051 = vunpack.c.l.b16 %v666
    %v2052 = vunpack.c.l.b16 %v667
    %v2053 = vpack.c.b16 %v1990, %v1989
    %v2054 = vpack.c.b16 %v1992, %v1991
    %v2055 = vpack.c.b16 %v1994, %v1993
    %v2056 = vpack.c.b16 %v1996, %v1995
    %v2057 = vpack.c.b16 %v1998, %v1997
    %v2058 = vpack.c.b16 %v2000, %v1999
    %v2059 = vpack.c.b16 %v2002, %v2001
    %v2060 = vpack.c.b16 %v2004, %v2003
    %v2061 = vpack.c.b16 %v2006, %v2005
    %v2062 = vpack.c.b16 %v2008, %v2007
    %v2063 = vpack.c.b16 %v2010, %v2009
    %v2064 = vpack.c.b16 %v2012, %v2011
    %v2065 = vpack.c.b16 %v2014, %v2013
    %v2066 = vpack.c.b16 %v2016, %v2015
    %v2067 = vpack.c.b16 %v2018, %v2017
    %v2068 = vpack.c.b16 %v2020, %v2019
    %v2069 = vpack.c.b16 %v2022, %v2021
    %v2070 = vpack.c.b16 %v2024, %v2023
    %v2071 = vpack.c.b16 %v2026, %v2025
    %v2072 = vpack.c.b16 %v2028, %v2027
    %v2073 = vpack.c.b16 %v2030, %v2029
    %v2074 = vpack.c.b16 %v2032, %v2031
    %v2075 = vpack.c.b16 %v2034, %v2033
    %v2076 = vpack.c.b16 %v2036, %v2035
    %v2077 = vpack.c.b16 %v2038, %v2037
    %v2078 = vpack.c.b16 %v2040, %v2039
    %v2079 = vpack.c.b16 %v2042, %v2041
    %v2080 = vpack.c.b16 %v2044, %v2043
    %v2081 = vpack.c.b16 %v2046, %v2045
    %v2082 = vpack.c.b16 %v2048, %v2047
    %v2083 = vpack.c.b16 %v2050, %v2049
    %v2084 = vpack.c.b16 %v2052, %v2051
    %2117 = vmatprep.subr.bf16.mxu0 0
    %2118 = vmatpush1.bf16.msra.mxu0 %v2053
    %2119 = vmatprep.subr.bf16.mxu0 0
    %2120 = vmatpush1.bf16.msra.mxu0 %v2054
    %2121 = vmatprep.subr.bf16.mxu0 0
    %2122 = vmatpush1.bf16.msra.mxu0 %v2055
    %2123 = vmatprep.subr.bf16.mxu0 0
    %2124 = vmatpush1.bf16.msra.mxu0 %v2056
    %2125 = vmatprep.subr.bf16.mxu0 0
    %2126 = vmatpush1.bf16.msra.mxu0 %v2057
    %2127 = vmatprep.subr.bf16.mxu0 0
    %2128 = vmatpush1.bf16.msra.mxu0 %v2058
    %2129 = vmatprep.subr.bf16.mxu0 0
    %2130 = vmatpush1.bf16.msra.mxu0 %v2059
    %2131 = vmatprep.subr.bf16.mxu0 0
    %2132 = vmatpush1.bf16.msra.mxu0 %v2060
    %2133 = vmatprep.subr.bf16.mxu0 0
    %2134 = vmatpush1.bf16.msra.mxu0 %v2061
    %2135 = vmatprep.subr.bf16.mxu0 0
    %2136 = vmatpush1.bf16.msra.mxu0 %v2062
    %2137 = vmatprep.subr.bf16.mxu0 0
    %2138 = vmatpush1.bf16.msra.mxu0 %v2063
    %2139 = vmatprep.subr.bf16.mxu0 0
    %2140 = vmatpush1.bf16.msra.mxu0 %v2064
    %2141 = vmatprep.subr.bf16.mxu0 0
    %2142 = vmatpush1.bf16.msra.mxu0 %v2065
    %2143 = vmatprep.subr.bf16.mxu0 0
    %2144 = vmatpush1.bf16.msra.mxu0 %v2066
    %2145 = vmatprep.subr.bf16.mxu0 0
    %2146 = vmatpush1.bf16.msra.mxu0 %v2067
    %2147 = vmatprep.subr.bf16.mxu0 0
    %2148 = vmatpush1.bf16.msra.mxu0 %v2068
    %2149 = vmatprep.mubr.bf16.mxu0 %v1917
    %2150 = vmatmul.mubr.bf16.gmra.mrb[0].mxu0 %v1916
    %v2151 = vpop.f32.mrb[0].mxu0
    %v2152 = vadd.f32 %v1924, %v2151
    %v2153 = vpop.f32.mrb[0].mxu0
    %v2154 = vpop.f32.mrb[0].mxu0
    %v2155 = vadd.f32 %v1924, %v2154
    %v2156 = vpop.f32.mrb[0].mxu0
    %2157 = vdwg.mxu0
    %2158 = vmatprep.subr.bf16.mxu0 0
    %2159 = vmatpush1.bf16.msra.mxu0 %v2069
    %2160 = vmatprep.subr.bf16.mxu0 0
    %2161 = vmatpush1.bf16.msra.mxu0 %v2070
    %2162 = vmatprep.subr.bf16.mxu0 0
    %2163 = vmatpush1.bf16.msra.mxu0 %v2071
    %2164 = vmatprep.subr.bf16.mxu0 0
    %2165 = vmatpush1.bf16.msra.mxu0 %v2072
    %2166 = vmatprep.subr.bf16.mxu0 0
    %2167 = vmatpush1.bf16.msra.mxu0 %v2073
    %2168 = vmatprep.subr.bf16.mxu0 0
    %2169 = vmatpush1.bf16.msra.mxu0 %v2074
    %2170 = vmatprep.subr.bf16.mxu0 0
    %2171 = vmatpush1.bf16.msra.mxu0 %v2075
    %2172 = vmatprep.subr.bf16.mxu0 0
    %2173 = vmatpush1.bf16.msra.mxu0 %v2076
    %2174 = vmatprep.subr.bf16.mxu0 0
    %2175 = vmatpush1.bf16.msra.mxu0 %v2077
    %2176 = vmatprep.subr.bf16.mxu0 0
    %2177 = vmatpush1.bf16.msra.mxu0 %v2078
    %2178 = vmatprep.subr.bf16.mxu0 0
    %2179 = vmatpush1.bf16.msra.mxu0 %v2079
    %2180 = vmatprep.subr.bf16.mxu0 0
    %2181 = vmatpush1.bf16.msra.mxu0 %v2080
    %2182 = vmatprep.subr.bf16.mxu0 0
    %2183 = vmatpush1.bf16.msra.mxu0 %v2081
    %2184 = vmatprep.subr.bf16.mxu0 0
    %2185 = vmatpush1.bf16.msra.mxu0 %v2082
    %2186 = vmatprep.subr.bf16.mxu0 0
    %2187 = vmatpush1.bf16.msra.mxu0 %v2083
    %2188 = vmatprep.subr.bf16.mxu0 0
    %2189 = vmatpush1.bf16.msra.mxu0 %v2084
    %2190 = vmatprep.mubr.bf16.mxu0 %v1919
    %2191 = vmatmul.mubr.bf16.gmra.mrb[0].mxu0 %v1918
    %v2192 = vpop.f32.mrb[0].mxu0
    %v2193 = vadd.f32 %v2152, %v2192
    %v2194 = vpop.f32.mrb[0].mxu0
    %v2195 = vpop.f32.mrb[0].mxu0
    %v2196 = vadd.f32 %v2155, %v2195
    %v2197 = vpop.f32.mrb[0].mxu0
    %2198 = vdwg.mxu0
    %v2199 = vld [vmem:[%s3 + $0xa] sm:$0x1]
    %v2200 = vlaneseq
    %v2201 = vshrl.u32 %v2200, 7
    %v2202 = vsub.s32 0, %v2201
    %v2203 = vrot.slane %v2199, %v2202
    %v2204 = vmul.f32 %v2193, %v2203
    %v2205 = vmul.f32 %v2196, %v2203
    %v2206 = vadd.f32 %v1569, %v2204
    %v2207 = vadd.f32 %v1570, %v2205
    %s2208 = scalar_lea.vmem %s6, 512
    %v2209 = vld [vmem:[%s2208] sm:$0xff]
    %v2210 = vld [vmem:[%s2208 + $0x8] sm:$0xff]
    %v2211 = vld [vmem:[%s2208 + $0x10] sm:$0xff]
    %v2212 = vld [vmem:[%s2208 + $0x18] sm:$0xff]
    %v2213 = vld [vmem:[%s2208 + $0x20] sm:$0xff]
    %v2214 = vld [vmem:[%s2208 + $0x28] sm:$0xff]
    %v2215 = vld [vmem:[%s2208 + $0x30] sm:$0xff]
    %v2216 = vld [vmem:[%s2208 + $0x38] sm:$0xff]
    %v2217 = vld [vmem:[%s2208 + $0x40] sm:$0xff]
    %v2218 = vld [vmem:[%s2208 + $0x48] sm:$0xff]
    %v2219 = vld [vmem:[%s2208 + $0x50] sm:$0xff]
    %v2220 = vld [vmem:[%s2208 + $0x58] sm:$0xff]
    %v2221 = vld [vmem:[%s2208 + $0x60] sm:$0xff]
    %v2222 = vld [vmem:[%s2208 + $0x68] sm:$0xff]
    %v2223 = vld [vmem:[%s2208 + $0x70] sm:$0xff]
    %v2224 = vld [vmem:[%s2208 + $0x78] sm:$0xff]
    %v2225 = vld [vmem:[%s2208 + $0x80] sm:$0xff]
    %v2226 = vld [vmem:[%s2208 + $0x88] sm:$0xff]
    %v2227 = vld [vmem:[%s2208 + $0x90] sm:$0xff]
    %v2228 = vld [vmem:[%s2208 + $0x98] sm:$0xff]
    %v2229 = vld [vmem:[%s2208 + $0xa0] sm:$0xff]
    %v2230 = vld [vmem:[%s2208 + $0xa8] sm:$0xff]
    %v2231 = vld [vmem:[%s2208 + $0xb0] sm:$0xff]
    %v2232 = vld [vmem:[%s2208 + $0xb8] sm:$0xff]
    %v2233 = vld [vmem:[%s2208 + $0xc0] sm:$0xff]
    %v2234 = vld [vmem:[%s2208 + $0xc8] sm:$0xff]
    %v2235 = vld [vmem:[%s2208 + $0xd0] sm:$0xff]
    %v2236 = vld [vmem:[%s2208 + $0xd8] sm:$0xff]
    %v2237 = vld [vmem:[%s2208 + $0xe0] sm:$0xff]
    %v2238 = vld [vmem:[%s2208 + $0xe8] sm:$0xff]
    %v2239 = vld [vmem:[%s2208 + $0xf0] sm:$0xff]
    %v2240 = vld [vmem:[%s2208 + $0xf8] sm:$0xff]
    %v2241 = vld [vmem:[%s2208 + $0x100] sm:$0xff]
    %v2242 = vld [vmem:[%s2208 + $0x108] sm:$0xff]
    %v2243 = vld [vmem:[%s2208 + $0x110] sm:$0xff]
    %v2244 = vld [vmem:[%s2208 + $0x118] sm:$0xff]
    %v2245 = vld [vmem:[%s2208 + $0x120] sm:$0xff]
    %v2246 = vld [vmem:[%s2208 + $0x128] sm:$0xff]
    %v2247 = vld [vmem:[%s2208 + $0x130] sm:$0xff]
    %v2248 = vld [vmem:[%s2208 + $0x138] sm:$0xff]
    %v2249 = vld [vmem:[%s2208 + $0x140] sm:$0xff]
    %v2250 = vld [vmem:[%s2208 + $0x148] sm:$0xff]
    %v2251 = vld [vmem:[%s2208 + $0x150] sm:$0xff]
    %v2252 = vld [vmem:[%s2208 + $0x158] sm:$0xff]
    %v2253 = vld [vmem:[%s2208 + $0x160] sm:$0xff]
    %v2254 = vld [vmem:[%s2208 + $0x168] sm:$0xff]
    %v2255 = vld [vmem:[%s2208 + $0x170] sm:$0xff]
    %v2256 = vld [vmem:[%s2208 + $0x178] sm:$0xff]
    %v2257 = vld [vmem:[%s2208 + $0x180] sm:$0xff]
    %v2258 = vld [vmem:[%s2208 + $0x188] sm:$0xff]
    %v2259 = vld [vmem:[%s2208 + $0x190] sm:$0xff]
    %v2260 = vld [vmem:[%s2208 + $0x198] sm:$0xff]
    %v2261 = vld [vmem:[%s2208 + $0x1a0] sm:$0xff]
    %v2262 = vld [vmem:[%s2208 + $0x1a8] sm:$0xff]
    %v2263 = vld [vmem:[%s2208 + $0x1b0] sm:$0xff]
    %v2264 = vld [vmem:[%s2208 + $0x1b8] sm:$0xff]
    %v2265 = vld [vmem:[%s2208 + $0x1c0] sm:$0xff]
    %v2266 = vld [vmem:[%s2208 + $0x1c8] sm:$0xff]
    %v2267 = vld [vmem:[%s2208 + $0x1d0] sm:$0xff]
    %v2268 = vld [vmem:[%s2208 + $0x1d8] sm:$0xff]
    %v2269 = vld [vmem:[%s2208 + $0x1e0] sm:$0xff]
    %v2270 = vld [vmem:[%s2208 + $0x1e8] sm:$0xff]
    %v2271 = vld [vmem:[%s2208 + $0x1f0] sm:$0xff]
    %v2272 = vld [vmem:[%s2208 + $0x1f8] sm:$0xff]
    %s2273 = scalar_lea.vmem [#allocation5], 256
    %v2274 = vld [vmem:[%s2273] sm:$0xf]
    %v2275 = vld [vmem:[%s2273 + $0x4] sm:$0xf]
    %v2276 = vld [vmem:[%s2273 + $0x8] sm:$0xf]
    %v2277 = vld [vmem:[%s2273 + $0xc] sm:$0xf]
    %v2278 = vld [vmem:[%s2273 + $0x10] sm:$0xf]
    %v2279 = vld [vmem:[%s2273 + $0x14] sm:$0xf]
    %v2280 = vld [vmem:[%s2273 + $0x18] sm:$0xf]
    %v2281 = vld [vmem:[%s2273 + $0x1c] sm:$0xf]
    %v2282 = vld [vmem:[%s2273 + $0x20] sm:$0xf]
    %v2283 = vld [vmem:[%s2273 + $0x24] sm:$0xf]
    %v2284 = vld [vmem:[%s2273 + $0x28] sm:$0xf]
    %v2285 = vld [vmem:[%s2273 + $0x2c] sm:$0xf]
    %v2286 = vld [vmem:[%s2273 + $0x30] sm:$0xf]
    %v2287 = vld [vmem:[%s2273 + $0x34] sm:$0xf]
    %v2288 = vld [vmem:[%s2273 + $0x38] sm:$0xf]
    %v2289 = vld [vmem:[%s2273 + $0x3c] sm:$0xf]
    %v2290 = vld [vmem:[%s2273 + $0x40] sm:$0xf]
    %v2291 = vld [vmem:[%s2273 + $0x44] sm:$0xf]
    %v2292 = vld [vmem:[%s2273 + $0x48] sm:$0xf]
    %v2293 = vld [vmem:[%s2273 + $0x4c] sm:$0xf]
    %v2294 = vld [vmem:[%s2273 + $0x50] sm:$0xf]
    %v2295 = vld [vmem:[%s2273 + $0x54] sm:$0xf]
    %v2296 = vld [vmem:[%s2273 + $0x58] sm:$0xf]
    %v2297 = vld [vmem:[%s2273 + $0x5c] sm:$0xf]
    %v2298 = vld [vmem:[%s2273 + $0x60] sm:$0xf]
    %v2299 = vld [vmem:[%s2273 + $0x64] sm:$0xf]
    %v2300 = vld [vmem:[%s2273 + $0x68] sm:$0xf]
    %v2301 = vld [vmem:[%s2273 + $0x6c] sm:$0xf]
    %v2302 = vld [vmem:[%s2273 + $0x70] sm:$0xf]
    %v2303 = vld [vmem:[%s2273 + $0x74] sm:$0xf]
    %v2304 = vld [vmem:[%s2273 + $0x78] sm:$0xf]
    %v2305 = vld [vmem:[%s2273 + $0x7c] sm:$0xf]
    %v2306 = vld [vmem:[%s2273 + $0x80] sm:$0xf]
    %v2307 = vld [vmem:[%s2273 + $0x84] sm:$0xf]
    %v2308 = vld [vmem:[%s2273 + $0x88] sm:$0xf]
    %v2309 = vld [vmem:[%s2273 + $0x8c] sm:$0xf]
    %v2310 = vld [vmem:[%s2273 + $0x90] sm:$0xf]
    %v2311 = vld [vmem:[%s2273 + $0x94] sm:$0xf]
    %v2312 = vld [vmem:[%s2273 + $0x98] sm:$0xf]
    %v2313 = vld [vmem:[%s2273 + $0x9c] sm:$0xf]
    %v2314 = vld [vmem:[%s2273 + $0xa0] sm:$0xf]
    %v2315 = vld [vmem:[%s2273 + $0xa4] sm:$0xf]
    %v2316 = vld [vmem:[%s2273 + $0xa8] sm:$0xf]
    %v2317 = vld [vmem:[%s2273 + $0xac] sm:$0xf]
    %v2318 = vld [vmem:[%s2273 + $0xb0] sm:$0xf]
    %v2319 = vld [vmem:[%s2273 + $0xb4] sm:$0xf]
    %v2320 = vld [vmem:[%s2273 + $0xb8] sm:$0xf]
    %v2321 = vld [vmem:[%s2273 + $0xbc] sm:$0xf]
    %v2322 = vld [vmem:[%s2273 + $0xc0] sm:$0xf]
    %v2323 = vld [vmem:[%s2273 + $0xc4] sm:$0xf]
    %v2324 = vld [vmem:[%s2273 + $0xc8] sm:$0xf]
    %v2325 = vld [vmem:[%s2273 + $0xcc] sm:$0xf]
    %v2326 = vld [vmem:[%s2273 + $0xd0] sm:$0xf]
    %v2327 = vld [vmem:[%s2273 + $0xd4] sm:$0xf]
    %v2328 = vld [vmem:[%s2273 + $0xd8] sm:$0xf]
    %v2329 = vld [vmem:[%s2273 + $0xdc] sm:$0xf]
    %v2330 = vld [vmem:[%s2273 + $0xe0] sm:$0xf]
    %v2331 = vld [vmem:[%s2273 + $0xe4] sm:$0xf]
    %v2332 = vld [vmem:[%s2273 + $0xe8] sm:$0xf]
    %v2333 = vld [vmem:[%s2273 + $0xec] sm:$0xf]
    %v2334 = vld [vmem:[%s2273 + $0xf0] sm:$0xf]
    %v2335 = vld [vmem:[%s2273 + $0xf4] sm:$0xf]
    %v2336 = vld [vmem:[%s2273 + $0xf8] sm:$0xf]
    %v2337 = vld [vmem:[%s2273 + $0xfc] sm:$0xf]
    %v2338 = vld [vmem:[%s3 + $0xb] sm:$0x1]
    %v2339 = vld [vmem:[%s3 + $0xc] sm:$0x1]
    %2340 = vadd.xlane.f32.xlu0 %v2206
    %v2341 = vpop.xlane.xlu0 %2340
    %2342 = vadd.xlane.f32.xlu0 %v2207
    %v2343 = vpop.xlane.xlu0 %2342
    %v2344 = vmul.f32 %v2341, %v674
    %v2345 = vmul.f32 %v2343, %v674
    %v2346 = vsub.f32 %v2206, %v2344
    %v2347 = vsub.f32 %v2207, %v2345
    %v2348 = vmul.f32 %v2346, %v2346
    %v2349 = vmul.f32 %v2347, %v2347
    %2350 = vadd.xlane.f32.xlu0 %v2348
    %v2351 = vpop.xlane.xlu0 %2350
    %2352 = vadd.xlane.f32.xlu0 %v2349
    %v2353 = vpop.xlane.xlu0 %2352
    %v2354 = vmul.f32 %v2351, %v674
    %v2355 = vmul.f32 %v2353, %v674
    %v2356 = vadd.f32 %v2354, 1e-06
    %v2357 = vadd.f32 %v2355, 1e-06
    %v2358 = vrsqrt.pop %v2356
    %v2359 = vrsqrt.pop %v2357
    %v2360 = vmul.f32 %v2346, %v2358
    %v2361 = vmul.f32 %v2347, %v2359
    %v2362 = vlaneseq
    %v2363 = vshrl.u32 %v2362, 7
    %v2364 = vsub.s32 0, %v2363
    %v2365 = vrot.slane %v2338, %v2364
    %v2366 = vmul.f32 %v2360, %v2365
    %v2367 = vmul.f32 %v2361, %v2365
    %v2368 = vlaneseq
    %v2369 = vshrl.u32 %v2368, 7
    %v2370 = vsub.s32 0, %v2369
    %v2371 = vrot.slane %v2339, %v2370
    %v2372 = vadd.f32 %v2366, %v2371
    %v2373 = vadd.f32 %v2367, %v2371
    %v2374 = vpack.c.bf16 %v2373, %v2372
    %v2407 = vunpack.c.l.b16 %v2209
    %v2408 = vunpack.c.h.b16 %v2209
    %v2409 = vunpack.c.l.b16 %v2210
    %v2410 = vunpack.c.l.b16 %v2213
    %v2411 = vunpack.c.h.b16 %v2213
    %v2412 = vunpack.c.l.b16 %v2214
    %v2413 = vunpack.c.l.b16 %v2217
    %v2414 = vunpack.c.h.b16 %v2217
    %v2415 = vunpack.c.l.b16 %v2218
    %v2416 = vunpack.c.l.b16 %v2221
    %v2417 = vunpack.c.h.b16 %v2221
    %v2418 = vunpack.c.l.b16 %v2222
    %v2419 = vunpack.c.l.b16 %v2225
    %v2420 = vunpack.c.h.b16 %v2225
    %v2421 = vunpack.c.l.b16 %v2226
    %v2422 = vunpack.c.l.b16 %v2229
    %v2423 = vunpack.c.h.b16 %v2229
    %v2424 = vunpack.c.l.b16 %v2230
    %v2425 = vunpack.c.l.b16 %v2233
    %v2426 = vunpack.c.h.b16 %v2233
    %v2427 = vunpack.c.l.b16 %v2234
    %v2428 = vunpack.c.l.b16 %v2237
    %v2429 = vunpack.c.h.b16 %v2237
    %v2430 = vunpack.c.l.b16 %v2238
    %v2431 = vunpack.c.l.b16 %v2241
    %v2432 = vunpack.c.h.b16 %v2241
    %v2433 = vunpack.c.l.b16 %v2242
    %v2434 = vunpack.c.l.b16 %v2245
    %v2435 = vunpack.c.h.b16 %v2245
    %v2436 = vunpack.c.l.b16 %v2246
    %v2437 = vunpack.c.l.b16 %v2249
    %v2438 = vunpack.c.h.b16 %v2249
    %v2439 = vunpack.c.l.b16 %v2250
    %v2440 = vunpack.c.l.b16 %v2253
    %v2441 = vunpack.c.h.b16 %v2253
    %v2442 = vunpack.c.l.b16 %v2254
    %v2443 = vunpack.c.l.b16 %v2257
    %v2444 = vunpack.c.h.b16 %v2257
    %v2445 = vunpack.c.l.b16 %v2258
    %v2446 = vunpack.c.l.b16 %v2261
    %v2447 = vunpack.c.h.b16 %v2261
    %v2448 = vunpack.c.l.b16 %v2262
    %v2449 = vunpack.c.l.b16 %v2265
    %v2450 = vunpack.c.h.b16 %v2265
    %v2451 = vunpack.c.l.b16 %v2266
    %v2452 = vunpack.c.l.b16 %v2269
    %v2453 = vunpack.c.h.b16 %v2269
    %v2454 = vunpack.c.l.b16 %v2270
    %v2455 = vpack.c.b16 %v2410, %v2407
    %v2456 = vpack.c.b16 %v2411, %v2408
    %v2457 = vpack.c.b16 %v2412, %v2409
    %v2458 = vpack.c.b16 %v2416, %v2413
    %v2459 = vpack.c.b16 %v2417, %v2414
    %v2460 = vpack.c.b16 %v2418, %v2415
    %v2461 = vpack.c.b16 %v2422, %v2419
    %v2462 = vpack.c.b16 %v2423, %v2420
    %v2463 = vpack.c.b16 %v2424, %v2421
    %v2464 = vpack.c.b16 %v2428, %v2425
    %v2465 = vpack.c.b16 %v2429, %v2426
    %v2466 = vpack.c.b16 %v2430, %v2427
    %v2467 = vpack.c.b16 %v2434, %v2431
    %v2468 = vpack.c.b16 %v2435, %v2432
    %v2469 = vpack.c.b16 %v2436, %v2433
    %v2470 = vpack.c.b16 %v2440, %v2437
    %v2471 = vpack.c.b16 %v2441, %v2438
    %v2472 = vpack.c.b16 %v2442, %v2439
    %v2473 = vpack.c.b16 %v2446, %v2443
    %v2474 = vpack.c.b16 %v2447, %v2444
    %v2475 = vpack.c.b16 %v2448, %v2445
    %v2476 = vpack.c.b16 %v2452, %v2449
    %v2477 = vpack.c.b16 %v2453, %v2450
    %v2478 = vpack.c.b16 %v2454, %v2451
    %2503 = vmatprep.subr.bf16.mxu0 %v2456
    %2504 = vmatpush1.bf16.msra.mxu0 %v2455
    %2505 = vmatprep.subr.bf16.mxu0 %v2459
    %2506 = vmatpush1.bf16.msra.mxu0 %v2458
    %2507 = vmatprep.subr.bf16.mxu0 %v2462
    %2508 = vmatpush1.bf16.msra.mxu0 %v2461
    %2509 = vmatprep.subr.bf16.mxu0 %v2465
    %2510 = vmatpush1.bf16.msra.mxu0 %v2464
    %2511 = vmatprep.subr.bf16.mxu0 %v2468
    %2512 = vmatpush1.bf16.msra.mxu0 %v2467
    %2513 = vmatprep.subr.bf16.mxu0 %v2471
    %2514 = vmatpush1.bf16.msra.mxu0 %v2470
    %2515 = vmatprep.subr.bf16.mxu0 %v2474
    %2516 = vmatpush1.bf16.msra.mxu0 %v2473
    %2517 = vmatprep.subr.bf16.mxu0 %v2477
    %2518 = vmatpush1.bf16.msra.mxu0 %v2476
    %2519 = vmatprep.subr.bf16.mxu0 0
    %2520 = vmatpush1.bf16.msra.mxu0 0
    %2521 = vmatprep.subr.bf16.mxu0 0
    %2522 = vmatpush1.bf16.msra.mxu0 0
    %2523 = vmatprep.subr.bf16.mxu0 0
    %2524 = vmatpush1.bf16.msra.mxu0 0
    %2525 = vmatprep.subr.bf16.mxu0 0
    %2526 = vmatpush1.bf16.msra.mxu0 0
    %2527 = vmatprep.subr.bf16.mxu0 0
    %2528 = vmatpush1.bf16.msra.mxu0 0
    %2529 = vmatprep.subr.bf16.mxu0 0
    %2530 = vmatpush1.bf16.msra.mxu0 0
    %2531 = vmatprep.subr.bf16.mxu0 0
    %2532 = vmatpush1.bf16.msra.mxu0 0
    %2533 = vmatprep.subr.bf16.mxu0 0
    %2534 = vmatpush1.bf16.msra.mxu0 0
    %2535 = vmatprep.mubr.bf16.mxu0 0
    %2536 = vmatmul.mubr.bf16.gmra.mrb[0].mxu0 %v2374
    %v2537 = vpop.f32.mrb[0].mxu0
    %v2538 = vadd.f32 0.0, %v2537
    %v2539 = vpop.f32.mrb[0].mxu0
    %v2540 = vadd.f32 0.0, %v2539
    %v2541 = vpop.f32.mrb[0].mxu0
    %v2542 = vadd.f32 0.0, %v2541
    %v2543 = vpop.f32.mrb[0].mxu0
    %v2544 = vadd.f32 0.0, %v2543
    %2545 = vdwg.mxu0
    %2546 = vmatprep.subr.bf16.mxu0 0
    %2547 = vmatpush1.bf16.msra.mxu0 %v2457
    %2548 = vmatprep.subr.bf16.mxu0 0
    %2549 = vmatpush1.bf16.msra.mxu0 %v2460
    %2550 = vmatprep.subr.bf16.mxu0 0
    %2551 = vmatpush1.bf16.msra.mxu0 %v2463
    %2552 = vmatprep.subr.bf16.mxu0 0
    %2553 = vmatpush1.bf16.msra.mxu0 %v2466
    %2554 = vmatprep.subr.bf16.mxu0 0
    %2555 = vmatpush1.bf16.msra.mxu0 %v2469
    %2556 = vmatprep.subr.bf16.mxu0 0
    %2557 = vmatpush1.bf16.msra.mxu0 %v2472
    %2558 = vmatprep.subr.bf16.mxu0 0
    %2559 = vmatpush1.bf16.msra.mxu0 %v2475
    %2560 = vmatprep.subr.bf16.mxu0 0
    %2561 = vmatpush1.bf16.msra.mxu0 %v2478
    %2562 = vmatprep.subr.bf16.mxu0 0
    %2563 = vmatpush1.bf16.msra.mxu0 0
    %2564 = vmatprep.subr.bf16.mxu0 0
    %2565 = vmatpush1.bf16.msra.mxu0 0
    %2566 = vmatprep.subr.bf16.mxu0 0
    %2567 = vmatpush1.bf16.msra.mxu0 0
    %2568 = vmatprep.subr.bf16.mxu0 0
    %2569 = vmatpush1.bf16.msra.mxu0 0
    %2570 = vmatprep.subr.bf16.mxu0 0
    %2571 = vmatpush1.bf16.msra.mxu0 0
    %2572 = vmatprep.subr.bf16.mxu0 0
    %2573 = vmatpush1.bf16.msra.mxu0 0
    %2574 = vmatprep.subr.bf16.mxu0 0
    %2575 = vmatpush1.bf16.msra.mxu0 0
    %2576 = vmatprep.subr.bf16.mxu0 0
    %2577 = vmatpush1.bf16.msra.mxu0 0
    %2578 = vmatprep.mubr.bf16.mxu0 0
    %2579 = vmatmul.mubr.bf16.gmra.mrb[0].mxu0 %v2374
    %v2580 = vpop.f32.mrb[0].mxu0
    %v2581 = vadd.f32 0.0, %v2580
    %v2582 = vpop.f32.mrb[0].mxu0
    %v2583 = vpop.f32.mrb[0].mxu0
    %v2584 = vadd.f32 0.0, %v2583
    %v2585 = vpop.f32.mrb[0].mxu0
    %2586 = vdwg.mxu0
    %v2587 = vld [vmem:[%s3 + $0xd] sm:$0x1]
    %v2588 = vlaneseq
    %v2589 = vshrl.u32 %v2588, 7
    %v2590 = vsub.s32 0, %v2589
    %v2591 = vrot.slane %v2587, %v2590
    %v2592 = vadd.f32 %v2538, %v2591
    %v2593 = vadd.f32 %v2542, %v2591
    %v2594 = vmul.f32 %v2592, 0.17677669
    %v2595 = vmul.f32 %v2593, 0.17677669
    %v2596 = vld [vmem:[%s3 + $0xe] sm:$0x1]
    %v2597 = vlaneseq
    %v2598 = vshrl.u32 %v2597, 7
    %v2599 = vsub.s32 0, %v2598
    %v2600 = vrot.slane %v2596, %v2599
    %v2601 = vadd.f32 %v2540, %v2600
    %v2602 = vadd.f32 %v2544, %v2600
    %v2603 = vld [vmem:[%s3 + $0xf] sm:$0x1]
    %v2604 = vlaneseq
    %v2605 = vshrl.u32 %v2604, 7
    %v2606 = vsub.s32 0, %v2605
    %v2607 = vrot.slane %v2603, %v2606
    %v2608 = vadd.f32 %v2581, %v2607
    %v2609 = vadd.f32 %v2584, %v2607
    %v2610 = vpack.c.bf16 %v2595, %v2594
    %2611 = vxpose.xlu0.b32.start [1/16] %v2601, 128
    %2612 = vxpose.xlu0.b32.cont [2/16] %v2602, 128
    %2613 = vxpose.xlu0.b32.cont [3/16] 0.0, 128
    %2614 = vxpose.xlu0.b32.cont [4/16] 0.0, 128
    %2615 = vxpose.xlu0.b32.cont [5/16] 0.0, 128
    %2616 = vxpose.xlu0.b32.cont [6/16] 0.0, 128
    %2617 = vxpose.xlu0.b32.cont [7/16] 0.0, 128
    %2618 = vxpose.xlu0.b32.cont [8/16] 0.0, 128
    %2619 = vxpose.xlu0.b32.cont [9/16] 0.0, 128
    %2620 = vxpose.xlu0.b32.cont [10/16] 0.0, 128
    %2621 = vxpose.xlu0.b32.cont [11/16] 0.0, 128
    %2622 = vxpose.xlu0.b32.cont [12/16] 0.0, 128
    %2623 = vxpose.xlu0.b32.cont [13/16] 0.0, 128
    %2624 = vxpose.xlu0.b32.cont [14/16] 0.0, 128
    %2625 = vxpose.xlu0.b32.cont [15/16] 0.0, 128
    %2626 = vxpose.xlu0.b32.end [16/16] 0.0, 128
    %v2627 = vpop.trf.xlu0
    %v2628 = vpop.trf.xlu0
    %v2629 = vpop.trf.xlu0
    %v2630 = vpop.trf.xlu0
    %v2631 = vpop.trf.xlu0
    %v2632 = vpop.trf.xlu0
    %v2633 = vpop.trf.xlu0
    %v2634 = vpop.trf.xlu0
    %v2635 = vpop.trf.xlu0
    %v2636 = vpop.trf.xlu0
    %v2637 = vpop.trf.xlu0
    %v2638 = vpop.trf.xlu0
    %v2639 = vpop.trf.xlu0
    %v2640 = vpop.trf.xlu0
    %v2641 = vpop.trf.xlu0
    %v2642 = vpop.trf.xlu0
    %v2643 = vpack.c.bf16 %v2628, %v2627
    %v2644 = vpack.c.bf16 %v2630, %v2629
    %v2645 = vpack.c.bf16 %v2632, %v2631
    %v2646 = vpack.c.bf16 %v2634, %v2633
    %v2647 = vpack.c.bf16 %v2636, %v2635
    %v2648 = vpack.c.bf16 %v2638, %v2637
    %v2649 = vpack.c.bf16 %v2640, %v2639
    %v2650 = vpack.c.bf16 %v2642, %v2641
    %v2651 = vpack.c.bf16 %v2609, %v2608
    %v2653 = vsel %vm983, %v2610, 0
    %2655 = vmatprep.subr.bf16.mxu0 0
    %2656 = vmatpush1.bf16.msra.mxu0 %v2643
    %2657 = vmatprep.subr.bf16.mxu0 0
    %2658 = vmatpush1.bf16.msra.mxu0 %v2644
    %2659 = vmatprep.subr.bf16.mxu0 0
    %2660 = vmatpush1.bf16.msra.mxu0 0
    %2661 = vmatprep.subr.bf16.mxu0 0
    %2662 = vmatpush1.bf16.msra.mxu0 0
    %2663 = vmatprep.subr.bf16.mxu0 0
    %2664 = vmatpush1.bf16.msra.mxu0 0
    %2665 = vmatprep.subr.bf16.mxu0 0
    %2666 = vmatpush1.bf16.msra.mxu0 0
    %2667 = vmatprep.subr.bf16.mxu0 0
    %2668 = vmatpush1.bf16.msra.mxu0 0
    %2669 = vmatprep.subr.bf16.mxu0 0
    %2670 = vmatpush1.bf16.msra.mxu0 0
    %2671 = vmatprep.subr.bf16.mxu0 0
    %2672 = vmatpush1.bf16.msra.mxu0 0
    %2673 = vmatprep.subr.bf16.mxu0 0
    %2674 = vmatpush1.bf16.msra.mxu0 0
    %2675 = vmatprep.subr.bf16.mxu0 0
    %2676 = vmatpush1.bf16.msra.mxu0 0
    %2677 = vmatprep.subr.bf16.mxu0 0
    %2678 = vmatpush1.bf16.msra.mxu0 0
    %2679 = vmatprep.subr.bf16.mxu0 0
    %2680 = vmatpush1.bf16.msra.mxu0 0
    %2681 = vmatprep.subr.bf16.mxu0 0
    %2682 = vmatpush1.bf16.msra.mxu0 0
    %2683 = vmatprep.subr.bf16.mxu0 0
    %2684 = vmatpush1.bf16.msra.mxu0 0
    %2685 = vmatprep.subr.bf16.mxu0 0
    %2686 = vmatpush1.bf16.msra.mxu0 0
    %2687 = vmatprep.mubr.bf16.mxu0 0
    %2688 = vmatmul.mubr.bf16.gmra.mrb[0].mxu0 %v2653
    %v2689 = vpop.f32.mrb[0].mxu0
    %v2690 = vadd.f32 %v538, %v2689
    %v2691 = vpop.f32.mrb[0].mxu0
    %v2692 = vpop.f32.mrb[0].mxu0
    %v2693 = vadd.f32 %v539, %v2692
    %v2694 = vpop.f32.mrb[0].mxu0
    %2695 = vdwg.mxu0
    %v2696 = vsel %vm1028, %v2690, -inf
    %2697 = vmax.xlane.f32.xlu0 %v2696
    %v2698 = vpop.xlane.xlu0 %2697
    %v2699 = vsel %vm1028, %v2693, -inf
    %2700 = vmax.xlane.f32.xlu0 %v2699
    %v2701 = vpop.xlane.xlu0 %2700
    %v2702 = vsub.f32 %v2690, %v2698
    %v2703 = vsub.f32 %v2693, %v2701
    %v2704 = vmul.f32 %v2702, 1.442695
    %v2705 = vpow.pop %v2704
    %v2706 = vmul.f32 %v2703, 1.442695
    %v2707 = vpow.pop %v2706
    %v2708 = vsel %vm1028, %v2705, 0.0
    %2709 = vadd.xlane.f32.xlu0 %v2708
    %v2710 = vpop.xlane.xlu0 %2709
    %v2711 = vsel %vm1028, %v2707, 0.0
    %2712 = vadd.xlane.f32.xlu0 %v2711
    %v2713 = vpop.xlane.xlu0 %2712
    %v2714 = vrcp.pop %v2710
    %v2715 = vrcp.pop %v2713
    %v2716 = vmul.f32 %v2705, %v2714
    %v2717 = vmul.f32 %v2707, %v2715
    %v2718 = vpack.c.bf16 %v2717, %v2716
    %v2720 = vsel %vm1028, %v2718, 0
    %2722 = vmatprep.subr.bf16.mxu0 0
    %2723 = vmatpush1.bf16.msra.mxu0 %v2651
    %2724 = vmatprep.subr.bf16.mxu0 0
    %2725 = vmatpush1.bf16.msra.mxu0 0
    %2726 = vmatprep.subr.bf16.mxu0 0
    %2727 = vmatpush1.bf16.msra.mxu0 0
    %2728 = vmatprep.subr.bf16.mxu0 0
    %2729 = vmatpush1.bf16.msra.mxu0 0
    %2730 = vmatprep.subr.bf16.mxu0 0
    %2731 = vmatpush1.bf16.msra.mxu0 0
    %2732 = vmatprep.subr.bf16.mxu0 0
    %2733 = vmatpush1.bf16.msra.mxu0 0
    %2734 = vmatprep.subr.bf16.mxu0 0
    %2735 = vmatpush1.bf16.msra.mxu0 0
    %2736 = vmatprep.subr.bf16.mxu0 0
    %2737 = vmatpush1.bf16.msra.mxu0 0
    %2738 = vmatprep.subr.bf16.mxu0 0
    %2739 = vmatpush1.bf16.msra.mxu0 0
    %2740 = vmatprep.subr.bf16.mxu0 0
    %2741 = vmatpush1.bf16.msra.mxu0 0
    %2742 = vmatprep.subr.bf16.mxu0 0
    %2743 = vmatpush1.bf16.msra.mxu0 0
    %2744 = vmatprep.subr.bf16.mxu0 0
    %2745 = vmatpush1.bf16.msra.mxu0 0
    %2746 = vmatprep.subr.bf16.mxu0 0
    %2747 = vmatpush1.bf16.msra.mxu0 0
    %2748 = vmatprep.subr.bf16.mxu0 0
    %2749 = vmatpush1.bf16.msra.mxu0 0
    %2750 = vmatprep.subr.bf16.mxu0 0
    %2751 = vmatpush1.bf16.msra.mxu0 0
    %2752 = vmatprep.subr.bf16.mxu0 0
    %2753 = vmatpush1.bf16.msra.mxu0 0
    %2754 = vmatprep.mubr.bf16.mxu0 0
    %2755 = vmatmul.mubr.bf16.gmra.mrb[0].mxu0 %v2720
    %v2756 = vpop.f32.mrb[0].mxu0
    %v2757 = vadd.f32 0.0, %v2756
    %v2758 = vpop.f32.mrb[0].mxu0
    %v2759 = vpop.f32.mrb[0].mxu0
    %v2760 = vadd.f32 0.0, %v2759
    %v2761 = vpop.f32.mrb[0].mxu0
    %2762 = vdwg.mxu0
    %2763 = vst.msk [vmem:[#allocation2] sm:$0xff] %vm983, %v2757
    %2764 = vst.msk [vmem:[#allocation2 + $0x8] sm:$0xff] %vm983, %v2760
    %2766 = vrot.lane.b32.xlu0 %v2610, 96
    %v2767 = vpop.permute.xlu0 %2766
    %v2769 = vsel %vm983, %v2767, 0
    %2771 = vmatprep.subr.bf16.mxu0 0
    %2772 = vmatpush1.bf16.msra.mxu0 %v2645
    %2773 = vmatprep.subr.bf16.mxu0 0
    %2774 = vmatpush1.bf16.msra.mxu0 %v2646
    %2775 = vmatprep.subr.bf16.mxu0 0
    %2776 = vmatpush1.bf16.msra.mxu0 0
    %2777 = vmatprep.subr.bf16.mxu0 0
    %2778 = vmatpush1.bf16.msra.mxu0 0
    %2779 = vmatprep.subr.bf16.mxu0 0
    %2780 = vmatpush1.bf16.msra.mxu0 0
    %2781 = vmatprep.subr.bf16.mxu0 0
    %2782 = vmatpush1.bf16.msra.mxu0 0
    %2783 = vmatprep.subr.bf16.mxu0 0
    %2784 = vmatpush1.bf16.msra.mxu0 0
    %2785 = vmatprep.subr.bf16.mxu0 0
    %2786 = vmatpush1.bf16.msra.mxu0 0
    %2787 = vmatprep.subr.bf16.mxu0 0
    %2788 = vmatpush1.bf16.msra.mxu0 0
    %2789 = vmatprep.subr.bf16.mxu0 0
    %2790 = vmatpush1.bf16.msra.mxu0 0
    %2791 = vmatprep.subr.bf16.mxu0 0
    %2792 = vmatpush1.bf16.msra.mxu0 0
    %2793 = vmatprep.subr.bf16.mxu0 0
    %2794 = vmatpush1.bf16.msra.mxu0 0
    %2795 = vmatprep.subr.bf16.mxu0 0
    %2796 = vmatpush1.bf16.msra.mxu0 0
    %2797 = vmatprep.subr.bf16.mxu0 0
    %2798 = vmatpush1.bf16.msra.mxu0 0
    %2799 = vmatprep.subr.bf16.mxu0 0
    %2800 = vmatpush1.bf16.msra.mxu0 0
    %2801 = vmatprep.subr.bf16.mxu0 0
    %2802 = vmatpush1.bf16.msra.mxu0 0
    %2803 = vmatprep.mubr.bf16.mxu0 0
    %2804 = vmatmul.mubr.bf16.gmra.mrb[0].mxu0 %v2769
    %v2805 = vpop.f32.mrb[0].mxu0
    %v2806 = vadd.f32 %v538, %v2805
    %v2807 = vpop.f32.mrb[0].mxu0
    %v2808 = vpop.f32.mrb[0].mxu0
    %v2809 = vadd.f32 %v539, %v2808
    %v2810 = vpop.f32.mrb[0].mxu0
    %2811 = vdwg.mxu0
    %v2812 = vsel %vm1028, %v2806, -inf
    %2813 = vmax.xlane.f32.xlu0 %v2812
    %v2814 = vpop.xlane.xlu0 %2813
    %v2815 = vsel %vm1028, %v2809, -inf
    %2816 = vmax.xlane.f32.xlu0 %v2815
    %v2817 = vpop.xlane.xlu0 %2816
    %v2818 = vsub.f32 %v2806, %v2814
    %v2819 = vsub.f32 %v2809, %v2817
    %v2820 = vmul.f32 %v2818, 1.442695
    %v2821 = vpow.pop %v2820
    %v2822 = vmul.f32 %v2819, 1.442695
    %v2823 = vpow.pop %v2822
    %v2824 = vsel %vm1028, %v2821, 0.0
    %2825 = vadd.xlane.f32.xlu0 %v2824
    %v2826 = vpop.xlane.xlu0 %2825
    %v2827 = vsel %vm1028, %v2823, 0.0
    %2828 = vadd.xlane.f32.xlu0 %v2827
    %v2829 = vpop.xlane.xlu0 %2828
    %v2830 = vrcp.pop %v2826
    %v2831 = vrcp.pop %v2829
    %v2832 = vmul.f32 %v2821, %v2830
    %v2833 = vmul.f32 %v2823, %v2831
    %v2834 = vpack.c.bf16 %v2833, %v2832
    %2836 = vrot.lane.b32.xlu0 %v2651, 96
    %v2837 = vpop.permute.xlu0 %2836
    %v2840 = vsel %vm1028, %v2834, 0
    %2842 = vmatprep.subr.bf16.mxu0 0
    %2843 = vmatpush1.bf16.msra.mxu0 %v2837
    %2844 = vmatprep.subr.bf16.mxu0 0
    %2845 = vmatpush1.bf16.msra.mxu0 0
    %2846 = vmatprep.subr.bf16.mxu0 0
    %2847 = vmatpush1.bf16.msra.mxu0 0
    %2848 = vmatprep.subr.bf16.mxu0 0
    %2849 = vmatpush1.bf16.msra.mxu0 0
    %2850 = vmatprep.subr.bf16.mxu0 0
    %2851 = vmatpush1.bf16.msra.mxu0 0
    %2852 = vmatprep.subr.bf16.mxu0 0
    %2853 = vmatpush1.bf16.msra.mxu0 0
    %2854 = vmatprep.subr.bf16.mxu0 0
    %2855 = vmatpush1.bf16.msra.mxu0 0
    %2856 = vmatprep.subr.bf16.mxu0 0
    %2857 = vmatpush1.bf16.msra.mxu0 0
    %2858 = vmatprep.subr.bf16.mxu0 0
    %2859 = vmatpush1.bf16.msra.mxu0 0
    %2860 = vmatprep.subr.bf16.mxu0 0
    %2861 = vmatpush1.bf16.msra.mxu0 0
    %2862 = vmatprep.subr.bf16.mxu0 0
    %2863 = vmatpush1.bf16.msra.mxu0 0
    %2864 = vmatprep.subr.bf16.mxu0 0
    %2865 = vmatpush1.bf16.msra.mxu0 0
    %2866 = vmatprep.subr.bf16.mxu0 0
    %2867 = vmatpush1.bf16.msra.mxu0 0
    %2868 = vmatprep.subr.bf16.mxu0 0
    %2869 = vmatpush1.bf16.msra.mxu0 0
    %2870 = vmatprep.subr.bf16.mxu0 0
    %2871 = vmatpush1.bf16.msra.mxu0 0
    %2872 = vmatprep.subr.bf16.mxu0 0
    %2873 = vmatpush1.bf16.msra.mxu0 0
    %2874 = vmatprep.mubr.bf16.mxu0 0
    %2875 = vmatmul.mubr.bf16.gmra.mrb[0].mxu0 %v2840
    %v2876 = vpop.f32.mrb[0].mxu0
    %v2877 = vadd.f32 0.0, %v2876
    %v2878 = vpop.f32.mrb[0].mxu0
    %v2879 = vpop.f32.mrb[0].mxu0
    %v2880 = vadd.f32 0.0, %v2879
    %v2881 = vpop.f32.mrb[0].mxu0
    %2882 = vdwg.mxu0
    %2885 = vrot.lane.b32.xlu0 %v2877, 32
    %v2886 = vpop.permute.xlu0 %2885
    %2887 = vrot.lane.b32.xlu0 %v2880, 32
    %v2888 = vpop.permute.xlu0 %2887
    %2891 = vst.msk [vmem:[#allocation2] sm:$0xff] %vm1224, %v2886
    %2892 = vst.msk [vmem:[#allocation2 + $0x8] sm:$0xff] %vm1224, %v2888
    %2893 = vrot.lane.b32.xlu0 %v2610, 64
    %v2894 = vpop.permute.xlu0 %2893
    %v2896 = vsel %vm983, %v2894, 0
    %2898 = vmatprep.subr.bf16.mxu0 0
    %2899 = vmatpush1.bf16.msra.mxu0 %v2647
    %2900 = vmatprep.subr.bf16.mxu0 0
    %2901 = vmatpush1.bf16.msra.mxu0 %v2648
    %2902 = vmatprep.subr.bf16.mxu0 0
    %2903 = vmatpush1.bf16.msra.mxu0 0
    %2904 = vmatprep.subr.bf16.mxu0 0
    %2905 = vmatpush1.bf16.msra.mxu0 0
    %2906 = vmatprep.subr.bf16.mxu0 0
    %2907 = vmatpush1.bf16.msra.mxu0 0
    %2908 = vmatprep.subr.bf16.mxu0 0
    %2909 = vmatpush1.bf16.msra.mxu0 0
    %2910 = vmatprep.subr.bf16.mxu0 0
    %2911 = vmatpush1.bf16.msra.mxu0 0
    %2912 = vmatprep.subr.bf16.mxu0 0
    %2913 = vmatpush1.bf16.msra.mxu0 0
    %2914 = vmatprep.subr.bf16.mxu0 0
    %2915 = vmatpush1.bf16.msra.mxu0 0
    %2916 = vmatprep.subr.bf16.mxu0 0
    %2917 = vmatpush1.bf16.msra.mxu0 0
    %2918 = vmatprep.subr.bf16.mxu0 0
    %2919 = vmatpush1.bf16.msra.mxu0 0
    %2920 = vmatprep.subr.bf16.mxu0 0
    %2921 = vmatpush1.bf16.msra.mxu0 0
    %2922 = vmatprep.subr.bf16.mxu0 0
    %2923 = vmatpush1.bf16.msra.mxu0 0
    %2924 = vmatprep.subr.bf16.mxu0 0
    %2925 = vmatpush1.bf16.msra.mxu0 0
    %2926 = vmatprep.subr.bf16.mxu0 0
    %2927 = vmatpush1.bf16.msra.mxu0 0
    %2928 = vmatprep.subr.bf16.mxu0 0
    %2929 = vmatpush1.bf16.msra.mxu0 0
    %2930 = vmatprep.mubr.bf16.mxu0 0
    %2931 = vmatmul.mubr.bf16.gmra.mrb[0].mxu0 %v2896
    %v2932 = vpop.f32.mrb[0].mxu0
    %v2933 = vadd.f32 %v538, %v2932
    %v2934 = vpop.f32.mrb[0].mxu0
    %v2935 = vpop.f32.mrb[0].mxu0
    %v2936 = vadd.f32 %v539, %v2935
    %v2937 = vpop.f32.mrb[0].mxu0
    %2938 = vdwg.mxu0
    %v2939 = vsel %vm1028, %v2933, -inf
    %2940 = vmax.xlane.f32.xlu0 %v2939
    %v2941 = vpop.xlane.xlu0 %2940
    %v2942 = vsel %vm1028, %v2936, -inf
    %2943 = vmax.xlane.f32.xlu0 %v2942
    %v2944 = vpop.xlane.xlu0 %2943
    %v2945 = vsub.f32 %v2933, %v2941
    %v2946 = vsub.f32 %v2936, %v2944
    %v2947 = vmul.f32 %v2945, 1.442695
    %v2948 = vpow.pop %v2947
    %v2949 = vmul.f32 %v2946, 1.442695
    %v2950 = vpow.pop %v2949
    %v2951 = vsel %vm1028, %v2948, 0.0
    %2952 = vadd.xlane.f32.xlu0 %v2951
    %v2953 = vpop.xlane.xlu0 %2952
    %v2954 = vsel %vm1028, %v2950, 0.0
    %2955 = vadd.xlane.f32.xlu0 %v2954
    %v2956 = vpop.xlane.xlu0 %2955
    %v2957 = vrcp.pop %v2953
    %v2958 = vrcp.pop %v2956
    %v2959 = vmul.f32 %v2948, %v2957
    %v2960 = vmul.f32 %v2950, %v2958
    %v2961 = vpack.c.bf16 %v2960, %v2959
    %2962 = vrot.lane.b32.xlu0 %v2651, 64
    %v2963 = vpop.permute.xlu0 %2962
    %v2966 = vsel %vm1028, %v2961, 0
    %2968 = vmatprep.subr.bf16.mxu0 0
    %2969 = vmatpush1.bf16.msra.mxu0 %v2963
    %2970 = vmatprep.subr.bf16.mxu0 0
    %2971 = vmatpush1.bf16.msra.mxu0 0
    %2972 = vmatprep.subr.bf16.mxu0 0
    %2973 = vmatpush1.bf16.msra.mxu0 0
    %2974 = vmatprep.subr.bf16.mxu0 0
    %2975 = vmatpush1.bf16.msra.mxu0 0
    %2976 = vmatprep.subr.bf16.mxu0 0
    %2977 = vmatpush1.bf16.msra.mxu0 0
    %2978 = vmatprep.subr.bf16.mxu0 0
    %2979 = vmatpush1.bf16.msra.mxu0 0
    %2980 = vmatprep.subr.bf16.mxu0 0
    %2981 = vmatpush1.bf16.msra.mxu0 0
    %2982 = vmatprep.subr.bf16.mxu0 0
    %2983 = vmatpush1.bf16.msra.mxu0 0
    %2984 = vmatprep.subr.bf16.mxu0 0
    %2985 = vmatpush1.bf16.msra.mxu0 0
    %2986 = vmatprep.subr.bf16.mxu0 0
    %2987 = vmatpush1.bf16.msra.mxu0 0
    %2988 = vmatprep.subr.bf16.mxu0 0
    %2989 = vmatpush1.bf16.msra.mxu0 0
    %2990 = vmatprep.subr.bf16.mxu0 0
    %2991 = vmatpush1.bf16.msra.mxu0 0
    %2992 = vmatprep.subr.bf16.mxu0 0
    %2993 = vmatpush1.bf16.msra.mxu0 0
    %2994 = vmatprep.subr.bf16.mxu0 0
    %2995 = vmatpush1.bf16.msra.mxu0 0
    %2996 = vmatprep.subr.bf16.mxu0 0
    %2997 = vmatpush1.bf16.msra.mxu0 0
    %2998 = vmatprep.subr.bf16.mxu0 0
    %2999 = vmatpush1.bf16.msra.mxu0 0
    %3000 = vmatprep.mubr.bf16.mxu0 0
    %3001 = vmatmul.mubr.bf16.gmra.mrb[0].mxu0 %v2966
    %v3002 = vpop.f32.mrb[0].mxu0
    %v3003 = vadd.f32 0.0, %v3002
    %v3004 = vpop.f32.mrb[0].mxu0
    %v3005 = vpop.f32.mrb[0].mxu0
    %v3006 = vadd.f32 0.0, %v3005
    %v3007 = vpop.f32.mrb[0].mxu0
    %3008 = vdwg.mxu0
    %3011 = vrot.lane.b32.xlu0 %v3003, 64
    %v3012 = vpop.permute.xlu0 %3011
    %3013 = vrot.lane.b32.xlu0 %v3006, 64
    %v3014 = vpop.permute.xlu0 %3013
    %3017 = vst.msk [vmem:[#allocation2] sm:$0xff] %vm1351, %v3012
    %3018 = vst.msk [vmem:[#allocation2 + $0x8] sm:$0xff] %vm1351, %v3014
    %3019 = vrot.lane.b32.xlu0 %v2610, 32
    %v3020 = vpop.permute.xlu0 %3019
    %v3022 = vsel %vm983, %v3020, 0
    %3024 = vmatprep.subr.bf16.mxu0 0
    %3025 = vmatpush1.bf16.msra.mxu0 %v2649
    %3026 = vmatprep.subr.bf16.mxu0 0
    %3027 = vmatpush1.bf16.msra.mxu0 %v2650
    %3028 = vmatprep.subr.bf16.mxu0 0
    %3029 = vmatpush1.bf16.msra.mxu0 0
    %3030 = vmatprep.subr.bf16.mxu0 0
    %3031 = vmatpush1.bf16.msra.mxu0 0
    %3032 = vmatprep.subr.bf16.mxu0 0
    %3033 = vmatpush1.bf16.msra.mxu0 0
    %3034 = vmatprep.subr.bf16.mxu0 0
    %3035 = vmatpush1.bf16.msra.mxu0 0
    %3036 = vmatprep.subr.bf16.mxu0 0
    %3037 = vmatpush1.bf16.msra.mxu0 0
    %3038 = vmatprep.subr.bf16.mxu0 0
    %3039 = vmatpush1.bf16.msra.mxu0 0
    %3040 = vmatprep.subr.bf16.mxu0 0
    %3041 = vmatpush1.bf16.msra.mxu0 0
    %3042 = vmatprep.subr.bf16.mxu0 0
    %3043 = vmatpush1.bf16.msra.mxu0 0
    %3044 = vmatprep.subr.bf16.mxu0 0
    %3045 = vmatpush1.bf16.msra.mxu0 0
    %3046 = vmatprep.subr.bf16.mxu0 0
    %3047 = vmatpush1.bf16.msra.mxu0 0
    %3048 = vmatprep.subr.bf16.mxu0 0
    %3049 = vmatpush1.bf16.msra.mxu0 0
    %3050 = vmatprep.subr.bf16.mxu0 0
    %3051 = vmatpush1.bf16.msra.mxu0 0
    %3052 = vmatprep.subr.bf16.mxu0 0
    %3053 = vmatpush1.bf16.msra.mxu0 0
    %3054 = vmatprep.subr.bf16.mxu0 0
    %3055 = vmatpush1.bf16.msra.mxu0 0
    %3056 = vmatprep.mubr.bf16.mxu0 0
    %3057 = vmatmul.mubr.bf16.gmra.mrb[0].mxu0 %v3022
    %v3058 = vpop.f32.mrb[0].mxu0
    %v3059 = vadd.f32 %v538, %v3058
    %v3060 = vpop.f32.mrb[0].mxu0
    %v3061 = vpop.f32.mrb[0].mxu0
    %v3062 = vadd.f32 %v539, %v3061
    %v3063 = vpop.f32.mrb[0].mxu0
    %3064 = vdwg.mxu0
    %v3065 = vsel %vm1028, %v3059, -inf
    %3066 = vmax.xlane.f32.xlu0 %v3065
    %v3067 = vpop.xlane.xlu0 %3066
    %v3068 = vsel %vm1028, %v3062, -inf
    %3069 = vmax.xlane.f32.xlu0 %v3068
    %v3070 = vpop.xlane.xlu0 %3069
    %v3071 = vsub.f32 %v3059, %v3067
    %v3072 = vsub.f32 %v3062, %v3070
    %v3073 = vmul.f32 %v3071, 1.442695
    %v3074 = vpow.pop %v3073
    %v3075 = vmul.f32 %v3072, 1.442695
    %v3076 = vpow.pop %v3075
    %v3077 = vsel %vm1028, %v3074, 0.0
    %3078 = vadd.xlane.f32.xlu0 %v3077
    %v3079 = vpop.xlane.xlu0 %3078
    %v3080 = vsel %vm1028, %v3076, 0.0
    %3081 = vadd.xlane.f32.xlu0 %v3080
    %v3082 = vpop.xlane.xlu0 %3081
    %v3083 = vrcp.pop %v3079
    %v3084 = vrcp.pop %v3082
    %v3085 = vmul.f32 %v3074, %v3083
    %v3086 = vmul.f32 %v3076, %v3084
    %v3087 = vpack.c.bf16 %v3086, %v3085
    %3088 = vrot.lane.b32.xlu0 %v2651, 32
    %v3089 = vpop.permute.xlu0 %3088
    %v3092 = vsel %vm1028, %v3087, 0
    %3094 = vmatprep.subr.bf16.mxu0 0
    %3095 = vmatpush1.bf16.msra.mxu0 %v3089
    %3096 = vmatprep.subr.bf16.mxu0 0
    %3097 = vmatpush1.bf16.msra.mxu0 0
    %3098 = vmatprep.subr.bf16.mxu0 0
    %3099 = vmatpush1.bf16.msra.mxu0 0
    %3100 = vmatprep.subr.bf16.mxu0 0
    %3101 = vmatpush1.bf16.msra.mxu0 0
    %3102 = vmatprep.subr.bf16.mxu0 0
    %3103 = vmatpush1.bf16.msra.mxu0 0
    %3104 = vmatprep.subr.bf16.mxu0 0
    %3105 = vmatpush1.bf16.msra.mxu0 0
    %3106 = vmatprep.subr.bf16.mxu0 0
    %3107 = vmatpush1.bf16.msra.mxu0 0
    %3108 = vmatprep.subr.bf16.mxu0 0
    %3109 = vmatpush1.bf16.msra.mxu0 0
    %3110 = vmatprep.subr.bf16.mxu0 0
    %3111 = vmatpush1.bf16.msra.mxu0 0
    %3112 = vmatprep.subr.bf16.mxu0 0
    %3113 = vmatpush1.bf16.msra.mxu0 0
    %3114 = vmatprep.subr.bf16.mxu0 0
    %3115 = vmatpush1.bf16.msra.mxu0 0
    %3116 = vmatprep.subr.bf16.mxu0 0
    %3117 = vmatpush1.bf16.msra.mxu0 0
    %3118 = vmatprep.subr.bf16.mxu0 0
    %3119 = vmatpush1.bf16.msra.mxu0 0
    %3120 = vmatprep.subr.bf16.mxu0 0
    %3121 = vmatpush1.bf16.msra.mxu0 0
    %3122 = vmatprep.subr.bf16.mxu0 0
    %3123 = vmatpush1.bf16.msra.mxu0 0
    %3124 = vmatprep.subr.bf16.mxu0 0
    %3125 = vmatpush1.bf16.msra.mxu0 0
    %3126 = vmatprep.mubr.bf16.mxu0 0
    %3127 = vmatmul.mubr.bf16.gmra.mrb[0].mxu0 %v3092
    %v3128 = vpop.f32.mrb[0].mxu0
    %v3129 = vadd.f32 0.0, %v3128
    %v3130 = vpop.f32.mrb[0].mxu0
    %v3131 = vpop.f32.mrb[0].mxu0
    %v3132 = vadd.f32 0.0, %v3131
    %v3133 = vpop.f32.mrb[0].mxu0
    %3134 = vdwg.mxu0
    %3137 = vrot.lane.b32.xlu0 %v3129, 96
    %v3138 = vpop.permute.xlu0 %3137
    %3139 = vrot.lane.b32.xlu0 %v3132, 96
    %v3140 = vpop.permute.xlu0 %3139
    %3143 = vst.msk [vmem:[#allocation2] sm:$0xff] %vm1478, %v3138
    %3144 = vst.msk [vmem:[#allocation2 + $0x8] sm:$0xff] %vm1478, %v3140
    %v3145 = vld [vmem:[#allocation2] sm:$0xff]
    %v3146 = vld [vmem:[#allocation2 + $0x8] sm:$0xff]
    %v3147 = vpack.c.bf16 %v3146, %v3145
    %v3148 = vld [vmem:[%s3 + $0x10] sm:$0x1]
    %v3149 = vlaneseq
    %v3150 = vshrl.u32 %v3149, 7
    %v3151 = vsub.s32 0, %v3150
    %v3152 = vrot.slane %v3148, %v3151
    %v3153 = vunpack.c.h.b16 %v2210
    %v3154 = vunpack.c.h.b16 %v2214
    %v3155 = vunpack.c.h.b16 %v2218
    %v3156 = vunpack.c.h.b16 %v2222
    %v3157 = vunpack.c.h.b16 %v2226
    %v3158 = vunpack.c.h.b16 %v2230
    %v3159 = vunpack.c.h.b16 %v2234
    %v3160 = vunpack.c.h.b16 %v2238
    %v3161 = vunpack.c.h.b16 %v2242
    %v3162 = vunpack.c.h.b16 %v2246
    %v3163 = vunpack.c.h.b16 %v2250
    %v3164 = vunpack.c.h.b16 %v2254
    %v3165 = vunpack.c.h.b16 %v2258
    %v3166 = vunpack.c.h.b16 %v2262
    %v3167 = vunpack.c.h.b16 %v2266
    %v3168 = vunpack.c.h.b16 %v2270
    %v3169 = vpack.c.b16 %v3154, %v3153
    %v3170 = vpack.c.b16 %v3156, %v3155
    %v3171 = vpack.c.b16 %v3158, %v3157
    %v3172 = vpack.c.b16 %v3160, %v3159
    %v3173 = vpack.c.b16 %v3162, %v3161
    %v3174 = vpack.c.b16 %v3164, %v3163
    %v3175 = vpack.c.b16 %v3166, %v3165
    %v3176 = vpack.c.b16 %v3168, %v3167
    %3185 = vmatprep.subr.bf16.mxu0 0
    %3186 = vmatpush1.bf16.msra.mxu0 %v3169
    %3187 = vmatprep.subr.bf16.mxu0 0
    %3188 = vmatpush1.bf16.msra.mxu0 %v3170
    %3189 = vmatprep.subr.bf16.mxu0 0
    %3190 = vmatpush1.bf16.msra.mxu0 %v3171
    %3191 = vmatprep.subr.bf16.mxu0 0
    %3192 = vmatpush1.bf16.msra.mxu0 %v3172
    %3193 = vmatprep.subr.bf16.mxu0 0
    %3194 = vmatpush1.bf16.msra.mxu0 %v3173
    %3195 = vmatprep.subr.bf16.mxu0 0
    %3196 = vmatpush1.bf16.msra.mxu0 %v3174
    %3197 = vmatprep.subr.bf16.mxu0 0
    %3198 = vmatpush1.bf16.msra.mxu0 %v3175
    %3199 = vmatprep.subr.bf16.mxu0 0
    %3200 = vmatpush1.bf16.msra.mxu0 %v3176
    %3201 = vmatprep.subr.bf16.mxu0 0
    %3202 = vmatpush1.bf16.msra.mxu0 0
    %3203 = vmatprep.subr.bf16.mxu0 0
    %3204 = vmatpush1.bf16.msra.mxu0 0
    %3205 = vmatprep.subr.bf16.mxu0 0
    %3206 = vmatpush1.bf16.msra.mxu0 0
    %3207 = vmatprep.subr.bf16.mxu0 0
    %3208 = vmatpush1.bf16.msra.mxu0 0
    %3209 = vmatprep.subr.bf16.mxu0 0
    %3210 = vmatpush1.bf16.msra.mxu0 0
    %3211 = vmatprep.subr.bf16.mxu0 0
    %3212 = vmatpush1.bf16.msra.mxu0 0
    %3213 = vmatprep.subr.bf16.mxu0 0
    %3214 = vmatpush1.bf16.msra.mxu0 0
    %3215 = vmatprep.subr.bf16.mxu0 0
    %3216 = vmatpush1.bf16.msra.mxu0 0
    %3217 = vmatprep.mubr.bf16.mxu0 0
    %3218 = vmatmul.mubr.bf16.gmra.mrb[0].mxu0 %v3147
    %v3219 = vpop.f32.mrb[0].mxu0
    %v3220 = vadd.f32 %v3152, %v3219
    %v3221 = vpop.f32.mrb[0].mxu0
    %v3222 = vpop.f32.mrb[0].mxu0
    %v3223 = vadd.f32 %v3152, %v3222
    %v3224 = vpop.f32.mrb[0].mxu0
    %3225 = vdwg.mxu0
    %v3226 = vld [vmem:[%s3 + $0x11] sm:$0x1]
    %v3227 = vlaneseq
    %v3228 = vshrl.u32 %v3227, 7
    %v3229 = vsub.s32 0, %v3228
    %v3230 = vrot.slane %v3226, %v3229
    %v3231 = vmul.f32 %v3220, %v3230
    %v3232 = vmul.f32 %v3223, %v3230
    %v3233 = vadd.f32 %v2206, %v3231
    %v3234 = vadd.f32 %v2207, %v3232
    %v3235 = vld [vmem:[%s3 + $0x12] sm:$0x1]
    %v3236 = vld [vmem:[%s3 + $0x13] sm:$0x1]
    %3237 = vadd.xlane.f32.xlu0 %v3233
    %v3238 = vpop.xlane.xlu0 %3237
    %3239 = vadd.xlane.f32.xlu0 %v3234
    %v3240 = vpop.xlane.xlu0 %3239
    %v3241 = vmul.f32 %v3238, %v674
    %v3242 = vmul.f32 %v3240, %v674
    %v3243 = vsub.f32 %v3233, %v3241
    %v3244 = vsub.f32 %v3234, %v3242
    %v3245 = vmul.f32 %v3243, %v3243
    %v3246 = vmul.f32 %v3244, %v3244
    %3247 = vadd.xlane.f32.xlu0 %v3245
    %v3248 = vpop.xlane.xlu0 %3247
    %3249 = vadd.xlane.f32.xlu0 %v3246
    %v3250 = vpop.xlane.xlu0 %3249
    %v3251 = vmul.f32 %v3248, %v674
    %v3252 = vmul.f32 %v3250, %v674
    %v3253 = vadd.f32 %v3251, 1e-06
    %v3254 = vadd.f32 %v3252, 1e-06
    %v3255 = vrsqrt.pop %v3253
    %v3256 = vrsqrt.pop %v3254
    %v3257 = vmul.f32 %v3243, %v3255
    %v3258 = vmul.f32 %v3244, %v3256
    %v3259 = vlaneseq
    %v3260 = vshrl.u32 %v3259, 7
    %v3261 = vsub.s32 0, %v3260
    %v3262 = vrot.slane %v3235, %v3261
    %v3263 = vmul.f32 %v3257, %v3262
    %v3264 = vmul.f32 %v3258, %v3262
    %v3265 = vlaneseq
    %v3266 = vshrl.u32 %v3265, 7
    %v3267 = vsub.s32 0, %v3266
    %v3268 = vrot.slane %v3236, %v3267
    %v3269 = vadd.f32 %v3263, %v3268
    %v3270 = vadd.f32 %v3264, %v3268
    %v3271 = vpack.c.bf16 %v3270, %v3269
    %s3272 = scalar_lea.vmem %s4, 4
    %v3273 = vld [vmem:[%s3272] sm:$0xf]
    %v3275 = vlaneseq
    %v3276 = vshrl.u32 %v3275, 7
    %v3277 = vsub.s32 0, %v3276
    %v3278 = vrot.slane %v3273, %v3277
    %v3279 = vlaneseq
    %v3280 = vshrl.u32 %v3279, 7
    %v3281 = vsub.s32 1, %v3280
    %v3282 = vrot.slane %v3273, %v3281
    %v3283 = vlaneseq
    %v3284 = vshrl.u32 %v3283, 7
    %v3285 = vsub.s32 2, %v3284
    %v3286 = vrot.slane %v3273, %v3285
    %v3287 = vlaneseq
    %v3288 = vshrl.u32 %v3287, 7
    %v3289 = vsub.s32 3, %v3288
    %v3290 = vrot.slane %v3273, %v3289
    %v3327 = vunpack.c.l.b16 %v2211
    %v3328 = vunpack.c.h.b16 %v2211
    %v3329 = vunpack.c.l.b16 %v2212
    %v3330 = vunpack.c.h.b16 %v2212
    %v3331 = vunpack.c.l.b16 %v2215
    %v3332 = vunpack.c.h.b16 %v2215
    %v3333 = vunpack.c.l.b16 %v2216
    %v3334 = vunpack.c.h.b16 %v2216
    %v3335 = vunpack.c.l.b16 %v2219
    %v3336 = vunpack.c.h.b16 %v2219
    %v3337 = vunpack.c.l.b16 %v2220
    %v3338 = vunpack.c.h.b16 %v2220
    %v3339 = vunpack.c.l.b16 %v2223
    %v3340 = vunpack.c.h.b16 %v2223
    %v3341 = vunpack.c.l.b16 %v2224
    %v3342 = vunpack.c.h.b16 %v2224
    %v3343 = vunpack.c.l.b16 %v2227
    %v3344 = vunpack.c.h.b16 %v2227
    %v3345 = vunpack.c.l.b16 %v2228
    %v3346 = vunpack.c.h.b16 %v2228
    %v3347 = vunpack.c.l.b16 %v2231
    %v3348 = vunpack.c.h.b16 %v2231
    %v3349 = vunpack.c.l.b16 %v2232
    %v3350 = vunpack.c.h.b16 %v2232
    %v3351 = vunpack.c.l.b16 %v2235
    %v3352 = vunpack.c.h.b16 %v2235
    %v3353 = vunpack.c.l.b16 %v2236
    %v3354 = vunpack.c.h.b16 %v2236
    %v3355 = vunpack.c.l.b16 %v2239
    %v3356 = vunpack.c.h.b16 %v2239
    %v3357 = vunpack.c.l.b16 %v2240
    %v3358 = vunpack.c.h.b16 %v2240
    %v3359 = vunpack.c.l.b16 %v2243
    %v3360 = vunpack.c.h.b16 %v2243
    %v3361 = vunpack.c.l.b16 %v2244
    %v3362 = vunpack.c.h.b16 %v2244
    %v3363 = vunpack.c.l.b16 %v2247
    %v3364 = vunpack.c.h.b16 %v2247
    %v3365 = vunpack.c.l.b16 %v2248
    %v3366 = vunpack.c.h.b16 %v2248
    %v3367 = vunpack.c.l.b16 %v2251
    %v3368 = vunpack.c.h.b16 %v2251
    %v3369 = vunpack.c.l.b16 %v2252
    %v3370 = vunpack.c.h.b16 %v2252
    %v3371 = vunpack.c.l.b16 %v2255
    %v3372 = vunpack.c.h.b16 %v2255
    %v3373 = vunpack.c.l.b16 %v2256
    %v3374 = vunpack.c.h.b16 %v2256
    %v3375 = vunpack.c.l.b16 %v2259
    %v3376 = vunpack.c.h.b16 %v2259
    %v3377 = vunpack.c.l.b16 %v2260
    %v3378 = vunpack.c.h.b16 %v2260
    %v3379 = vunpack.c.l.b16 %v2263
    %v3380 = vunpack.c.h.b16 %v2263
    %v3381 = vunpack.c.l.b16 %v2264
    %v3382 = vunpack.c.h.b16 %v2264
    %v3383 = vunpack.c.l.b16 %v2267
    %v3384 = vunpack.c.h.b16 %v2267
    %v3385 = vunpack.c.l.b16 %v2268
    %v3386 = vunpack.c.h.b16 %v2268
    %v3387 = vunpack.c.l.b16 %v2271
    %v3388 = vunpack.c.h.b16 %v2271
    %v3389 = vunpack.c.l.b16 %v2272
    %v3390 = vunpack.c.h.b16 %v2272
    %v3391 = vpack.c.b16 %v3331, %v3327
    %v3392 = vpack.c.b16 %v3332, %v3328
    %v3393 = vpack.c.b16 %v3333, %v3329
    %v3394 = vpack.c.b16 %v3334, %v3330
    %v3395 = vpack.c.b16 %v3339, %v3335
    %v3396 = vpack.c.b16 %v3340, %v3336
    %v3397 = vpack.c.b16 %v3341, %v3337
    %v3398 = vpack.c.b16 %v3342, %v3338
    %v3399 = vpack.c.b16 %v3347, %v3343
    %v3400 = vpack.c.b16 %v3348, %v3344
    %v3401 = vpack.c.b16 %v3349, %v3345
    %v3402 = vpack.c.b16 %v3350, %v3346
    %v3403 = vpack.c.b16 %v3355, %v3351
    %v3404 = vpack.c.b16 %v3356, %v3352
    %v3405 = vpack.c.b16 %v3357, %v3353
    %v3406 = vpack.c.b16 %v3358, %v3354
    %v3407 = vpack.c.b16 %v3363, %v3359
    %v3408 = vpack.c.b16 %v3364, %v3360
    %v3409 = vpack.c.b16 %v3365, %v3361
    %v3410 = vpack.c.b16 %v3366, %v3362
    %v3411 = vpack.c.b16 %v3371, %v3367
    %v3412 = vpack.c.b16 %v3372, %v3368
    %v3413 = vpack.c.b16 %v3373, %v3369
    %v3414 = vpack.c.b16 %v3374, %v3370
    %v3415 = vpack.c.b16 %v3379, %v3375
    %v3416 = vpack.c.b16 %v3380, %v3376
    %v3417 = vpack.c.b16 %v3381, %v3377
    %v3418 = vpack.c.b16 %v3382, %v3378
    %v3419 = vpack.c.b16 %v3387, %v3383
    %v3420 = vpack.c.b16 %v3388, %v3384
    %v3421 = vpack.c.b16 %v3389, %v3385
    %v3422 = vpack.c.b16 %v3390, %v3386
    %3455 = vmatprep.subr.bf16.mxu0 %v3392
    %3456 = vmatpush1.bf16.msra.mxu0 %v3391
    %3457 = vmatprep.subr.bf16.mxu0 %v3396
    %3458 = vmatpush1.bf16.msra.mxu0 %v3395
    %3459 = vmatprep.subr.bf16.mxu0 %v3400
    %3460 = vmatpush1.bf16.msra.mxu0 %v3399
    %3461 = vmatprep.subr.bf16.mxu0 %v3404
    %3462 = vmatpush1.bf16.msra.mxu0 %v3403
    %3463 = vmatprep.subr.bf16.mxu0 %v3408
    %3464 = vmatpush1.bf16.msra.mxu0 %v3407
    %3465 = vmatprep.subr.bf16.mxu0 %v3412
    %3466 = vmatpush1.bf16.msra.mxu0 %v3411
    %3467 = vmatprep.subr.bf16.mxu0 %v3416
    %3468 = vmatpush1.bf16.msra.mxu0 %v3415
    %3469 = vmatprep.subr.bf16.mxu0 %v3420
    %3470 = vmatpush1.bf16.msra.mxu0 %v3419
    %3471 = vmatprep.subr.bf16.mxu0 0
    %3472 = vmatpush1.bf16.msra.mxu0 0
    %3473 = vmatprep.subr.bf16.mxu0 0
    %3474 = vmatpush1.bf16.msra.mxu0 0
    %3475 = vmatprep.subr.bf16.mxu0 0
    %3476 = vmatpush1.bf16.msra.mxu0 0
    %3477 = vmatprep.subr.bf16.mxu0 0
    %3478 = vmatpush1.bf16.msra.mxu0 0
    %3479 = vmatprep.subr.bf16.mxu0 0
    %3480 = vmatpush1.bf16.msra.mxu0 0
    %3481 = vmatprep.subr.bf16.mxu0 0
    %3482 = vmatpush1.bf16.msra.mxu0 0
    %3483 = vmatprep.subr.bf16.mxu0 0
    %3484 = vmatpush1.bf16.msra.mxu0 0
    %3485 = vmatprep.subr.bf16.mxu0 0
    %3486 = vmatpush1.bf16.msra.mxu0 0
    %3487 = vmatprep.mubr.bf16.mxu0 0
    %3488 = vmatmul.mubr.bf16.gmra.mrb[0].mxu0 %v3271
    %v3489 = vpop.f32.mrb[0].mxu0
    %v3490 = vadd.f32 %v3278, %v3489
    %v3491 = vpop.f32.mrb[0].mxu0
    %v3492 = vadd.f32 %v3282, %v3491
    %v3493 = vpop.f32.mrb[0].mxu0
    %v3494 = vadd.f32 %v3278, %v3493
    %v3495 = vpop.f32.mrb[0].mxu0
    %v3496 = vadd.f32 %v3282, %v3495
    %3497 = vdwg.mxu0
    %3498 = vmatprep.subr.bf16.mxu0 %v3394
    %3499 = vmatpush1.bf16.msra.mxu0 %v3393
    %3500 = vmatprep.subr.bf16.mxu0 %v3398
    %3501 = vmatpush1.bf16.msra.mxu0 %v3397
    %3502 = vmatprep.subr.bf16.mxu0 %v3402
    %3503 = vmatpush1.bf16.msra.mxu0 %v3401
    %3504 = vmatprep.subr.bf16.mxu0 %v3406
    %3505 = vmatpush1.bf16.msra.mxu0 %v3405
    %3506 = vmatprep.subr.bf16.mxu0 %v3410
    %3507 = vmatpush1.bf16.msra.mxu0 %v3409
    %3508 = vmatprep.subr.bf16.mxu0 %v3414
    %3509 = vmatpush1.bf16.msra.mxu0 %v3413
    %3510 = vmatprep.subr.bf16.mxu0 %v3418
    %3511 = vmatpush1.bf16.msra.mxu0 %v3417
    %3512 = vmatprep.subr.bf16.mxu0 %v3422
    %3513 = vmatpush1.bf16.msra.mxu0 %v3421
    %3514 = vmatprep.subr.bf16.mxu0 0
    %3515 = vmatpush1.bf16.msra.mxu0 0
    %3516 = vmatprep.subr.bf16.mxu0 0
    %3517 = vmatpush1.bf16.msra.mxu0 0
    %3518 = vmatprep.subr.bf16.mxu0 0
    %3519 = vmatpush1.bf16.msra.mxu0 0
    %3520 = vmatprep.subr.bf16.mxu0 0
    %3521 = vmatpush1.bf16.msra.mxu0 0
    %3522 = vmatprep.subr.bf16.mxu0 0
    %3523 = vmatpush1.bf16.msra.mxu0 0
    %3524 = vmatprep.subr.bf16.mxu0 0
    %3525 = vmatpush1.bf16.msra.mxu0 0
    %3526 = vmatprep.subr.bf16.mxu0 0
    %3527 = vmatpush1.bf16.msra.mxu0 0
    %3528 = vmatprep.subr.bf16.mxu0 0
    %3529 = vmatpush1.bf16.msra.mxu0 0
    %3530 = vmatprep.mubr.bf16.mxu0 0
    %3531 = vmatmul.mubr.bf16.gmra.mrb[0].mxu0 %v3271
    %v3532 = vpop.f32.mrb[0].mxu0
    %v3533 = vadd.f32 %v3286, %v3532
    %v3534 = vpop.f32.mrb[0].mxu0
    %v3535 = vadd.f32 %v3290, %v3534
    %v3536 = vpop.f32.mrb[0].mxu0
    %v3537 = vadd.f32 %v3286, %v3536
    %v3538 = vpop.f32.mrb[0].mxu0
    %v3539 = vadd.f32 %v3290, %v3538
    %3540 = vdwg.mxu0
    %v3541 = vmul.f32 %v3490, 0.5
    %v3542 = vmul.f32 %v3492, 0.5
    %v3543 = vmul.f32 %v3533, 0.5
    %v3544 = vmul.f32 %v3535, 0.5
    %v3545 = vmul.f32 %v3494, 0.5
    %v3546 = vmul.f32 %v3496, 0.5
    %v3547 = vmul.f32 %v3537, 0.5
    %v3548 = vmul.f32 %v3539, 0.5
    %v3549 = vmul.f32 %v3490, 0.70710677
    %v3550 = vmul.f32 %v3492, 0.70710677
    %v3551 = vmul.f32 %v3533, 0.70710677
    %v3552 = vmul.f32 %v3535, 0.70710677
    %v3553 = vmul.f32 %v3494, 0.70710677
    %v3554 = vmul.f32 %v3496, 0.70710677
    %v3555 = vmul.f32 %v3537, 0.70710677
    %v3556 = vmul.f32 %v3539, 0.70710677
    %v3557 = verf.f32.pop %v3549
    %v3558 = verf.f32.pop %v3550
    %v3559 = verf.f32.pop %v3551
    %v3560 = verf.f32.pop %v3552
    %v3561 = verf.f32.pop %v3553
    %v3562 = verf.f32.pop %v3554
    %v3563 = verf.f32.pop %v3555
    %v3564 = verf.f32.pop %v3556
    %v3565 = vadd.f32 %v3557, 1.0
    %v3566 = vadd.f32 %v3558, 1.0
    %v3567 = vadd.f32 %v3559, 1.0
    %v3568 = vadd.f32 %v3560, 1.0
    %v3569 = vadd.f32 %v3561, 1.0
    %v3570 = vadd.f32 %v3562, 1.0
    %v3571 = vadd.f32 %v3563, 1.0
    %v3572 = vadd.f32 %v3564, 1.0
    %v3573 = vmul.f32 %v3541, %v3565
    %v3574 = vmul.f32 %v3542, %v3566
    %v3575 = vmul.f32 %v3543, %v3567
    %v3576 = vmul.f32 %v3544, %v3568
    %v3577 = vmul.f32 %v3545, %v3569
    %v3578 = vmul.f32 %v3546, %v3570
    %v3579 = vmul.f32 %v3547, %v3571
    %v3580 = vmul.f32 %v3548, %v3572
    %v3581 = vpack.c.bf16 %v3577, %v3573
    %v3582 = vpack.c.bf16 %v3578, %v3574
    %v3583 = vpack.c.bf16 %v3579, %v3575
    %v3584 = vpack.c.bf16 %v3580, %v3576
    %v3585 = vld [vmem:[%s3 + $0x14] sm:$0x1]
    %v3586 = vlaneseq
    %v3587 = vshrl.u32 %v3586, 7
    %v3588 = vsub.s32 0, %v3587
    %v3589 = vrot.slane %v3585, %v3588
    %v3654 = vunpack.c.l.b16 %v2274
    %v3655 = vunpack.c.l.b16 %v2275
    %v3656 = vunpack.c.l.b16 %v2276
    %v3657 = vunpack.c.l.b16 %v2277
    %v3658 = vunpack.c.l.b16 %v2278
    %v3659 = vunpack.c.l.b16 %v2279
    %v3660 = vunpack.c.l.b16 %v2280
    %v3661 = vunpack.c.l.b16 %v2281
    %v3662 = vunpack.c.l.b16 %v2282
    %v3663 = vunpack.c.l.b16 %v2283
    %v3664 = vunpack.c.l.b16 %v2284
    %v3665 = vunpack.c.l.b16 %v2285
    %v3666 = vunpack.c.l.b16 %v2286
    %v3667 = vunpack.c.l.b16 %v2287
    %v3668 = vunpack.c.l.b16 %v2288
    %v3669 = vunpack.c.l.b16 %v2289
    %v3670 = vunpack.c.l.b16 %v2290
    %v3671 = vunpack.c.l.b16 %v2291
    %v3672 = vunpack.c.l.b16 %v2292
    %v3673 = vunpack.c.l.b16 %v2293
    %v3674 = vunpack.c.l.b16 %v2294
    %v3675 = vunpack.c.l.b16 %v2295
    %v3676 = vunpack.c.l.b16 %v2296
    %v3677 = vunpack.c.l.b16 %v2297
    %v3678 = vunpack.c.l.b16 %v2298
    %v3679 = vunpack.c.l.b16 %v2299
    %v3680 = vunpack.c.l.b16 %v2300
    %v3681 = vunpack.c.l.b16 %v2301
    %v3682 = vunpack.c.l.b16 %v2302
    %v3683 = vunpack.c.l.b16 %v2303
    %v3684 = vunpack.c.l.b16 %v2304
    %v3685 = vunpack.c.l.b16 %v2305
    %v3686 = vunpack.c.l.b16 %v2306
    %v3687 = vunpack.c.l.b16 %v2307
    %v3688 = vunpack.c.l.b16 %v2308
    %v3689 = vunpack.c.l.b16 %v2309
    %v3690 = vunpack.c.l.b16 %v2310
    %v3691 = vunpack.c.l.b16 %v2311
    %v3692 = vunpack.c.l.b16 %v2312
    %v3693 = vunpack.c.l.b16 %v2313
    %v3694 = vunpack.c.l.b16 %v2314
    %v3695 = vunpack.c.l.b16 %v2315
    %v3696 = vunpack.c.l.b16 %v2316
    %v3697 = vunpack.c.l.b16 %v2317
    %v3698 = vunpack.c.l.b16 %v2318
    %v3699 = vunpack.c.l.b16 %v2319
    %v3700 = vunpack.c.l.b16 %v2320
    %v3701 = vunpack.c.l.b16 %v2321
    %v3702 = vunpack.c.l.b16 %v2322
    %v3703 = vunpack.c.l.b16 %v2323
    %v3704 = vunpack.c.l.b16 %v2324
    %v3705 = vunpack.c.l.b16 %v2325
    %v3706 = vunpack.c.l.b16 %v2326
    %v3707 = vunpack.c.l.b16 %v2327
    %v3708 = vunpack.c.l.b16 %v2328
    %v3709 = vunpack.c.l.b16 %v2329
    %v3710 = vunpack.c.l.b16 %v2330
    %v3711 = vunpack.c.l.b16 %v2331
    %v3712 = vunpack.c.l.b16 %v2332
    %v3713 = vunpack.c.l.b16 %v2333
    %v3714 = vunpack.c.l.b16 %v2334
    %v3715 = vunpack.c.l.b16 %v2335
    %v3716 = vunpack.c.l.b16 %v2336
    %v3717 = vunpack.c.l.b16 %v2337
    %v3718 = vpack.c.b16 %v3655, %v3654
    %v3719 = vpack.c.b16 %v3657, %v3656
    %v3720 = vpack.c.b16 %v3659, %v3658
    %v3721 = vpack.c.b16 %v3661, %v3660
    %v3722 = vpack.c.b16 %v3663, %v3662
    %v3723 = vpack.c.b16 %v3665, %v3664
    %v3724 = vpack.c.b16 %v3667, %v3666
    %v3725 = vpack.c.b16 %v3669, %v3668
    %v3726 = vpack.c.b16 %v3671, %v3670
    %v3727 = vpack.c.b16 %v3673, %v3672
    %v3728 = vpack.c.b16 %v3675, %v3674
    %v3729 = vpack.c.b16 %v3677, %v3676
    %v3730 = vpack.c.b16 %v3679, %v3678
    %v3731 = vpack.c.b16 %v3681, %v3680
    %v3732 = vpack.c.b16 %v3683, %v3682
    %v3733 = vpack.c.b16 %v3685, %v3684
    %v3734 = vpack.c.b16 %v3687, %v3686
    %v3735 = vpack.c.b16 %v3689, %v3688
    %v3736 = vpack.c.b16 %v3691, %v3690
    %v3737 = vpack.c.b16 %v3693, %v3692
    %v3738 = vpack.c.b16 %v3695, %v3694
    %v3739 = vpack.c.b16 %v3697, %v3696
    %v3740 = vpack.c.b16 %v3699, %v3698
    %v3741 = vpack.c.b16 %v3701, %v3700
    %v3742 = vpack.c.b16 %v3703, %v3702
    %v3743 = vpack.c.b16 %v3705, %v3704
    %v3744 = vpack.c.b16 %v3707, %v3706
    %v3745 = vpack.c.b16 %v3709, %v3708
    %v3746 = vpack.c.b16 %v3711, %v3710
    %v3747 = vpack.c.b16 %v3713, %v3712
    %v3748 = vpack.c.b16 %v3715, %v3714
    %v3749 = vpack.c.b16 %v3717, %v3716
    %3782 = vmatprep.subr.bf16.mxu0 0
    %3783 = vmatpush1.bf16.msra.mxu0 %v3718
    %3784 = vmatprep.subr.bf16.mxu0 0
    %3785 = vmatpush1.bf16.msra.mxu0 %v3719
    %3786 = vmatprep.subr.bf16.mxu0 0
    %3787 = vmatpush1.bf16.msra.mxu0 %v3720
    %3788 = vmatprep.subr.bf16.mxu0 0
    %3789 = vmatpush1.bf16.msra.mxu0 %v3721
    %3790 = vmatprep.subr.bf16.mxu0 0
    %3791 = vmatpush1.bf16.msra.mxu0 %v3722
    %3792 = vmatprep.subr.bf16.mxu0 0
    %3793 = vmatpush1.bf16.msra.mxu0 %v3723
    %3794 = vmatprep.subr.bf16.mxu0 0
    %3795 = vmatpush1.bf16.msra.mxu0 %v3724
    %3796 = vmatprep.subr.bf16.mxu0 0
    %3797 = vmatpush1.bf16.msra.mxu0 %v3725
    %3798 = vmatprep.subr.bf16.mxu0 0
    %3799 = vmatpush1.bf16.msra.mxu0 %v3726
    %3800 = vmatprep.subr.bf16.mxu0 0
    %3801 = vmatpush1.bf16.msra.mxu0 %v3727
    %3802 = vmatprep.subr.bf16.mxu0 0
    %3803 = vmatpush1.bf16.msra.mxu0 %v3728
    %3804 = vmatprep.subr.bf16.mxu0 0
    %3805 = vmatpush1.bf16.msra.mxu0 %v3729
    %3806 = vmatprep.subr.bf16.mxu0 0
    %3807 = vmatpush1.bf16.msra.mxu0 %v3730
    %3808 = vmatprep.subr.bf16.mxu0 0
    %3809 = vmatpush1.bf16.msra.mxu0 %v3731
    %3810 = vmatprep.subr.bf16.mxu0 0
    %3811 = vmatpush1.bf16.msra.mxu0 %v3732
    %3812 = vmatprep.subr.bf16.mxu0 0
    %3813 = vmatpush1.bf16.msra.mxu0 %v3733
    %3814 = vmatprep.mubr.bf16.mxu0 %v3582
    %3815 = vmatmul.mubr.bf16.gmra.mrb[0].mxu0 %v3581
    %v3816 = vpop.f32.mrb[0].mxu0
    %v3817 = vadd.f32 %v3589, %v3816
    %v3818 = vpop.f32.mrb[0].mxu0
    %v3819 = vpop.f32.mrb[0].mxu0
    %v3820 = vadd.f32 %v3589, %v3819
    %v3821 = vpop.f32.mrb[0].mxu0
    %3822 = vdwg.mxu0
    %3823 = vmatprep.subr.bf16.mxu0 0
    %3824 = vmatpush1.bf16.msra.mxu0 %v3734
    %3825 = vmatprep.subr.bf16.mxu0 0
    %3826 = vmatpush1.bf16.msra.mxu0 %v3735
    %3827 = vmatprep.subr.bf16.mxu0 0
    %3828 = vmatpush1.bf16.msra.mxu0 %v3736
    %3829 = vmatprep.subr.bf16.mxu0 0
    %3830 = vmatpush1.bf16.msra.mxu0 %v3737
    %3831 = vmatprep.subr.bf16.mxu0 0
    %3832 = vmatpush1.bf16.msra.mxu0 %v3738
    %3833 = vmatprep.subr.bf16.mxu0 0
    %3834 = vmatpush1.bf16.msra.mxu0 %v3739
    %3835 = vmatprep.subr.bf16.mxu0 0
    %3836 = vmatpush1.bf16.msra.mxu0 %v3740
    %3837 = vmatprep.subr.bf16.mxu0 0
    %3838 = vmatpush1.bf16.msra.mxu0 %v3741
    %3839 = vmatprep.subr.bf16.mxu0 0
    %3840 = vmatpush1.bf16.msra.mxu0 %v3742
    %3841 = vmatprep.subr.bf16.mxu0 0
    %3842 = vmatpush1.bf16.msra.mxu0 %v3743
    %3843 = vmatprep.subr.bf16.mxu0 0
    %3844 = vmatpush1.bf16.msra.mxu0 %v3744
    %3845 = vmatprep.subr.bf16.mxu0 0
    %3846 = vmatpush1.bf16.msra.mxu0 %v3745
    %3847 = vmatprep.subr.bf16.mxu0 0
    %3848 = vmatpush1.bf16.msra.mxu0 %v3746
    %3849 = vmatprep.subr.bf16.mxu0 0
    %3850 = vmatpush1.bf16.msra.mxu0 %v3747
    %3851 = vmatprep.subr.bf16.mxu0 0
    %3852 = vmatpush1.bf16.msra.mxu0 %v3748
    %3853 = vmatprep.subr.bf16.mxu0 0
    %3854 = vmatpush1.bf16.msra.mxu0 %v3749
    %3855 = vmatprep.mubr.bf16.mxu0 %v3584
    %3856 = vmatmul.mubr.bf16.gmra.mrb[0].mxu0 %v3583
    %v3857 = vpop.f32.mrb[0].mxu0
    %v3858 = vadd.f32 %v3817, %v3857
    %v3859 = vpop.f32.mrb[0].mxu0
    %v3860 = vpop.f32.mrb[0].mxu0
    %v3861 = vadd.f32 %v3820, %v3860
    %v3862 = vpop.f32.mrb[0].mxu0
    %3863 = vdwg.mxu0
    %v3864 = vld [vmem:[%s3 + $0x15] sm:$0x1]
    %v3865 = vlaneseq
    %v3866 = vshrl.u32 %v3865, 7
    %v3867 = vsub.s32 0, %v3866
    %v3868 = vrot.slane %v3864, %v3867
    %v3869 = vmul.f32 %v3858, %v3868
    %v3870 = vmul.f32 %v3861, %v3868
    %v3871 = vadd.f32 %v3233, %v3869
    %v3872 = vadd.f32 %v3234, %v3870
    %v3873 = vld [vmem:[%s3 + $0x16] sm:$0x1]
    %v3874 = vld [vmem:[%s3 + $0x17] sm:$0x1]
    %3875 = vadd.xlane.f32.xlu0 %v3871
    %v3876 = vpop.xlane.xlu0 %3875
    %3877 = vadd.xlane.f32.xlu0 %v3872
    %v3878 = vpop.xlane.xlu0 %3877
    %v3879 = vmul.f32 %v3876, %v674
    %v3880 = vmul.f32 %v3878, %v674
    %v3881 = vsub.f32 %v3871, %v3879
    %v3882 = vsub.f32 %v3872, %v3880
    %v3883 = vmul.f32 %v3881, %v3881
    %v3884 = vmul.f32 %v3882, %v3882
    %3885 = vadd.xlane.f32.xlu0 %v3883
    %v3886 = vpop.xlane.xlu0 %3885
    %3887 = vadd.xlane.f32.xlu0 %v3884
    %v3888 = vpop.xlane.xlu0 %3887
    %v3889 = vmul.f32 %v3886, %v674
    %v3890 = vmul.f32 %v3888, %v674
    %v3891 = vadd.f32 %v3889, 1e-06
    %v3892 = vadd.f32 %v3890, 1e-06
    %v3893 = vrsqrt.pop %v3891
    %v3894 = vrsqrt.pop %v3892
    %v3895 = vmul.f32 %v3881, %v3893
    %v3896 = vmul.f32 %v3882, %v3894
    %v3897 = vlaneseq
    %v3898 = vshrl.u32 %v3897, 7
    %v3899 = vsub.s32 0, %v3898
    %v3900 = vrot.slane %v3873, %v3899
    %v3901 = vmul.f32 %v3895, %v3900
    %v3902 = vmul.f32 %v3896, %v3900
    %v3903 = vlaneseq
    %v3904 = vshrl.u32 %v3903, 7
    %v3905 = vsub.s32 0, %v3904
    %v3906 = vrot.slane %v3874, %v3905
    %v3907 = vadd.f32 %v3901, %v3906
    %v3908 = vadd.f32 %v3902, %v3906
    %v3909 = vpack.c.bf16 %v3908, %v3907
    %v3910 = vld [vmem:[%s8] sm:$0xf]
    %v3911 = vld [vmem:[%s8 + $0x4] sm:$0xf]
    %v3912 = vld [vmem:[%s8 + $0x8] sm:$0xf]
    %v3913 = vld [vmem:[%s8 + $0xc] sm:$0xf]
    %v3914 = vld [vmem:[%s8 + $0x10] sm:$0xf]
    %v3915 = vld [vmem:[%s8 + $0x14] sm:$0xf]
    %v3916 = vld [vmem:[%s8 + $0x18] sm:$0xf]
    %v3917 = vld [vmem:[%s8 + $0x1c] sm:$0xf]
    %v3918 = vld [vmem:[%s8 + $0x20] sm:$0xf]
    %v3919 = vld [vmem:[%s8 + $0x24] sm:$0xf]
    %v3920 = vld [vmem:[%s8 + $0x28] sm:$0xf]
    %v3921 = vld [vmem:[%s8 + $0x2c] sm:$0xf]
    %v3922 = vld [vmem:[%s8 + $0x30] sm:$0xf]
    %v3923 = vld [vmem:[%s8 + $0x34] sm:$0xf]
    %v3924 = vld [vmem:[%s8 + $0x38] sm:$0xf]
    %v3925 = vld [vmem:[%s8 + $0x3c] sm:$0xf]
    %v3926 = vld [vmem:[%s3 + $0x18] sm:$0x1]
    %v3927 = vlaneseq
    %v3928 = vshrl.u32 %v3927, 7
    %v3929 = vsub.s32 0, %v3928
    %v3930 = vrot.slane %v3926, %v3929
    %v3947 = vunpack.c.l.b16 %v3910
    %v3948 = vunpack.c.l.b16 %v3911
    %v3949 = vunpack.c.l.b16 %v3912
    %v3950 = vunpack.c.l.b16 %v3913
    %v3951 = vunpack.c.l.b16 %v3914
    %v3952 = vunpack.c.l.b16 %v3915
    %v3953 = vunpack.c.l.b16 %v3916
    %v3954 = vunpack.c.l.b16 %v3917
    %v3955 = vunpack.c.l.b16 %v3918
    %v3956 = vunpack.c.l.b16 %v3919
    %v3957 = vunpack.c.l.b16 %v3920
    %v3958 = vunpack.c.l.b16 %v3921
    %v3959 = vunpack.c.l.b16 %v3922
    %v3960 = vunpack.c.l.b16 %v3923
    %v3961 = vunpack.c.l.b16 %v3924
    %v3962 = vunpack.c.l.b16 %v3925
    %v3963 = vpack.c.b16 %v3948, %v3947
    %v3964 = vpack.c.b16 %v3950, %v3949
    %v3965 = vpack.c.b16 %v3952, %v3951
    %v3966 = vpack.c.b16 %v3954, %v3953
    %v3967 = vpack.c.b16 %v3956, %v3955
    %v3968 = vpack.c.b16 %v3958, %v3957
    %v3969 = vpack.c.b16 %v3960, %v3959
    %v3970 = vpack.c.b16 %v3962, %v3961
    %3979 = vmatprep.subr.bf16.mxu0 0
    %3980 = vmatpush1.bf16.msra.mxu0 %v3963
    %3981 = vmatprep.subr.bf16.mxu0 0
    %3982 = vmatpush1.bf16.msra.mxu0 %v3964
    %3983 = vmatprep.subr.bf16.mxu0 0
    %3984 = vmatpush1.bf16.msra.mxu0 %v3965
    %3985 = vmatprep.subr.bf16.mxu0 0
    %3986 = vmatpush1.bf16.msra.mxu0 %v3966
    %3987 = vmatprep.subr.bf16.mxu0 0
    %3988 = vmatpush1.bf16.msra.mxu0 %v3967
    %3989 = vmatprep.subr.bf16.mxu0 0
    %3990 = vmatpush1.bf16.msra.mxu0 %v3968
    %3991 = vmatprep.subr.bf16.mxu0 0
    %3992 = vmatpush1.bf16.msra.mxu0 %v3969
    %3993 = vmatprep.subr.bf16.mxu0 0
    %3994 = vmatpush1.bf16.msra.mxu0 %v3970
    %3995 = vmatprep.subr.bf16.mxu0 0
    %3996 = vmatpush1.bf16.msra.mxu0 0
    %3997 = vmatprep.subr.bf16.mxu0 0
    %3998 = vmatpush1.bf16.msra.mxu0 0
    %3999 = vmatprep.subr.bf16.mxu0 0
    %4000 = vmatpush1.bf16.msra.mxu0 0
    %4001 = vmatprep.subr.bf16.mxu0 0
    %4002 = vmatpush1.bf16.msra.mxu0 0
    %4003 = vmatprep.subr.bf16.mxu0 0
    %4004 = vmatpush1.bf16.msra.mxu0 0
    %4005 = vmatprep.subr.bf16.mxu0 0
    %4006 = vmatpush1.bf16.msra.mxu0 0
    %4007 = vmatprep.subr.bf16.mxu0 0
    %4008 = vmatpush1.bf16.msra.mxu0 0
    %4009 = vmatprep.subr.bf16.mxu0 0
    %4010 = vmatpush1.bf16.msra.mxu0 0
    %4011 = vmatprep.mubr.bf16.mxu0 0
    %4012 = vmatmul.mubr.bf16.gmra.mrb[0].mxu0 %v3909
    %v4013 = vpop.f32.mrb[0].mxu0
    %v4014 = vadd.f32 %v3930, %v4013
    %v4015 = vpop.f32.mrb[0].mxu0
    %v4016 = vpop.f32.mrb[0].mxu0
    %v4017 = vadd.f32 %v3930, %v4016
    %v4018 = vpop.f32.mrb[0].mxu0
    %4019 = vdwg.mxu0
    %4020 = vst [vmem:[%s9] sm:$0xff] %v4014
    %4021 = vst [vmem:[%s9 + $0x8] sm:$0xff] %v4017
    // Predicated region
    $region46: #{_vit_forward.1} parent=1 // pred_check
      _
    $region47: #{_vit_forward.1} parent=1 // pred_check_branch
      %4023 = sbr.rel (0) target = $region49
    $region48: #{_vit_forward.1} parent=1 // pred_region
      _
    $region49: #{_vit_forward.1} parent=1 // pred_fallthru
      _
    // Predicated region
    $region50: #{_vit_forward.1} parent=1 // pred_check
      _
    $region51: #{_vit_forward.1} parent=1 // pred_check_branch
      %4025 = sbr.rel (0) target = $region53
    $region52: #{_vit_forward.1} parent=1 // pred_region
      _
    $region53: #{_vit_forward.1} parent=1 // pred_fallthru
      _
    %4026 = vsyncpa [#allocation4], 1
    %4027 = vsyncpa [#allocation6], 1

</llo_original>
